<compile_context>
chip_gen: v6e
topology: v6e:2x2x1
jax: 0.10.0
libtpu: 0.0.40
codegen_flags: <defaults>
</compile_context>

<pallas_src>
import functools

import jax
import jax.numpy as jnp
from jax.experimental import pallas as pl
from jax.experimental.pallas import tpu as pltpu

LOG_STD_MAX = 2.0
LOG_STD_MIN = -20.0
LANE = 128  # TPU lane width; width of the padded action/logp output slab.


def _actor_kernel(act_limit, act_dim,
                  obs_ref, eps_ref, p_ref,
                  w0_ref, b0_ref, w1_ref, b1_ref, wh_ref, bh_ref,
                  out_ref):
    f32 = jnp.float32

    # ---- MLP trunk (two Linear + ReLU; SpinningUp uses `activation` as the
    # trunk's output_activation too).  bf16 MXU inputs, f32 accumulation.
    x = obs_ref[...].astype(jnp.bfloat16)
    h = jnp.dot(x, w0_ref[...], preferred_element_type=f32) + b0_ref[...]
    h = jnp.maximum(h, 0.0).astype(jnp.bfloat16)
    h = jnp.dot(h, w1_ref[...], preferred_element_type=f32) + b1_ref[...]
    h = jnp.maximum(h, 0.0).astype(jnp.bfloat16)

    # ---- Fused mu / log_std head: one matmul, two 128-lane-aligned halves.
    heads = jnp.dot(h, wh_ref[...], preferred_element_type=f32) + bh_ref[...]
    mu = heads[:, :LANE]                 # (TB, 128); real cols [0:act_dim]
    log_std = heads[:, LANE:]            # (TB, 128); real cols [0:act_dim]
    log_std = jnp.clip(log_std, LOG_STD_MIN, LOG_STD_MAX)
    std = jnp.exp(log_std)

    # ---- Widen eps (TB, act_dim) -> (TB, 128) exactly via the 0/1 placement
    # matrix (padding lanes become exactly 0.0).  One tiny MXU pass; keeps the
    # eps HBM stream at its narrow act_dim width.
    eps = jnp.dot(eps_ref[...], p_ref[...], preferred_element_type=f32)

    # ---- Reparameterized sample: pi = mu + std * eps.
    pi = mu + std * eps

    # ---- Normal(mu, std).log_prob(pi).sum(-1) and the tanh-squash correction
    # fused into a single masked lane reduction.
    z = -2.0 * pi
    softplus_z = jnp.maximum(z, 0.0) + jnp.log1p(jnp.exp(-jnp.abs(z)))
    t = (-0.5 * eps * eps - log_std - 0.5 * jnp.log(2.0 * jnp.pi)
         - 2.0 * (jnp.log(2.0) - pi - softplus_z))
    lane = jax.lax.broadcasted_iota(jnp.int32, t.shape, 1)
    logp = jnp.sum(jnp.where(lane < act_dim, t, 0.0), axis=-1, keepdims=True)

    # ---- Lane-dense output slab: action in lanes [0:act_dim], logp_pi in lane
    # act_dim, zeros elsewhere -> one unmasked full-width store.
    act = act_limit * jnp.tanh(pi)
    slab = jnp.where(lane == act_dim, jnp.broadcast_to(logp, t.shape), act)
    out_ref[...] = slab.astype(out_ref.dtype)


def squashed_gaussian_actor(obs, eps, params, act_limit, *, block_b=512):
    """Forward pass. Returns (pi_action [B, act_dim], logp_pi [B])."""
    B, obs_dim = obs.shape
    act_dim = eps.shape[1]
    h1 = params["w0"].shape[1]
    h2 = params["w1"].shape[1]
    assert act_dim < LANE
    tb = min(block_b, B)
    assert B % tb == 0 and tb % 8 == 0, (B, tb)

    kernel = functools.partial(_actor_kernel, float(act_limit), int(act_dim))

    batch_spec = lambda shape: pl.BlockSpec(shape, lambda i: (i, 0))
    resident = lambda shape: pl.BlockSpec(shape, lambda i: (0, 0))

    nbytes = lambda a: a.size * a.dtype.itemsize
    param_bytes = sum(nbytes(params[k]) for k in
                      ("w0", "b0", "w1", "b1", "w_heads", "b_heads", "eps_place"))
    cost = pl.CostEstimate(
        flops=2 * B * (obs_dim * h1 + h1 * h2 + h2 * 2 * LANE + act_dim * LANE),
        transcendentals=4 * B * LANE,  # exp, softplus-exp, log1p, tanh
        bytes_accessed=nbytes(obs) + nbytes(eps) + param_bytes + B * LANE * 4,
    )

    out = pl.pallas_call(
        kernel,
        grid=(B // tb,),
        out_shape=jax.ShapeDtypeStruct((B, LANE), jnp.float32),
        in_specs=[
            batch_spec((tb, obs_dim)),       # obs        (streamed per tile)
            batch_spec((tb, act_dim)),       # eps        (streamed per tile)
            resident((act_dim, LANE)),       # eps placement matrix (resident)
            resident((obs_dim, h1)),         # w0 (bf16, resident)
            resident((1, h1)),               # b0
            resident((h1, h2)),              # w1 (bf16, resident)
            resident((1, h2)),               # b1
            resident((h2, 2 * LANE)),        # fused mu/log_std weight (bf16)
            resident((1, 2 * LANE)),         # fused mu/log_std bias
        ],
        out_specs=batch_spec((tb, LANE)),
        compiler_params=pltpu.CompilerParams(
            dimension_semantics=("parallel",),  # v7x: shard batch tiles over 2 TCs
        ),
        cost_estimate=cost,
    )(
        obs, eps, params["eps_place"],
        params["w0"], params["b0"],
        params["w1"], params["b1"],
        params["w_heads"], params["b_heads"],
    )
    return out[:, :act_dim], out[:, act_dim]


def init_params(key, obs_dim, hidden_sizes, act_dim):
    """Deterministic synthetic init (shapes match the nn.Linear layers)."""
    h1, h2 = hidden_sizes
    keys = jax.random.split(key, 8)
    s = 0.1

    w0 = jax.random.normal(keys[0], (obs_dim, h1), jnp.float32) * s
    b0 = jax.random.normal(keys[1], (1, h1), jnp.float32) * s
    w1 = jax.random.normal(keys[2], (h1, h2), jnp.float32) * s
    b1 = jax.random.normal(keys[3], (1, h2), jnp.float32) * s
    w_mu = jax.random.normal(keys[4], (h2, act_dim), jnp.float32) * s
    b_mu = jax.random.normal(keys[5], (1, act_dim), jnp.float32) * s
    w_ls = jax.random.normal(keys[6], (h2, act_dim), jnp.float32) * s
    b_ls = jax.random.normal(keys[7], (1, act_dim), jnp.float32) * s

    # Fused, lane-padded head: mu -> lanes [0:act_dim], log_std -> lanes
    # [128:128+act_dim]; zero columns/bias elsewhere keep padded lanes inert.
    w_heads = jnp.zeros((h2, 2 * LANE), jnp.float32)
    w_heads = w_heads.at[:, :act_dim].set(w_mu)
    w_heads = w_heads.at[:, LANE:LANE + act_dim].set(w_ls)
    b_heads = jnp.zeros((1, 2 * LANE), jnp.float32)
    b_heads = b_heads.at[:, :act_dim].set(b_mu)
    b_heads = b_heads.at[:, LANE:LANE + act_dim].set(b_ls)

    return {
        # bf16 matmul weights (f32 accumulation inside the kernel).
        "w0": w0.astype(jnp.bfloat16),
        "w1": w1.astype(jnp.bfloat16),
        "w_heads": w_heads.astype(jnp.bfloat16),
        # f32 biases (added after the f32-accumulated matmul).
        "b0": b0, "b1": b1, "b_heads": b_heads,
        # Constant 0/1 placement matrix that scatters eps into its 128 lanes.
        "eps_place": jnp.eye(act_dim, LANE, dtype=jnp.float32),
    }


def _reference(obs, eps, params, act_limit):
    """Pure-JAX reference using the same bf16 weights / f32 accumulation."""
    act_dim = eps.shape[1]
    h = jnp.dot(obs.astype(jnp.bfloat16), params["w0"],
                preferred_element_type=jnp.float32) + params["b0"]
    h = jnp.maximum(h, 0.0).astype(jnp.bfloat16)
    h = jnp.dot(h, params["w1"], preferred_element_type=jnp.float32) + params["b1"]
    h = jnp.maximum(h, 0.0).astype(jnp.bfloat16)
    w_mu = params["w_heads"][:, :act_dim]
    b_mu = params["b_heads"][:, :act_dim]
    w_ls = params["w_heads"][:, LANE:LANE + act_dim]
    b_ls = params["b_heads"][:, LANE:LANE + act_dim]
    mu = jnp.dot(h, w_mu, preferred_element_type=jnp.float32) + b_mu
    log_std = jnp.clip(jnp.dot(h, w_ls, preferred_element_type=jnp.float32) + b_ls,
                       LOG_STD_MIN, LOG_STD_MAX)
    std = jnp.exp(log_std)
    pi = mu + std * eps
    logp = jnp.sum(-0.5 * eps * eps - log_std - 0.5 * jnp.log(2.0 * jnp.pi), axis=-1)
    z = -2.0 * pi
    softplus_z = jnp.maximum(z, 0.0) + jnp.log1p(jnp.exp(-jnp.abs(z)))
    logp = logp - jnp.sum(2.0 * (jnp.log(2.0) - pi - softplus_z), axis=-1)
    return act_limit * jnp.tanh(pi), logp


if __name__ == "__main__":
    B = 2048                 # many tiny rows -> 4 grid steps of 512 rows each
    obs_dim = 16
    hidden_sizes = (256, 256)
    act_dim = 8
    act_limit = 2.0

    key = jax.random.PRNGKey(0)
    k_obs, k_eps, k_par = jax.random.split(key, 3)

    obs = jax.random.normal(k_obs, (B, obs_dim), jnp.float32)
    eps = jax.random.normal(k_eps, (B, act_dim), jnp.float32)  # rsample noise
    params = init_params(k_par, obs_dim, hidden_sizes, act_dim)

    pi_action, logp_pi = jax.block_until_ready(
        squashed_gaussian_actor(obs, eps, params, act_limit))

    assert pi_action.shape == (B, act_dim)
    assert logp_pi.shape == (B,)

    ref_act, ref_logp = jax.block_until_ready(_reference(obs, eps, params, act_limit))
    assert bool(jnp.allclose(pi_action, ref_act, atol=1e-2, rtol=1e-2)), \
        float(jnp.max(jnp.abs(pi_action - ref_act)))
    assert bool(jnp.allclose(logp_pi, ref_logp, atol=5e-2, rtol=1e-2)), \
        float(jnp.max(jnp.abs(logp_pi - ref_logp)))

    print("KERNEL_OK")
</pallas_src>

<mosaic_0001>
module attributes {stable_mosaic.version = 11 : i64} {
  func.func @_actor_kernel(%arg0: i32, %arg1: memref<512x16xf32, #tpu.memory_space<vmem>>, %arg2: memref<512x8xf32, #tpu.memory_space<vmem>>, %arg3: memref<8x128xf32, #tpu.memory_space<vmem>>, %arg4: memref<16x256xbf16, #tpu.memory_space<vmem>>, %arg5: memref<1x256xf32, #tpu.memory_space<vmem>>, %arg6: memref<256x256xbf16, #tpu.memory_space<vmem>>, %arg7: memref<1x256xf32, #tpu.memory_space<vmem>>, %arg8: memref<256x256xbf16, #tpu.memory_space<vmem>>, %arg9: memref<1x256xf32, #tpu.memory_space<vmem>>, %arg10: memref<512x128xf32, #tpu.memory_space<vmem>>) attributes {dimension_semantics = [#tpu.dimension_semantics<parallel>], iteration_bounds = array<i64: 4>, scalar_prefetch = 0 : i64, scratch_operands = 0 : i64, tpu.core_type = #tpu.core_type<tc>, window_params = [{transform_indices = @transform_0, window_bounds = array<i64: 512, 16>}, {transform_indices = @transform_1, window_bounds = array<i64: 512, 8>}, {pipeline_mode = #tpu.pipeline_mode<synchronous>, transform_indices = @transform_2, window_bounds = array<i64: 8, 128>}, {pipeline_mode = #tpu.pipeline_mode<synchronous>, transform_indices = @transform_3, window_bounds = array<i64: 16, 256>}, {pipeline_mode = #tpu.pipeline_mode<synchronous>, transform_indices = @transform_4, window_bounds = array<i64: 1, 256>}, {pipeline_mode = #tpu.pipeline_mode<synchronous>, transform_indices = @transform_5, window_bounds = array<i64: 256, 256>}, {pipeline_mode = #tpu.pipeline_mode<synchronous>, transform_indices = @transform_6, window_bounds = array<i64: 1, 256>}, {pipeline_mode = #tpu.pipeline_mode<synchronous>, transform_indices = @transform_7, window_bounds = array<i64: 256, 256>}, {pipeline_mode = #tpu.pipeline_mode<synchronous>, transform_indices = @transform_8, window_bounds = array<i64: 1, 256>}, {transform_indices = @transform_9, window_bounds = array<i64: 512, 128>}]} {
    %c0 = arith.constant 0 : index
    %c0_0 = arith.constant 0 : index
    %0 = vector.load %arg1[%c0, %c0_0] : memref<512x16xf32, #tpu.memory_space<vmem>>, vector<512x16xf32>
    %1 = arith.truncf %0 : vector<512x16xf32> to vector<512x16xbf16>
    %c0_1 = arith.constant 0 : index
    %c0_2 = arith.constant 0 : index
    %2 = vector.load %arg4[%c0_1, %c0_2] : memref<16x256xbf16, #tpu.memory_space<vmem>>, vector<16x256xbf16>
    %cst = arith.constant dense<0.000000e+00> : vector<512x256xf32>
    %3 = tpu.matmul %1, %2, %cst {dimension_numbers = #tpu.dot_dimension_numbers<[1], [0], [0], [1], [0, 0, 1, 1], [], []>} : vector<512x16xbf16>, vector<16x256xbf16>, vector<512x256xf32> -> vector<512x256xf32>
    %c0_3 = arith.constant 0 : index
    %c0_4 = arith.constant 0 : index
    %4 = vector.load %arg5[%c0_3, %c0_4] : memref<1x256xf32, #tpu.memory_space<vmem>>, vector<1x256xf32>
    %5 = vector.broadcast %4 : vector<1x256xf32> to vector<512x256xf32>
    %6 = arith.addf %3, %5 : vector<512x256xf32>
    %cst_5 = arith.constant 0.000000e+00 : f32
    %7 = vector.broadcast %cst_5 : f32 to vector<512x256xf32>
    %8 = arith.maximumf %6, %7 : vector<512x256xf32>
    %9 = arith.truncf %8 : vector<512x256xf32> to vector<512x256xbf16>
    %c0_6 = arith.constant 0 : index
    %c0_7 = arith.constant 0 : index
    %10 = vector.load %arg6[%c0_6, %c0_7] : memref<256x256xbf16, #tpu.memory_space<vmem>>, vector<256x256xbf16>
    %cst_8 = arith.constant dense<0.000000e+00> : vector<512x256xf32>
    %11 = tpu.matmul %9, %10, %cst_8 {dimension_numbers = #tpu.dot_dimension_numbers<[1], [0], [0], [1], [0, 0, 1, 1], [], []>} : vector<512x256xbf16>, vector<256x256xbf16>, vector<512x256xf32> -> vector<512x256xf32>
    %c0_9 = arith.constant 0 : index
    %c0_10 = arith.constant 0 : index
    %12 = vector.load %arg7[%c0_9, %c0_10] : memref<1x256xf32, #tpu.memory_space<vmem>>, vector<1x256xf32>
    %13 = vector.broadcast %12 : vector<1x256xf32> to vector<512x256xf32>
    %14 = arith.addf %11, %13 : vector<512x256xf32>
    %cst_11 = arith.constant 0.000000e+00 : f32
    %15 = vector.broadcast %cst_11 : f32 to vector<512x256xf32>
    %16 = arith.maximumf %14, %15 : vector<512x256xf32>
    %17 = arith.truncf %16 : vector<512x256xf32> to vector<512x256xbf16>
    %c0_12 = arith.constant 0 : index
    %c0_13 = arith.constant 0 : index
    %18 = vector.load %arg8[%c0_12, %c0_13] : memref<256x256xbf16, #tpu.memory_space<vmem>>, vector<256x256xbf16>
    %cst_14 = arith.constant dense<0.000000e+00> : vector<512x256xf32>
    %19 = tpu.matmul %17, %18, %cst_14 {dimension_numbers = #tpu.dot_dimension_numbers<[1], [0], [0], [1], [0, 0, 1, 1], [], []>} : vector<512x256xbf16>, vector<256x256xbf16>, vector<512x256xf32> -> vector<512x256xf32>
    %c0_15 = arith.constant 0 : index
    %c0_16 = arith.constant 0 : index
    %20 = vector.load %arg9[%c0_15, %c0_16] : memref<1x256xf32, #tpu.memory_space<vmem>>, vector<1x256xf32>
    %21 = vector.broadcast %20 : vector<1x256xf32> to vector<512x256xf32>
    %22 = arith.addf %19, %21 : vector<512x256xf32>
    %23 = vector.extract_strided_slice %22 {offsets = [0, 0], sizes = [512, 128], strides = [1, 1]} : vector<512x256xf32> to vector<512x128xf32>
    %24 = vector.extract_strided_slice %22 {offsets = [0, 128], sizes = [512, 128], strides = [1, 1]} : vector<512x256xf32> to vector<512x128xf32>
    %cst_17 = arith.constant -2.000000e+01 : f32
    %cst_18 = arith.constant 2.000000e+00 : f32
    %25 = vector.broadcast %cst_17 : f32 to vector<512x128xf32>
    %26 = arith.maximumf %25, %24 : vector<512x128xf32>
    %27 = vector.broadcast %cst_18 : f32 to vector<512x128xf32>
    %28 = arith.minimumf %27, %26 : vector<512x128xf32>
    %29 = math.exp %28 : vector<512x128xf32>
    %c0_19 = arith.constant 0 : index
    %c0_20 = arith.constant 0 : index
    %30 = vector.load %arg2[%c0_19, %c0_20] : memref<512x8xf32, #tpu.memory_space<vmem>>, vector<512x8xf32>
    %c0_21 = arith.constant 0 : index
    %c0_22 = arith.constant 0 : index
    %31 = vector.load %arg3[%c0_21, %c0_22] : memref<8x128xf32, #tpu.memory_space<vmem>>, vector<8x128xf32>
    %cst_23 = arith.constant dense<0.000000e+00> : vector<512x128xf32>
    %32 = tpu.matmul %30, %31, %cst_23 {dimension_numbers = #tpu.dot_dimension_numbers<[1], [0], [0], [1], [0, 0, 1, 1], [], []>} : vector<512x8xf32>, vector<8x128xf32>, vector<512x128xf32> -> vector<512x128xf32>
    %33 = arith.mulf %29, %32 : vector<512x128xf32>
    %34 = arith.addf %23, %33 : vector<512x128xf32>
    %cst_24 = arith.constant -2.000000e+00 : f32
    %35 = vector.broadcast %cst_24 : f32 to vector<512x128xf32>
    %36 = arith.mulf %35, %34 : vector<512x128xf32>
    %cst_25 = arith.constant 0.000000e+00 : f32
    %37 = vector.broadcast %cst_25 : f32 to vector<512x128xf32>
    %38 = arith.maximumf %36, %37 : vector<512x128xf32>
    %39 = math.absf %36 : vector<512x128xf32>
    %cst_26 = arith.constant 0.000000e+00 : f32
    %40 = vector.broadcast %cst_26 : f32 to vector<512x128xf32>
    %41 = arith.subf %40, %39 : vector<512x128xf32>
    %42 = math.exp %41 : vector<512x128xf32>
    %43 = math.log1p %42 : vector<512x128xf32>
    %44 = arith.addf %38, %43 : vector<512x128xf32>
    %cst_27 = arith.constant -5.000000e-01 : f32
    %45 = vector.broadcast %cst_27 : f32 to vector<512x128xf32>
    %46 = arith.mulf %45, %32 : vector<512x128xf32>
    %47 = arith.mulf %46, %32 : vector<512x128xf32>
    %48 = arith.subf %47, %28 : vector<512x128xf32>
    %cst_28 = arith.constant 6.28318548 : f32
    %49 = math.log %cst_28 : f32
    %cst_29 = arith.constant 5.000000e-01 : f32
    %50 = arith.mulf %cst_29, %49 : f32
    %51 = vector.broadcast %50 : f32 to vector<512x128xf32>
    %52 = arith.subf %48, %51 : vector<512x128xf32>
    %cst_30 = arith.constant 2.000000e+00 : f32
    %53 = math.log %cst_30 : f32
    %54 = vector.broadcast %53 : f32 to vector<512x128xf32>
    %55 = arith.subf %54, %34 : vector<512x128xf32>
    %56 = arith.subf %55, %44 : vector<512x128xf32>
    %cst_31 = arith.constant 2.000000e+00 : f32
    %57 = vector.broadcast %cst_31 : f32 to vector<512x128xf32>
    %58 = arith.mulf %57, %56 : vector<512x128xf32>
    %59 = arith.subf %52, %58 : vector<512x128xf32>
    %60 = tpu.iota {dimensions = array<i32: 1>} : vector<512x128xi32>
    %c8_i32 = arith.constant 8 : i32
    %61 = vector.broadcast %c8_i32 : i32 to vector<512x128xi32>
    %62 = arith.cmpi slt, %60, %61 : vector<512x128xi32>
    %cst_32 = arith.constant 0.000000e+00 : f32
    %63 = vector.broadcast %cst_32 : f32 to vector<512x128xf32>
    %64 = arith.select %62, %59, %63 : vector<512x128xi1>, vector<512x128xf32>
    %cst_33 = arith.constant dense<0.000000e+00> : vector<512xf32>
    %65 = vector.multi_reduction <add>, %64, %cst_33 [1] : vector<512x128xf32> to vector<512xf32>
    %66 = vector.shape_cast %65 : vector<512xf32> to vector<512x1xf32>
    %67 = math.tanh %34 : vector<512x128xf32>
    %cst_34 = arith.constant 2.000000e+00 : f32
    %68 = vector.broadcast %cst_34 : f32 to vector<512x128xf32>
    %69 = arith.mulf %68, %67 : vector<512x128xf32>
    %c8_i32_35 = arith.constant 8 : i32
    %70 = vector.broadcast %c8_i32_35 : i32 to vector<512x128xi32>
    %71 = arith.cmpi eq, %60, %70 : vector<512x128xi32>
    %72 = vector.shape_cast %66 : vector<512x1xf32> to vector<512x1xf32>
    %73 = vector.broadcast %72 : vector<512x1xf32> to vector<512x128xf32>
    %74 = arith.select %71, %73, %69 : vector<512x128xi1>, vector<512x128xf32>
    %c0_36 = arith.constant 0 : index
    %c0_37 = arith.constant 0 : index
    %75 = vector.load %arg10[%c0_36, %c0_37] : memref<512x128xf32, #tpu.memory_space<vmem>>, vector<512x128xf32>
    tpu.vector_store %arg10[%c0_36, %c0_37], %74 {strides = array<i32>} : memref<512x128xf32, #tpu.memory_space<vmem>>, vector<512x128xf32>,
    return
  }
  func.func @transform_0(%arg0: i32) -> (i32, i32) {
    %c0_i32 = arith.constant 0 : i32
    %c0_i32_0 = arith.constant 0 : i32
    return %arg0, %c0_i32 : i32, i32
  }
  func.func @transform_1(%arg0: i32) -> (i32, i32) {
    %c0_i32 = arith.constant 0 : i32
    %c0_i32_0 = arith.constant 0 : i32
    return %arg0, %c0_i32 : i32, i32
  }
  func.func @transform_2(%arg0: i32) -> (i32, i32) {
    %c0_i32 = arith.constant 0 : i32
    %c0_i32_0 = arith.constant 0 : i32
    %c0_i32_1 = arith.constant 0 : i32
    return %c0_i32, %c0_i32_0 : i32, i32
  }
  func.func @transform_3(%arg0: i32) -> (i32, i32) {
    %c0_i32 = arith.constant 0 : i32
    %c0_i32_0 = arith.constant 0 : i32
    %c0_i32_1 = arith.constant 0 : i32
    return %c0_i32, %c0_i32_0 : i32, i32
  }
  func.func @transform_4(%arg0: i32) -> (i32, i32) {
    %c0_i32 = arith.constant 0 : i32
    %c0_i32_0 = arith.constant 0 : i32
    %c0_i32_1 = arith.constant 0 : i32
    return %c0_i32, %c0_i32_0 : i32, i32
  }
  func.func @transform_5(%arg0: i32) -> (i32, i32) {
    %c0_i32 = arith.constant 0 : i32
    %c0_i32_0 = arith.constant 0 : i32
    %c0_i32_1 = arith.constant 0 : i32
    return %c0_i32, %c0_i32_0 : i32, i32
  }
  func.func @transform_6(%arg0: i32) -> (i32, i32) {
    %c0_i32 = arith.constant 0 : i32
    %c0_i32_0 = arith.constant 0 : i32
    %c0_i32_1 = arith.constant 0 : i32
    return %c0_i32, %c0_i32_0 : i32, i32
  }
  func.func @transform_7(%arg0: i32) -> (i32, i32) {
    %c0_i32 = arith.constant 0 : i32
    %c0_i32_0 = arith.constant 0 : i32
    %c0_i32_1 = arith.constant 0 : i32
    return %c0_i32, %c0_i32_0 : i32, i32
  }
  func.func @transform_8(%arg0: i32) -> (i32, i32) {
    %c0_i32 = arith.constant 0 : i32
    %c0_i32_0 = arith.constant 0 : i32
    %c0_i32_1 = arith.constant 0 : i32
    return %c0_i32, %c0_i32_0 : i32, i32
  }
  func.func @transform_9(%arg0: i32) -> (i32, i32) {
    %c0_i32 = arith.constant 0 : i32
    %c0_i32_0 = arith.constant 0 : i32
    return %arg0, %c0_i32 : i32, i32
  }
}

</mosaic_0001>

<llo_original>
// kernel: tpu_custom_call.1
$region0: #{tpu_custom_call.1}
  #allocation0 [shape = 'u32[]', space=smem, size = 0x4, offset = 0x4, fixed_abs, tag = 'smem constant byte address 0x4 - core index']
  #allocation1 [shape = 'u32[144,128]{1,0:T(1,128)}', space=vmem, size = 0x12000, scoped, tag = 'internal scratch']
  %s0 = inlined_call_operand.vmem [shape: f32[2048,16], index: 0, kind: input, shape index: {}]
  %s1 = inlined_call_operand.vmem [shape: f32[2048,8], index: 1, kind: input, shape index: {}]
  %s2 = inlined_call_operand.vmem [shape: f32[8,128], index: 2, kind: input, shape index: {}]
  %s3 = inlined_call_operand.vmem [shape: bf16[16,256], index: 3, kind: input, shape index: {}]
  %s4 = inlined_call_operand.vmem [shape: f32[1,256], index: 4, kind: input, shape index: {}]
  %s5 = inlined_call_operand.vmem [shape: bf16[256,256], index: 5, kind: input, shape index: {}]
  %s6 = inlined_call_operand.vmem [shape: f32[1,256], index: 6, kind: input, shape index: {}]
  %s7 = inlined_call_operand.vmem [shape: bf16[256,256], index: 7, kind: input, shape index: {}]
  %s8 = inlined_call_operand.vmem [shape: f32[1,256], index: 8, kind: input, shape index: {}]
  %s9 = inlined_call_operand.hbm [shape: f32[2048,128], index: 9, kind: output, shape index: {}]
  %s10 = sld [smem:[#allocation0]]
  $region69: #{tpu_custom_call.1} parent=0
    _
  %s12 = ssub.s32 1, %s10
  %s13 = scalar_select 0, %s12, %s10
  $region1: #{tpu_custom_call.1} parent=0
    #allocation2 [shape = 'u8[524288]{0}', space=vmem, size = 0x80000, scoped, tag = 'output window, operand 0']
    #allocation3 [shape = 's32[2]{0}', space=sflag, size = 0x8, scoped, tag = 'scoped memory for tpu_custom_call.1']
    %14 = vsyncpa [#allocation3], 0
    %s15 = scalar_lea.sflag [#allocation3], 1
    %16 = vsyncpa %s15, 0
    loop: start=0, step=1, limit=6
    $region2: #{tpu_custom_call.1} parent=1 // loop_pre_header
      _
    $region3: #{tpu_custom_call.1} parent=1 // loop_header
      %s18 = sphi 0, %s22
      %p19 = scmp.ge.s32.totalorder %s18, 6
      %s28 = sphi 0, %s30
      %s31 = sphi 0, %s28
      %s32 = sphi 0, %s31
      %s48 = sphi 0, %s32
      %s54 = sphi 0, %s56
      %s57 = sphi 0, %s54
      %s58 = sphi 0, %s57
      %s74 = sphi 0, %s58
      %s78 = sphi 0, %s78
      %s80 = sphi 0, %s78
      %s81 = sphi 0, %s80
      %s95 = sphi 0, %s81
      %s99 = sphi 0, %s99
      %s101 = sphi 0, %s99
      %s102 = sphi 0, %s101
      %s116 = sphi 0, %s102
      %s120 = sphi 0, %s120
      %s122 = sphi 0, %s120
      %s123 = sphi 0, %s122
      %s137 = sphi 0, %s123
      %s141 = sphi 0, %s141
      %s143 = sphi 0, %s141
      %s144 = sphi 0, %s143
      %s158 = sphi 0, %s144
      %s162 = sphi 0, %s162
      %s164 = sphi 0, %s162
      %s165 = sphi 0, %s164
      %s179 = sphi 0, %s165
      %s183 = sphi 0, %s183
      %s185 = sphi 0, %s183
      %s186 = sphi 0, %s185
      %s200 = sphi 0, %s186
      %s204 = sphi 0, %s204
      %s206 = sphi 0, %s204
      %s207 = sphi 0, %s206
      %s221 = sphi 0, %s207
      %s227 = sphi 0, %s229
      %s230 = sphi 0, %s227
      %s231 = sphi 0, %s230
      %s247 = sphi 0, %s231
    $region4: #{tpu_custom_call.1} parent=1 // loop_header_branch
      %21 = sbr.rel (%p19) target = $region8
    $region5: #{tpu_custom_call.1} parent=1 // loop_body
      %s23 = ssub.s32 %s18, 1
      %s24 = ssub.s32 %s18, 2
      %s25 = sadd.s32 %s18, 1
      %s26 = ssub.s32 %s18, %s25
      %p27 = scmp.eq.s32.totalorder %s26, 0
      %s29 = sadd.s32 %s28, 1
      %s30 = scalar_select %p27, %s28, %s29
      %p33 = pneg %p27
      %p34 = scmp.eq.s32.totalorder %s18, 3
      %p35 = por %p33, %p34
      %p36 = scmp.ne.s32.totalorder %s28, %s31
      %p37 = scmp.eq.s32.totalorder %s18, 0
      %p38 = por %p36, %p37
      %p39 = scmp.ne.s32.totalorder %s28, %s31
      %p40 = scmp.eq.s32.totalorder %s23, 3
      %p41 = por %p39, %p40
      %p42 = scmp.ne.s32.totalorder %s31, %s32
      %p43 = scmp.eq.s32.totalorder %s23, 0
      %p44 = por %p42, %p43
      %p45 = scmp.ne.s32.totalorder %s31, %s32
      %p46 = scmp.eq.s32.totalorder %s24, 3
      %p47 = por %p45, %p46
      %p49 = scmp.ne.s32.totalorder %s32, %s48
      %p50 = scmp.eq.s32.totalorder %s24, 0
      %p51 = por %p49, %p50
      %s52 = ssub.s32 %s18, %s25
      %p53 = scmp.eq.s32.totalorder %s52, 0
      %s55 = sadd.s32 %s54, 1
      %s56 = scalar_select %p53, %s54, %s55
      %p59 = pneg %p53
      %p60 = scmp.eq.s32.totalorder %s18, 3
      %p61 = por %p59, %p60
      %p62 = scmp.ne.s32.totalorder %s54, %s57
      %p63 = scmp.eq.s32.totalorder %s18, 0
      %p64 = por %p62, %p63
      %p65 = scmp.ne.s32.totalorder %s54, %s57
      %p66 = scmp.eq.s32.totalorder %s23, 3
      %p67 = por %p65, %p66
      %p68 = scmp.ne.s32.totalorder %s57, %s58
      %p69 = scmp.eq.s32.totalorder %s23, 0
      %p70 = por %p68, %p69
      %p71 = scmp.ne.s32.totalorder %s57, %s58
      %p72 = scmp.eq.s32.totalorder %s24, 3
      %p73 = por %p71, %p72
      %p75 = scmp.ne.s32.totalorder %s58, %s74
      %p76 = scmp.eq.s32.totalorder %s24, 0
      %p77 = por %p75, %p76
      %s79 = sadd.s32 %s78, 1
      %p82 = scmp.eq.s32.totalorder %s18, 3
      %p83 = scmp.ne.s32.totalorder %s78, %s80
      %p84 = scmp.eq.s32.totalorder %s18, 0
      %p85 = por %p83, %p84
      %p86 = scmp.ne.s32.totalorder %s78, %s80
      %p87 = scmp.eq.s32.totalorder %s23, 3
      %p88 = por %p86, %p87
      %p89 = scmp.ne.s32.totalorder %s80, %s81
      %p90 = scmp.eq.s32.totalorder %s23, 0
      %p91 = por %p89, %p90
      %p92 = scmp.ne.s32.totalorder %s80, %s81
      %p93 = scmp.eq.s32.totalorder %s24, 3
      %p94 = por %p92, %p93
      %p96 = scmp.ne.s32.totalorder %s81, %s95
      %p97 = scmp.eq.s32.totalorder %s24, 0
      %p98 = por %p96, %p97
      %s100 = sadd.s32 %s99, 1
      %p103 = scmp.eq.s32.totalorder %s18, 3
      %p104 = scmp.ne.s32.totalorder %s99, %s101
      %p105 = scmp.eq.s32.totalorder %s18, 0
      %p106 = por %p104, %p105
      %p107 = scmp.ne.s32.totalorder %s99, %s101
      %p108 = scmp.eq.s32.totalorder %s23, 3
      %p109 = por %p107, %p108
      %p110 = scmp.ne.s32.totalorder %s101, %s102
      %p111 = scmp.eq.s32.totalorder %s23, 0
      %p112 = por %p110, %p111
      %p113 = scmp.ne.s32.totalorder %s101, %s102
      %p114 = scmp.eq.s32.totalorder %s24, 3
      %p115 = por %p113, %p114
      %p117 = scmp.ne.s32.totalorder %s102, %s116
      %p118 = scmp.eq.s32.totalorder %s24, 0
      %p119 = por %p117, %p118
      %s121 = sadd.s32 %s120, 1
      %p124 = scmp.eq.s32.totalorder %s18, 3
      %p125 = scmp.ne.s32.totalorder %s120, %s122
      %p126 = scmp.eq.s32.totalorder %s18, 0
      %p127 = por %p125, %p126
      %p128 = scmp.ne.s32.totalorder %s120, %s122
      %p129 = scmp.eq.s32.totalorder %s23, 3
      %p130 = por %p128, %p129
      %p131 = scmp.ne.s32.totalorder %s122, %s123
      %p132 = scmp.eq.s32.totalorder %s23, 0
      %p133 = por %p131, %p132
      %p134 = scmp.ne.s32.totalorder %s122, %s123
      %p135 = scmp.eq.s32.totalorder %s24, 3
      %p136 = por %p134, %p135
      %p138 = scmp.ne.s32.totalorder %s123, %s137
      %p139 = scmp.eq.s32.totalorder %s24, 0
      %p140 = por %p138, %p139
      %s142 = sadd.s32 %s141, 1
      %p145 = scmp.eq.s32.totalorder %s18, 3
      %p146 = scmp.ne.s32.totalorder %s141, %s143
      %p147 = scmp.eq.s32.totalorder %s18, 0
      %p148 = por %p146, %p147
      %p149 = scmp.ne.s32.totalorder %s141, %s143
      %p150 = scmp.eq.s32.totalorder %s23, 3
      %p151 = por %p149, %p150
      %p152 = scmp.ne.s32.totalorder %s143, %s144
      %p153 = scmp.eq.s32.totalorder %s23, 0
      %p154 = por %p152, %p153
      %p155 = scmp.ne.s32.totalorder %s143, %s144
      %p156 = scmp.eq.s32.totalorder %s24, 3
      %p157 = por %p155, %p156
      %p159 = scmp.ne.s32.totalorder %s144, %s158
      %p160 = scmp.eq.s32.totalorder %s24, 0
      %p161 = por %p159, %p160
      %s163 = sadd.s32 %s162, 1
      %p166 = scmp.eq.s32.totalorder %s18, 3
      %p167 = scmp.ne.s32.totalorder %s162, %s164
      %p168 = scmp.eq.s32.totalorder %s18, 0
      %p169 = por %p167, %p168
      %p170 = scmp.ne.s32.totalorder %s162, %s164
      %p171 = scmp.eq.s32.totalorder %s23, 3
      %p172 = por %p170, %p171
      %p173 = scmp.ne.s32.totalorder %s164, %s165
      %p174 = scmp.eq.s32.totalorder %s23, 0
      %p175 = por %p173, %p174
      %p176 = scmp.ne.s32.totalorder %s164, %s165
      %p177 = scmp.eq.s32.totalorder %s24, 3
      %p178 = por %p176, %p177
      %p180 = scmp.ne.s32.totalorder %s165, %s179
      %p181 = scmp.eq.s32.totalorder %s24, 0
      %p182 = por %p180, %p181
      %s184 = sadd.s32 %s183, 1
      %p187 = scmp.eq.s32.totalorder %s18, 3
      %p188 = scmp.ne.s32.totalorder %s183, %s185
      %p189 = scmp.eq.s32.totalorder %s18, 0
      %p190 = por %p188, %p189
      %p191 = scmp.ne.s32.totalorder %s183, %s185
      %p192 = scmp.eq.s32.totalorder %s23, 3
      %p193 = por %p191, %p192
      %p194 = scmp.ne.s32.totalorder %s185, %s186
      %p195 = scmp.eq.s32.totalorder %s23, 0
      %p196 = por %p194, %p195
      %p197 = scmp.ne.s32.totalorder %s185, %s186
      %p198 = scmp.eq.s32.totalorder %s24, 3
      %p199 = por %p197, %p198
      %p201 = scmp.ne.s32.totalorder %s186, %s200
      %p202 = scmp.eq.s32.totalorder %s24, 0
      %p203 = por %p201, %p202
      %s205 = sadd.s32 %s204, 1
      %p208 = scmp.eq.s32.totalorder %s18, 3
      %p209 = scmp.ne.s32.totalorder %s204, %s206
      %p210 = scmp.eq.s32.totalorder %s18, 0
      %p211 = por %p209, %p210
      %p212 = scmp.ne.s32.totalorder %s204, %s206
      %p213 = scmp.eq.s32.totalorder %s23, 3
      %p214 = por %p212, %p213
      %p215 = scmp.ne.s32.totalorder %s206, %s207
      %p216 = scmp.eq.s32.totalorder %s23, 0
      %p217 = por %p215, %p216
      %p218 = scmp.ne.s32.totalorder %s206, %s207
      %p219 = scmp.eq.s32.totalorder %s24, 3
      %p220 = por %p218, %p219
      %p222 = scmp.ne.s32.totalorder %s207, %s221
      %p223 = scmp.eq.s32.totalorder %s24, 0
      %p224 = por %p222, %p223
      %s225 = ssub.s32 %s18, %s25
      %p226 = scmp.eq.s32.totalorder %s225, 0
      %s228 = sadd.s32 %s227, 1
      %s229 = scalar_select %p226, %s227, %s228
      %p232 = pneg %p226
      %p233 = scmp.eq.s32.totalorder %s18, 3
      %p234 = por %p232, %p233
      %p235 = scmp.ne.s32.totalorder %s227, %s230
      %p236 = scmp.eq.s32.totalorder %s18, 0
      %p237 = por %p235, %p236
      %p238 = scmp.ne.s32.totalorder %s227, %s230
      %p239 = scmp.eq.s32.totalorder %s23, 3
      %p240 = por %p238, %p239
      %p241 = scmp.ne.s32.totalorder %s230, %s231
      %p242 = scmp.eq.s32.totalorder %s23, 0
      %p243 = por %p241, %p242
      %p244 = scmp.ne.s32.totalorder %s230, %s231
      %p245 = scmp.eq.s32.totalorder %s24, 3
      %p246 = por %p244, %p245
      %p248 = scmp.ne.s32.totalorder %s231, %s247
      %p249 = scmp.eq.s32.totalorder %s24, 0
      %p250 = por %p248, %p249
      %p251 = scmp.le.s32.totalorder 1, %s18
      %p252 = scmp.lt.s32.totalorder %s18, 5
      %p253 = pnand %p251, %p252
      %p254 = pneg %p253
      // Predicated region
      $region9: #{tpu_custom_call.1} parent=5 // pred_check
        _
      $region10: #{tpu_custom_call.1} parent=5 // pred_check_branch
        %256 = sbr.rel (%p253) target = $region12
      $region11: #{tpu_custom_call.1} parent=5 // pred_region
        %s257 = ssub.s32 %s18, 1
        // Predicated region
        $region13: #{tpu_custom_call.1} parent=11 // pred_check
          %p258 = pneg %p91
        $region14: #{tpu_custom_call.1} parent=11 // pred_check_branch
          %260 = sbr.rel (%p258) target = $region16
        $region15: #{tpu_custom_call.1} parent=11 // pred_region
          _
        $region16: #{tpu_custom_call.1} parent=11 // pred_fallthru
          _
        // Predicated region
        $region17: #{tpu_custom_call.1} parent=11 // pred_check
          %p261 = pneg %p112
        $region18: #{tpu_custom_call.1} parent=11 // pred_check_branch
          %263 = sbr.rel (%p261) target = $region20
        $region19: #{tpu_custom_call.1} parent=11 // pred_region
          _
        $region20: #{tpu_custom_call.1} parent=11 // pred_fallthru
          _
        // Predicated region
        $region21: #{tpu_custom_call.1} parent=11 // pred_check
          %p264 = pneg %p133
        $region22: #{tpu_custom_call.1} parent=11 // pred_check_branch
          %266 = sbr.rel (%p264) target = $region24
        $region23: #{tpu_custom_call.1} parent=11 // pred_region
          _
        $region24: #{tpu_custom_call.1} parent=11 // pred_fallthru
          _
        // Predicated region
        $region25: #{tpu_custom_call.1} parent=11 // pred_check
          %p267 = pneg %p154
        $region26: #{tpu_custom_call.1} parent=11 // pred_check_branch
          %269 = sbr.rel (%p267) target = $region28
        $region27: #{tpu_custom_call.1} parent=11 // pred_region
          _
        $region28: #{tpu_custom_call.1} parent=11 // pred_fallthru
          _
        // Predicated region
        $region29: #{tpu_custom_call.1} parent=11 // pred_check
          %p270 = pneg %p175
        $region30: #{tpu_custom_call.1} parent=11 // pred_check_branch
          %272 = sbr.rel (%p270) target = $region32
        $region31: #{tpu_custom_call.1} parent=11 // pred_region
          _
        $region32: #{tpu_custom_call.1} parent=11 // pred_fallthru
          _
        // Predicated region
        $region33: #{tpu_custom_call.1} parent=11 // pred_check
          %p273 = pneg %p196
        $region34: #{tpu_custom_call.1} parent=11 // pred_check_branch
          %275 = sbr.rel (%p273) target = $region36
        $region35: #{tpu_custom_call.1} parent=11 // pred_region
          _
        $region36: #{tpu_custom_call.1} parent=11 // pred_fallthru
          _
        // Predicated region
        $region37: #{tpu_custom_call.1} parent=11 // pred_check
          %p276 = pneg %p217
        $region38: #{tpu_custom_call.1} parent=11 // pred_check_branch
          %278 = sbr.rel (%p276) target = $region40
        $region39: #{tpu_custom_call.1} parent=11 // pred_region
          _
        $region40: #{tpu_custom_call.1} parent=11 // pred_fallthru
          _
      $region12: #{tpu_custom_call.1} parent=5 // pred_fallthru
        _
      %p279 = scmp.lt.s32.totalorder %s18, 4
      // Predicated region
      $region41: #{tpu_custom_call.1} parent=5 // pred_check
        %p280 = pneg %p279
      $region42: #{tpu_custom_call.1} parent=5 // pred_check_branch
        %282 = sbr.rel (%p280) target = $region44
      $region43: #{tpu_custom_call.1} parent=5 // pred_region
        // Predicated region
        $region45: #{tpu_custom_call.1} parent=43 // pred_check
          %p283 = pneg %p38
        $region46: #{tpu_custom_call.1} parent=43 // pred_check_branch
          %285 = sbr.rel (%p283) target = $region48
        $region47: #{tpu_custom_call.1} parent=43 // pred_region
          %s286 = smul.u32 64, %s18
          %p287 = scmp.lt.s32.totalorder %s286, 255
          %s288 = scalar_select %p287, %s286, 255
          %s289 = smul.addr %s288, 8
          %s290 = scalar_lea.vmem %s0, %s289
          %s291 = smul.u32 64, %s18
        $region48: #{tpu_custom_call.1} parent=43 // pred_fallthru
          _
        // Predicated region
        $region49: #{tpu_custom_call.1} parent=43 // pred_check
          %p292 = pneg %p64
        $region50: #{tpu_custom_call.1} parent=43 // pred_check_branch
          %294 = sbr.rel (%p292) target = $region52
        $region51: #{tpu_custom_call.1} parent=43 // pred_region
          %s295 = smul.u32 64, %s18
          %p296 = scmp.lt.s32.totalorder %s295, 255
          %s297 = scalar_select %p296, %s295, 255
          %s298 = smul.addr %s297, 8
          %s299 = scalar_lea.vmem %s1, %s298
          %s300 = smul.u32 64, %s18
        $region52: #{tpu_custom_call.1} parent=43 // pred_fallthru
          _
      $region44: #{tpu_custom_call.1} parent=5 // pred_fallthru
        _
      %p301 = scmp.le.s32.totalorder 1, %s18
      %p302 = scmp.lt.s32.totalorder %s18, 5
      %p303 = pnand %p301, %p302
      %p304 = pneg %p303
      // Predicated region
      $region53: #{tpu_custom_call.1} parent=5 // pred_check
        _
      $region54: #{tpu_custom_call.1} parent=5 // pred_check_branch
        %306 = sbr.rel (%p303) target = $region56
      $region55: #{tpu_custom_call.1} parent=5 // pred_region
        %s307 = ssub.s32 %s18, 1
        %s308 = smul.u32 64, %s23
        %p309 = scmp.lt.s32.totalorder %s308, 255
        %s310 = scalar_select %p309, %s308, 255
        %s311 = smul.addr %s310, 8
        %s312 = scalar_lea.vmem %s0, %s311
        %p313 = pneg %p44
        %p314 = pneg %p41
        %s315 = smul.u32 64, %s23
        %p316 = scmp.lt.s32.totalorder %s315, 255
        %s317 = scalar_select %p316, %s315, 255
        %s318 = smul.addr %s317, 8
        %s319 = scalar_lea.vmem %s1, %s318
        %p320 = pneg %p70
        %p321 = pneg %p67
        %p322 = pneg %p91
        %p323 = pneg %p88
        %p324 = pneg %p112
        %p325 = pneg %p109
        %p326 = pneg %p133
        %p327 = pneg %p130
        %p328 = pneg %p154
        %p329 = pneg %p151
        %p330 = pneg %p175
        %p331 = pneg %p172
        %p332 = pneg %p196
        %p333 = pneg %p193
        %p334 = pneg %p217
        %p335 = pneg %p214
        %p336 = pneg %p243
        %p337 = pneg %p240
        %s338 = sand.u32 %s230, 1
        %s339 = scalar_lea.sflag [#allocation3], %s338
        %s340 = sand.u32 %s230, 1
        %s341 = smul.addr %s340, 512
        %s342 = scalar_lea.vmem [#allocation2], %s341
        %s343 = smul.u32 64, %s23
        %p344 = scmp.lt.s32.totalorder %s343, 255
        %s345 = scalar_select %p344, %s343, 255
        %s346 = smul.addr %s345, 8
        %s347 = scalar_lea.vmem %s0, %s346
        %s348 = smul.u32 64, %s23
        %s349 = smul.u32 64, %s23
        %p350 = scmp.lt.s32.totalorder %s349, 255
        %s351 = scalar_select %p350, %s349, 255
        %s352 = smul.addr %s351, 8
        %s353 = scalar_lea.vmem %s1, %s352
        %s354 = smul.u32 64, %s23
        %s355 = smul.u32 64, %s23
        %v357 = vld [vmem:[%s347] sm:$0xff]
        %v358 = vld [vmem:[%s347 + $0x8] sm:$0xff]
        %v359 = vld [vmem:[%s347 + $0x10] sm:$0xff]
        %v360 = vld [vmem:[%s347 + $0x18] sm:$0xff]
        %v361 = vld [vmem:[%s347 + $0x20] sm:$0xff]
        %v362 = vld [vmem:[%s347 + $0x28] sm:$0xff]
        %v363 = vld [vmem:[%s347 + $0x30] sm:$0xff]
        %v364 = vld [vmem:[%s347 + $0x38] sm:$0xff]
        %v365 = vld [vmem:[%s347 + $0x40] sm:$0xff]
        %v366 = vld [vmem:[%s347 + $0x48] sm:$0xff]
        %v367 = vld [vmem:[%s347 + $0x50] sm:$0xff]
        %v368 = vld [vmem:[%s347 + $0x58] sm:$0xff]
        %v369 = vld [vmem:[%s347 + $0x60] sm:$0xff]
        %v370 = vld [vmem:[%s347 + $0x68] sm:$0xff]
        %v371 = vld [vmem:[%s347 + $0x70] sm:$0xff]
        %v372 = vld [vmem:[%s347 + $0x78] sm:$0xff]
        %v373 = vld [vmem:[%s347 + $0x80] sm:$0xff]
        %v374 = vld [vmem:[%s347 + $0x88] sm:$0xff]
        %v375 = vld [vmem:[%s347 + $0x90] sm:$0xff]
        %v376 = vld [vmem:[%s347 + $0x98] sm:$0xff]
        %v377 = vld [vmem:[%s347 + $0xa0] sm:$0xff]
        %v378 = vld [vmem:[%s347 + $0xa8] sm:$0xff]
        %v379 = vld [vmem:[%s347 + $0xb0] sm:$0xff]
        %v380 = vld [vmem:[%s347 + $0xb8] sm:$0xff]
        %v381 = vld [vmem:[%s347 + $0xc0] sm:$0xff]
        %v382 = vld [vmem:[%s347 + $0xc8] sm:$0xff]
        %v383 = vld [vmem:[%s347 + $0xd0] sm:$0xff]
        %v384 = vld [vmem:[%s347 + $0xd8] sm:$0xff]
        %v385 = vld [vmem:[%s347 + $0xe0] sm:$0xff]
        %v386 = vld [vmem:[%s347 + $0xe8] sm:$0xff]
        %v387 = vld [vmem:[%s347 + $0xf0] sm:$0xff]
        %v388 = vld [vmem:[%s347 + $0xf8] sm:$0xff]
        %v389 = vld [vmem:[%s347 + $0x100] sm:$0xff]
        %v390 = vld [vmem:[%s347 + $0x108] sm:$0xff]
        %v391 = vld [vmem:[%s347 + $0x110] sm:$0xff]
        %v392 = vld [vmem:[%s347 + $0x118] sm:$0xff]
        %v393 = vld [vmem:[%s347 + $0x120] sm:$0xff]
        %v394 = vld [vmem:[%s347 + $0x128] sm:$0xff]
        %v395 = vld [vmem:[%s347 + $0x130] sm:$0xff]
        %v396 = vld [vmem:[%s347 + $0x138] sm:$0xff]
        %v397 = vld [vmem:[%s347 + $0x140] sm:$0xff]
        %v398 = vld [vmem:[%s347 + $0x148] sm:$0xff]
        %v399 = vld [vmem:[%s347 + $0x150] sm:$0xff]
        %v400 = vld [vmem:[%s347 + $0x158] sm:$0xff]
        %v401 = vld [vmem:[%s347 + $0x160] sm:$0xff]
        %v402 = vld [vmem:[%s347 + $0x168] sm:$0xff]
        %v403 = vld [vmem:[%s347 + $0x170] sm:$0xff]
        %v404 = vld [vmem:[%s347 + $0x178] sm:$0xff]
        %v405 = vld [vmem:[%s347 + $0x180] sm:$0xff]
        %v406 = vld [vmem:[%s347 + $0x188] sm:$0xff]
        %v407 = vld [vmem:[%s347 + $0x190] sm:$0xff]
        %v408 = vld [vmem:[%s347 + $0x198] sm:$0xff]
        %v409 = vld [vmem:[%s347 + $0x1a0] sm:$0xff]
        %v410 = vld [vmem:[%s347 + $0x1a8] sm:$0xff]
        %v411 = vld [vmem:[%s347 + $0x1b0] sm:$0xff]
        %v412 = vld [vmem:[%s347 + $0x1b8] sm:$0xff]
        %v413 = vld [vmem:[%s347 + $0x1c0] sm:$0xff]
        %v414 = vld [vmem:[%s347 + $0x1c8] sm:$0xff]
        %v415 = vld [vmem:[%s347 + $0x1d0] sm:$0xff]
        %v416 = vld [vmem:[%s347 + $0x1d8] sm:$0xff]
        %v417 = vld [vmem:[%s347 + $0x1e0] sm:$0xff]
        %v418 = vld [vmem:[%s347 + $0x1e8] sm:$0xff]
        %v419 = vld [vmem:[%s347 + $0x1f0] sm:$0xff]
        %v420 = vld [vmem:[%s347 + $0x1f8] sm:$0xff]
        %v421 = vpack.c.bf16 %v358, %v357
        %v422 = vpack.c.bf16 %v360, %v359
        %v423 = vpack.c.bf16 %v362, %v361
        %v424 = vpack.c.bf16 %v364, %v363
        %v425 = vpack.c.bf16 %v366, %v365
        %v426 = vpack.c.bf16 %v368, %v367
        %v427 = vpack.c.bf16 %v370, %v369
        %v428 = vpack.c.bf16 %v372, %v371
        %v429 = vpack.c.bf16 %v374, %v373
        %v430 = vpack.c.bf16 %v376, %v375
        %v431 = vpack.c.bf16 %v378, %v377
        %v432 = vpack.c.bf16 %v380, %v379
        %v433 = vpack.c.bf16 %v382, %v381
        %v434 = vpack.c.bf16 %v384, %v383
        %v435 = vpack.c.bf16 %v386, %v385
        %v436 = vpack.c.bf16 %v388, %v387
        %v437 = vpack.c.bf16 %v390, %v389
        %v438 = vpack.c.bf16 %v392, %v391
        %v439 = vpack.c.bf16 %v394, %v393
        %v440 = vpack.c.bf16 %v396, %v395
        %v441 = vpack.c.bf16 %v398, %v397
        %v442 = vpack.c.bf16 %v400, %v399
        %v443 = vpack.c.bf16 %v402, %v401
        %v444 = vpack.c.bf16 %v404, %v403
        %v445 = vpack.c.bf16 %v406, %v405
        %v446 = vpack.c.bf16 %v408, %v407
        %v447 = vpack.c.bf16 %v410, %v409
        %v448 = vpack.c.bf16 %v412, %v411
        %v449 = vpack.c.bf16 %v414, %v413
        %v450 = vpack.c.bf16 %v416, %v415
        %v451 = vpack.c.bf16 %v418, %v417
        %v452 = vpack.c.bf16 %v420, %v419
        %v453 = vld [vmem:[%s3] sm:$0xff]
        %v454 = vld [vmem:[%s3 + $0x8] sm:$0xff]
        %v455 = vld [vmem:[%s4] sm:$0x3]
        %v457 = vlaneseq
        %v458 = vshrl.u32 %v457, 7
        %v459 = vsub.s32 0, %v458
        %v460 = vrot.slane %v455, %v459
        %v461 = vlaneseq
        %v462 = vshrl.u32 %v461, 7
        %v463 = vsub.s32 1, %v462
        %v464 = vrot.slane %v455, %v463
        %v469 = vunpack.c.l.b16 %v453
        %v470 = vunpack.c.h.b16 %v453
        %v471 = vunpack.c.l.b16 %v454
        %v472 = vunpack.c.h.b16 %v454
        %v473 = vpack.c.b16 %v471, %v469
        %v474 = vpack.c.b16 %v472, %v470
        %vm477 = vcmask 130048
        %v479 = vsel %vm477, %v421, 0
        %v482 = vsel %vm477, %v422, 0
        %v485 = vsel %vm477, %v423, 0
        %v488 = vsel %vm477, %v424, 0
        %v491 = vsel %vm477, %v425, 0
        %v494 = vsel %vm477, %v426, 0
        %v497 = vsel %vm477, %v427, 0
        %v500 = vsel %vm477, %v428, 0
        %v503 = vsel %vm477, %v429, 0
        %v506 = vsel %vm477, %v430, 0
        %v509 = vsel %vm477, %v431, 0
        %v512 = vsel %vm477, %v432, 0
        %v515 = vsel %vm477, %v433, 0
        %v518 = vsel %vm477, %v434, 0
        %v521 = vsel %vm477, %v435, 0
        %v524 = vsel %vm477, %v436, 0
        %v527 = vsel %vm477, %v437, 0
        %v530 = vsel %vm477, %v438, 0
        %v533 = vsel %vm477, %v439, 0
        %v536 = vsel %vm477, %v440, 0
        %v539 = vsel %vm477, %v441, 0
        %v542 = vsel %vm477, %v442, 0
        %v545 = vsel %vm477, %v443, 0
        %v548 = vsel %vm477, %v444, 0
        %v551 = vsel %vm477, %v445, 0
        %v554 = vsel %vm477, %v446, 0
        %v557 = vsel %vm477, %v447, 0
        %v560 = vsel %vm477, %v448, 0
        %v563 = vsel %vm477, %v449, 0
        %v566 = vsel %vm477, %v450, 0
        %v569 = vsel %vm477, %v451, 0
        %v572 = vsel %vm477, %v452, 0
        %574 = vmatprep.subr.bf16.mxu0 0
        %575 = vmatpush1.bf16.msra.mxu0 0
        %576 = vmatprep.subr.bf16.mxu0 0
        %577 = vmatpush1.bf16.msra.mxu0 0
        %578 = vmatprep.subr.bf16.mxu0 0
        %579 = vmatpush1.bf16.msra.mxu0 0
        %580 = vmatprep.subr.bf16.mxu0 0
        %581 = vmatpush1.bf16.msra.mxu0 0
        %582 = vmatprep.subr.bf16.mxu0 0
        %583 = vmatpush1.bf16.msra.mxu0 0
        %584 = vmatprep.subr.bf16.mxu0 0
        %585 = vmatpush1.bf16.msra.mxu0 0
        %586 = vmatprep.subr.bf16.mxu0 0
        %587 = vmatpush1.bf16.msra.mxu0 0
        %588 = vmatprep.subr.bf16.mxu0 %v474
        %589 = vmatpush1.bf16.msra.mxu0 %v473
        %590 = vmatprep.subr.bf16.mxu0 0
        %591 = vmatpush2.bf16.msra.mxu0 0
        %592 = vmatprep.subr.bf16.mxu0 0
        %593 = vmatpush2.bf16.msra.mxu0 0
        %594 = vmatprep.subr.bf16.mxu0 0
        %595 = vmatpush2.bf16.msra.mxu0 0
        %596 = vmatprep.subr.bf16.mxu0 0
        %597 = vmatpush2.bf16.msra.mxu0 0
        %598 = vmatprep.subr.bf16.mxu0 0
        %599 = vmatpush2.bf16.msra.mxu0 0
        %600 = vmatprep.subr.bf16.mxu0 0
        %601 = vmatpush2.bf16.msra.mxu0 0
        %602 = vmatprep.subr.bf16.mxu0 0
        %603 = vmatpush2.bf16.msra.mxu0 0
        %604 = vmatprep.subr.bf16.mxu0 0
        %605 = vmatpush2.bf16.msra.mxu0 0
        %606 = vmatprep.mubr.bf16.mxu0 0
        %607 = vmatmul.mubr.bf16.gmra.mxu0 %v479
        %v608 = vpop.f32.mrf.mxu0
        %v609 = vadd.f32 %v460, %v608
        %v610 = vpop.f32.mrf.mxu0
        %v611 = vadd.f32 %v464, %v610
        %v612 = vpop.f32.mrf.mxu0
        %v613 = vadd.f32 %v460, %v612
        %v614 = vpop.f32.mrf.mxu0
        %v615 = vadd.f32 %v464, %v614
        %616 = vmatprep.mubr.bf16.mxu0 0
        %617 = vmatmul.mubr.bf16.gmra.mxu0 %v482
        %v618 = vpop.f32.mrf.mxu0
        %v619 = vadd.f32 %v460, %v618
        %v620 = vpop.f32.mrf.mxu0
        %v621 = vadd.f32 %v464, %v620
        %v622 = vpop.f32.mrf.mxu0
        %v623 = vadd.f32 %v460, %v622
        %v624 = vpop.f32.mrf.mxu0
        %v625 = vadd.f32 %v464, %v624
        %626 = vmatprep.mubr.bf16.mxu0 0
        %627 = vmatmul.mubr.bf16.gmra.mxu0 %v485
        %v628 = vpop.f32.mrf.mxu0
        %v629 = vadd.f32 %v460, %v628
        %v630 = vpop.f32.mrf.mxu0
        %v631 = vadd.f32 %v464, %v630
        %v632 = vpop.f32.mrf.mxu0
        %v633 = vadd.f32 %v460, %v632
        %v634 = vpop.f32.mrf.mxu0
        %v635 = vadd.f32 %v464, %v634
        %636 = vmatprep.mubr.bf16.mxu0 0
        %637 = vmatmul.mubr.bf16.gmra.mxu0 %v488
        %v638 = vpop.f32.mrf.mxu0
        %v639 = vadd.f32 %v460, %v638
        %v640 = vpop.f32.mrf.mxu0
        %v641 = vadd.f32 %v464, %v640
        %v642 = vpop.f32.mrf.mxu0
        %v643 = vadd.f32 %v460, %v642
        %v644 = vpop.f32.mrf.mxu0
        %v645 = vadd.f32 %v464, %v644
        %646 = vmatprep.mubr.bf16.mxu0 0
        %647 = vmatmul.mubr.bf16.gmra.mxu0 %v491
        %v648 = vpop.f32.mrf.mxu0
        %v649 = vadd.f32 %v460, %v648
        %v650 = vpop.f32.mrf.mxu0
        %v651 = vadd.f32 %v464, %v650
        %v652 = vpop.f32.mrf.mxu0
        %v653 = vadd.f32 %v460, %v652
        %v654 = vpop.f32.mrf.mxu0
        %v655 = vadd.f32 %v464, %v654
        %656 = vmatprep.mubr.bf16.mxu0 0
        %657 = vmatmul.mubr.bf16.gmra.mxu0 %v494
        %v658 = vpop.f32.mrf.mxu0
        %v659 = vadd.f32 %v460, %v658
        %v660 = vpop.f32.mrf.mxu0
        %v661 = vadd.f32 %v464, %v660
        %v662 = vpop.f32.mrf.mxu0
        %v663 = vadd.f32 %v460, %v662
        %v664 = vpop.f32.mrf.mxu0
        %v665 = vadd.f32 %v464, %v664
        %666 = vmatprep.mubr.bf16.mxu0 0
        %667 = vmatmul.mubr.bf16.gmra.mxu0 %v497
        %v668 = vpop.f32.mrf.mxu0
        %v669 = vadd.f32 %v460, %v668
        %v670 = vpop.f32.mrf.mxu0
        %v671 = vadd.f32 %v464, %v670
        %v672 = vpop.f32.mrf.mxu0
        %v673 = vadd.f32 %v460, %v672
        %v674 = vpop.f32.mrf.mxu0
        %v675 = vadd.f32 %v464, %v674
        %676 = vmatprep.mubr.bf16.mxu0 0
        %677 = vmatmul.mubr.bf16.gmra.mxu0 %v500
        %v678 = vpop.f32.mrf.mxu0
        %v679 = vadd.f32 %v460, %v678
        %v680 = vpop.f32.mrf.mxu0
        %v681 = vadd.f32 %v464, %v680
        %v682 = vpop.f32.mrf.mxu0
        %v683 = vadd.f32 %v460, %v682
        %v684 = vpop.f32.mrf.mxu0
        %v685 = vadd.f32 %v464, %v684
        %686 = vmatprep.mubr.bf16.mxu0 0
        %687 = vmatmul.mubr.bf16.gmra.mxu0 %v503
        %v688 = vpop.f32.mrf.mxu0
        %v689 = vadd.f32 %v460, %v688
        %v690 = vpop.f32.mrf.mxu0
        %v691 = vadd.f32 %v464, %v690
        %v692 = vpop.f32.mrf.mxu0
        %v693 = vadd.f32 %v460, %v692
        %v694 = vpop.f32.mrf.mxu0
        %v695 = vadd.f32 %v464, %v694
        %696 = vmatprep.mubr.bf16.mxu0 0
        %697 = vmatmul.mubr.bf16.gmra.mxu0 %v506
        %v698 = vpop.f32.mrf.mxu0
        %v699 = vadd.f32 %v460, %v698
        %v700 = vpop.f32.mrf.mxu0
        %v701 = vadd.f32 %v464, %v700
        %v702 = vpop.f32.mrf.mxu0
        %v703 = vadd.f32 %v460, %v702
        %v704 = vpop.f32.mrf.mxu0
        %v705 = vadd.f32 %v464, %v704
        %706 = vmatprep.mubr.bf16.mxu0 0
        %707 = vmatmul.mubr.bf16.gmra.mxu0 %v509
        %v708 = vpop.f32.mrf.mxu0
        %v709 = vadd.f32 %v460, %v708
        %v710 = vpop.f32.mrf.mxu0
        %v711 = vadd.f32 %v464, %v710
        %v712 = vpop.f32.mrf.mxu0
        %v713 = vadd.f32 %v460, %v712
        %v714 = vpop.f32.mrf.mxu0
        %v715 = vadd.f32 %v464, %v714
        %716 = vmatprep.mubr.bf16.mxu0 0
        %717 = vmatmul.mubr.bf16.gmra.mxu0 %v512
        %v718 = vpop.f32.mrf.mxu0
        %v719 = vadd.f32 %v460, %v718
        %v720 = vpop.f32.mrf.mxu0
        %v721 = vadd.f32 %v464, %v720
        %v722 = vpop.f32.mrf.mxu0
        %v723 = vadd.f32 %v460, %v722
        %v724 = vpop.f32.mrf.mxu0
        %v725 = vadd.f32 %v464, %v724
        %726 = vmatprep.mubr.bf16.mxu0 0
        %727 = vmatmul.mubr.bf16.gmra.mxu0 %v515
        %v728 = vpop.f32.mrf.mxu0
        %v729 = vadd.f32 %v460, %v728
        %v730 = vpop.f32.mrf.mxu0
        %v731 = vadd.f32 %v464, %v730
        %v732 = vpop.f32.mrf.mxu0
        %v733 = vadd.f32 %v460, %v732
        %v734 = vpop.f32.mrf.mxu0
        %v735 = vadd.f32 %v464, %v734
        %736 = vmatprep.mubr.bf16.mxu0 0
        %737 = vmatmul.mubr.bf16.gmra.mxu0 %v518
        %v738 = vpop.f32.mrf.mxu0
        %v739 = vadd.f32 %v460, %v738
        %v740 = vpop.f32.mrf.mxu0
        %v741 = vadd.f32 %v464, %v740
        %v742 = vpop.f32.mrf.mxu0
        %v743 = vadd.f32 %v460, %v742
        %v744 = vpop.f32.mrf.mxu0
        %v745 = vadd.f32 %v464, %v744
        %746 = vmatprep.mubr.bf16.mxu0 0
        %747 = vmatmul.mubr.bf16.gmra.mxu0 %v521
        %v748 = vpop.f32.mrf.mxu0
        %v749 = vadd.f32 %v460, %v748
        %v750 = vpop.f32.mrf.mxu0
        %v751 = vadd.f32 %v464, %v750
        %v752 = vpop.f32.mrf.mxu0
        %v753 = vadd.f32 %v460, %v752
        %v754 = vpop.f32.mrf.mxu0
        %v755 = vadd.f32 %v464, %v754
        %756 = vmatprep.mubr.bf16.mxu0 0
        %757 = vmatmul.mubr.bf16.gmra.mxu0 %v524
        %v758 = vpop.f32.mrf.mxu0
        %v759 = vadd.f32 %v460, %v758
        %v760 = vpop.f32.mrf.mxu0
        %v761 = vadd.f32 %v464, %v760
        %v762 = vpop.f32.mrf.mxu0
        %v763 = vadd.f32 %v460, %v762
        %v764 = vpop.f32.mrf.mxu0
        %v765 = vadd.f32 %v464, %v764
        %766 = vmatprep.mubr.bf16.mxu0 0
        %767 = vmatmul.mubr.bf16.gmra.mxu0 %v527
        %v768 = vpop.f32.mrf.mxu0
        %v769 = vadd.f32 %v460, %v768
        %v770 = vpop.f32.mrf.mxu0
        %v771 = vadd.f32 %v464, %v770
        %v772 = vpop.f32.mrf.mxu0
        %v773 = vadd.f32 %v460, %v772
        %v774 = vpop.f32.mrf.mxu0
        %v775 = vadd.f32 %v464, %v774
        %776 = vmatprep.mubr.bf16.mxu0 0
        %777 = vmatmul.mubr.bf16.gmra.mxu0 %v530
        %v778 = vpop.f32.mrf.mxu0
        %v779 = vadd.f32 %v460, %v778
        %v780 = vpop.f32.mrf.mxu0
        %v781 = vadd.f32 %v464, %v780
        %v782 = vpop.f32.mrf.mxu0
        %v783 = vadd.f32 %v460, %v782
        %v784 = vpop.f32.mrf.mxu0
        %v785 = vadd.f32 %v464, %v784
        %786 = vmatprep.mubr.bf16.mxu0 0
        %787 = vmatmul.mubr.bf16.gmra.mxu0 %v533
        %v788 = vpop.f32.mrf.mxu0
        %v789 = vadd.f32 %v460, %v788
        %v790 = vpop.f32.mrf.mxu0
        %v791 = vadd.f32 %v464, %v790
        %v792 = vpop.f32.mrf.mxu0
        %v793 = vadd.f32 %v460, %v792
        %v794 = vpop.f32.mrf.mxu0
        %v795 = vadd.f32 %v464, %v794
        %796 = vmatprep.mubr.bf16.mxu0 0
        %797 = vmatmul.mubr.bf16.gmra.mxu0 %v536
        %v798 = vpop.f32.mrf.mxu0
        %v799 = vadd.f32 %v460, %v798
        %v800 = vpop.f32.mrf.mxu0
        %v801 = vadd.f32 %v464, %v800
        %v802 = vpop.f32.mrf.mxu0
        %v803 = vadd.f32 %v460, %v802
        %v804 = vpop.f32.mrf.mxu0
        %v805 = vadd.f32 %v464, %v804
        %806 = vmatprep.mubr.bf16.mxu0 0
        %807 = vmatmul.mubr.bf16.gmra.mxu0 %v539
        %v808 = vpop.f32.mrf.mxu0
        %v809 = vadd.f32 %v460, %v808
        %v810 = vpop.f32.mrf.mxu0
        %v811 = vadd.f32 %v464, %v810
        %v812 = vpop.f32.mrf.mxu0
        %v813 = vadd.f32 %v460, %v812
        %v814 = vpop.f32.mrf.mxu0
        %v815 = vadd.f32 %v464, %v814
        %816 = vmatprep.mubr.bf16.mxu0 0
        %817 = vmatmul.mubr.bf16.gmra.mxu0 %v542
        %v818 = vpop.f32.mrf.mxu0
        %v819 = vadd.f32 %v460, %v818
        %v820 = vpop.f32.mrf.mxu0
        %v821 = vadd.f32 %v464, %v820
        %v822 = vpop.f32.mrf.mxu0
        %v823 = vadd.f32 %v460, %v822
        %v824 = vpop.f32.mrf.mxu0
        %v825 = vadd.f32 %v464, %v824
        %826 = vmatprep.mubr.bf16.mxu0 0
        %827 = vmatmul.mubr.bf16.gmra.mxu0 %v545
        %v828 = vpop.f32.mrf.mxu0
        %v829 = vadd.f32 %v460, %v828
        %v830 = vpop.f32.mrf.mxu0
        %v831 = vadd.f32 %v464, %v830
        %v832 = vpop.f32.mrf.mxu0
        %v833 = vadd.f32 %v460, %v832
        %v834 = vpop.f32.mrf.mxu0
        %v835 = vadd.f32 %v464, %v834
        %836 = vmatprep.mubr.bf16.mxu0 0
        %837 = vmatmul.mubr.bf16.gmra.mxu0 %v548
        %v838 = vpop.f32.mrf.mxu0
        %v839 = vadd.f32 %v460, %v838
        %v840 = vpop.f32.mrf.mxu0
        %v841 = vadd.f32 %v464, %v840
        %v842 = vpop.f32.mrf.mxu0
        %v843 = vadd.f32 %v460, %v842
        %v844 = vpop.f32.mrf.mxu0
        %v845 = vadd.f32 %v464, %v844
        %846 = vmatprep.mubr.bf16.mxu0 0
        %847 = vmatmul.mubr.bf16.gmra.mxu0 %v551
        %v848 = vpop.f32.mrf.mxu0
        %v849 = vadd.f32 %v460, %v848
        %v850 = vpop.f32.mrf.mxu0
        %v851 = vadd.f32 %v464, %v850
        %v852 = vpop.f32.mrf.mxu0
        %v853 = vadd.f32 %v460, %v852
        %v854 = vpop.f32.mrf.mxu0
        %v855 = vadd.f32 %v464, %v854
        %856 = vmatprep.mubr.bf16.mxu0 0
        %857 = vmatmul.mubr.bf16.gmra.mxu0 %v554
        %v858 = vpop.f32.mrf.mxu0
        %v859 = vadd.f32 %v460, %v858
        %v860 = vpop.f32.mrf.mxu0
        %v861 = vadd.f32 %v464, %v860
        %v862 = vpop.f32.mrf.mxu0
        %v863 = vadd.f32 %v460, %v862
        %v864 = vpop.f32.mrf.mxu0
        %v865 = vadd.f32 %v464, %v864
        %866 = vmatprep.mubr.bf16.mxu0 0
        %867 = vmatmul.mubr.bf16.gmra.mxu0 %v557
        %v868 = vpop.f32.mrf.mxu0
        %v869 = vadd.f32 %v460, %v868
        %v870 = vpop.f32.mrf.mxu0
        %v871 = vadd.f32 %v464, %v870
        %v872 = vpop.f32.mrf.mxu0
        %v873 = vadd.f32 %v460, %v872
        %v874 = vpop.f32.mrf.mxu0
        %v875 = vadd.f32 %v464, %v874
        %876 = vmatprep.mubr.bf16.mxu0 0
        %877 = vmatmul.mubr.bf16.gmra.mxu0 %v560
        %v878 = vpop.f32.mrf.mxu0
        %v879 = vadd.f32 %v460, %v878
        %v880 = vpop.f32.mrf.mxu0
        %v881 = vadd.f32 %v464, %v880
        %v882 = vpop.f32.mrf.mxu0
        %v883 = vadd.f32 %v460, %v882
        %v884 = vpop.f32.mrf.mxu0
        %v885 = vadd.f32 %v464, %v884
        %886 = vmatprep.mubr.bf16.mxu0 0
        %887 = vmatmul.mubr.bf16.gmra.mxu0 %v563
        %v888 = vpop.f32.mrf.mxu0
        %v889 = vadd.f32 %v460, %v888
        %v890 = vpop.f32.mrf.mxu0
        %v891 = vadd.f32 %v464, %v890
        %v892 = vpop.f32.mrf.mxu0
        %v893 = vadd.f32 %v460, %v892
        %v894 = vpop.f32.mrf.mxu0
        %v895 = vadd.f32 %v464, %v894
        %896 = vmatprep.mubr.bf16.mxu0 0
        %897 = vmatmul.mubr.bf16.gmra.mxu0 %v566
        %v898 = vpop.f32.mrf.mxu0
        %v899 = vadd.f32 %v460, %v898
        %v900 = vpop.f32.mrf.mxu0
        %v901 = vadd.f32 %v464, %v900
        %v902 = vpop.f32.mrf.mxu0
        %v903 = vadd.f32 %v460, %v902
        %v904 = vpop.f32.mrf.mxu0
        %v905 = vadd.f32 %v464, %v904
        %906 = vmatprep.mubr.bf16.mxu0 0
        %907 = vmatmul.mubr.bf16.gmra.mxu0 %v569
        %v908 = vpop.f32.mrf.mxu0
        %v909 = vadd.f32 %v460, %v908
        %v910 = vpop.f32.mrf.mxu0
        %v911 = vadd.f32 %v464, %v910
        %v912 = vpop.f32.mrf.mxu0
        %v913 = vadd.f32 %v460, %v912
        %v914 = vpop.f32.mrf.mxu0
        %v915 = vadd.f32 %v464, %v914
        %916 = vmatprep.mubr.bf16.mxu0 0
        %917 = vmatmul.mubr.bf16.gmra.mxu0 %v572
        %v918 = vpop.f32.mrf.mxu0
        %v919 = vadd.f32 %v460, %v918
        %v920 = vpop.f32.mrf.mxu0
        %v921 = vadd.f32 %v464, %v920
        %v922 = vpop.f32.mrf.mxu0
        %v923 = vadd.f32 %v460, %v922
        %v924 = vpop.f32.mrf.mxu0
        %v925 = vadd.f32 %v464, %v924
        %926 = vdwg.mxu0
        %v927 = vmax.f32 %v609, 0.0
        %v928 = vmax.f32 %v611, 0.0
        %v929 = vmax.f32 %v613, 0.0
        %v930 = vmax.f32 %v615, 0.0
        %v931 = vmax.f32 %v619, 0.0
        %v932 = vmax.f32 %v621, 0.0
        %v933 = vmax.f32 %v623, 0.0
        %v934 = vmax.f32 %v625, 0.0
        %v935 = vmax.f32 %v629, 0.0
        %v936 = vmax.f32 %v631, 0.0
        %v937 = vmax.f32 %v633, 0.0
        %v938 = vmax.f32 %v635, 0.0
        %v939 = vmax.f32 %v639, 0.0
        %v940 = vmax.f32 %v641, 0.0
        %v941 = vmax.f32 %v643, 0.0
        %v942 = vmax.f32 %v645, 0.0
        %v943 = vmax.f32 %v649, 0.0
        %v944 = vmax.f32 %v651, 0.0
        %v945 = vmax.f32 %v653, 0.0
        %v946 = vmax.f32 %v655, 0.0
        %v947 = vmax.f32 %v659, 0.0
        %v948 = vmax.f32 %v661, 0.0
        %v949 = vmax.f32 %v663, 0.0
        %v950 = vmax.f32 %v665, 0.0
        %v951 = vmax.f32 %v669, 0.0
        %v952 = vmax.f32 %v671, 0.0
        %v953 = vmax.f32 %v673, 0.0
        %v954 = vmax.f32 %v675, 0.0
        %v955 = vmax.f32 %v679, 0.0
        %v956 = vmax.f32 %v681, 0.0
        %v957 = vmax.f32 %v683, 0.0
        %v958 = vmax.f32 %v685, 0.0
        %v959 = vmax.f32 %v689, 0.0
        %v960 = vmax.f32 %v691, 0.0
        %v961 = vmax.f32 %v693, 0.0
        %v962 = vmax.f32 %v695, 0.0
        %v963 = vmax.f32 %v699, 0.0
        %v964 = vmax.f32 %v701, 0.0
        %v965 = vmax.f32 %v703, 0.0
        %v966 = vmax.f32 %v705, 0.0
        %v967 = vmax.f32 %v709, 0.0
        %v968 = vmax.f32 %v711, 0.0
        %v969 = vmax.f32 %v713, 0.0
        %v970 = vmax.f32 %v715, 0.0
        %v971 = vmax.f32 %v719, 0.0
        %v972 = vmax.f32 %v721, 0.0
        %v973 = vmax.f32 %v723, 0.0
        %v974 = vmax.f32 %v725, 0.0
        %v975 = vmax.f32 %v729, 0.0
        %v976 = vmax.f32 %v731, 0.0
        %v977 = vmax.f32 %v733, 0.0
        %v978 = vmax.f32 %v735, 0.0
        %v979 = vmax.f32 %v739, 0.0
        %v980 = vmax.f32 %v741, 0.0
        %v981 = vmax.f32 %v743, 0.0
        %v982 = vmax.f32 %v745, 0.0
        %v983 = vmax.f32 %v749, 0.0
        %v984 = vmax.f32 %v751, 0.0
        %v985 = vmax.f32 %v753, 0.0
        %v986 = vmax.f32 %v755, 0.0
        %v987 = vmax.f32 %v759, 0.0
        %v988 = vmax.f32 %v761, 0.0
        %v989 = vmax.f32 %v763, 0.0
        %v990 = vmax.f32 %v765, 0.0
        %v991 = vmax.f32 %v769, 0.0
        %v992 = vmax.f32 %v771, 0.0
        %v993 = vmax.f32 %v773, 0.0
        %v994 = vmax.f32 %v775, 0.0
        %v995 = vmax.f32 %v779, 0.0
        %v996 = vmax.f32 %v781, 0.0
        %v997 = vmax.f32 %v783, 0.0
        %v998 = vmax.f32 %v785, 0.0
        %v999 = vmax.f32 %v789, 0.0
        %v1000 = vmax.f32 %v791, 0.0
        %v1001 = vmax.f32 %v793, 0.0
        %v1002 = vmax.f32 %v795, 0.0
        %v1003 = vmax.f32 %v799, 0.0
        %v1004 = vmax.f32 %v801, 0.0
        %v1005 = vmax.f32 %v803, 0.0
        %v1006 = vmax.f32 %v805, 0.0
        %v1007 = vmax.f32 %v809, 0.0
        %v1008 = vmax.f32 %v811, 0.0
        %v1009 = vmax.f32 %v813, 0.0
        %v1010 = vmax.f32 %v815, 0.0
        %v1011 = vmax.f32 %v819, 0.0
        %v1012 = vmax.f32 %v821, 0.0
        %v1013 = vmax.f32 %v823, 0.0
        %v1014 = vmax.f32 %v825, 0.0
        %v1015 = vmax.f32 %v829, 0.0
        %v1016 = vmax.f32 %v831, 0.0
        %v1017 = vmax.f32 %v833, 0.0
        %v1018 = vmax.f32 %v835, 0.0
        %v1019 = vmax.f32 %v839, 0.0
        %v1020 = vmax.f32 %v841, 0.0
        %v1021 = vmax.f32 %v843, 0.0
        %v1022 = vmax.f32 %v845, 0.0
        %v1023 = vmax.f32 %v849, 0.0
        %v1024 = vmax.f32 %v851, 0.0
        %v1025 = vmax.f32 %v853, 0.0
        %v1026 = vmax.f32 %v855, 0.0
        %v1027 = vmax.f32 %v859, 0.0
        %v1028 = vmax.f32 %v861, 0.0
        %v1029 = vmax.f32 %v863, 0.0
        %v1030 = vmax.f32 %v865, 0.0
        %v1031 = vmax.f32 %v869, 0.0
        %v1032 = vmax.f32 %v871, 0.0
        %v1033 = vmax.f32 %v873, 0.0
        %v1034 = vmax.f32 %v875, 0.0
        %v1035 = vmax.f32 %v879, 0.0
        %v1036 = vmax.f32 %v881, 0.0
        %v1037 = vmax.f32 %v883, 0.0
        %v1038 = vmax.f32 %v885, 0.0
        %v1039 = vmax.f32 %v889, 0.0
        %v1040 = vmax.f32 %v891, 0.0
        %v1041 = vmax.f32 %v893, 0.0
        %v1042 = vmax.f32 %v895, 0.0
        %v1043 = vmax.f32 %v899, 0.0
        %v1044 = vmax.f32 %v901, 0.0
        %v1045 = vmax.f32 %v903, 0.0
        %v1046 = vmax.f32 %v905, 0.0
        %v1047 = vmax.f32 %v909, 0.0
        %v1048 = vmax.f32 %v911, 0.0
        %v1049 = vmax.f32 %v913, 0.0
        %v1050 = vmax.f32 %v915, 0.0
        %v1051 = vmax.f32 %v919, 0.0
        %v1052 = vmax.f32 %v921, 0.0
        %v1053 = vmax.f32 %v923, 0.0
        %v1054 = vmax.f32 %v925, 0.0
        %v1055 = vpack.c.bf16 %v929, %v927
        %v1056 = vpack.c.bf16 %v930, %v928
        %v1057 = vpack.c.bf16 %v933, %v931
        %v1058 = vpack.c.bf16 %v934, %v932
        %v1059 = vpack.c.bf16 %v937, %v935
        %v1060 = vpack.c.bf16 %v938, %v936
        %v1061 = vpack.c.bf16 %v941, %v939
        %v1062 = vpack.c.bf16 %v942, %v940
        %v1063 = vpack.c.bf16 %v945, %v943
        %v1064 = vpack.c.bf16 %v946, %v944
        %v1065 = vpack.c.bf16 %v949, %v947
        %v1066 = vpack.c.bf16 %v950, %v948
        %v1067 = vpack.c.bf16 %v953, %v951
        %v1068 = vpack.c.bf16 %v954, %v952
        %v1069 = vpack.c.bf16 %v957, %v955
        %v1070 = vpack.c.bf16 %v958, %v956
        %v1071 = vpack.c.bf16 %v961, %v959
        %v1072 = vpack.c.bf16 %v962, %v960
        %v1073 = vpack.c.bf16 %v965, %v963
        %v1074 = vpack.c.bf16 %v966, %v964
        %v1075 = vpack.c.bf16 %v969, %v967
        %v1076 = vpack.c.bf16 %v970, %v968
        %v1077 = vpack.c.bf16 %v973, %v971
        %v1078 = vpack.c.bf16 %v974, %v972
        %v1079 = vpack.c.bf16 %v977, %v975
        %v1080 = vpack.c.bf16 %v978, %v976
        %v1081 = vpack.c.bf16 %v981, %v979
        %v1082 = vpack.c.bf16 %v982, %v980
        %v1083 = vpack.c.bf16 %v985, %v983
        %v1084 = vpack.c.bf16 %v986, %v984
        %v1085 = vpack.c.bf16 %v989, %v987
        %v1086 = vpack.c.bf16 %v990, %v988
        %v1087 = vpack.c.bf16 %v993, %v991
        %v1088 = vpack.c.bf16 %v994, %v992
        %v1089 = vpack.c.bf16 %v997, %v995
        %v1090 = vpack.c.bf16 %v998, %v996
        %v1091 = vpack.c.bf16 %v1001, %v999
        %v1092 = vpack.c.bf16 %v1002, %v1000
        %v1093 = vpack.c.bf16 %v1005, %v1003
        %v1094 = vpack.c.bf16 %v1006, %v1004
        %v1095 = vpack.c.bf16 %v1009, %v1007
        %v1096 = vpack.c.bf16 %v1010, %v1008
        %v1097 = vpack.c.bf16 %v1013, %v1011
        %v1098 = vpack.c.bf16 %v1014, %v1012
        %v1099 = vpack.c.bf16 %v1017, %v1015
        %v1100 = vpack.c.bf16 %v1018, %v1016
        %v1101 = vpack.c.bf16 %v1021, %v1019
        %v1102 = vpack.c.bf16 %v1022, %v1020
        %v1103 = vpack.c.bf16 %v1025, %v1023
        %v1104 = vpack.c.bf16 %v1026, %v1024
        %v1105 = vpack.c.bf16 %v1029, %v1027
        %v1106 = vpack.c.bf16 %v1030, %v1028
        %v1107 = vpack.c.bf16 %v1033, %v1031
        %v1108 = vpack.c.bf16 %v1034, %v1032
        %v1109 = vpack.c.bf16 %v1037, %v1035
        %v1110 = vpack.c.bf16 %v1038, %v1036
        %v1111 = vpack.c.bf16 %v1041, %v1039
        %v1112 = vpack.c.bf16 %v1042, %v1040
        %v1113 = vpack.c.bf16 %v1045, %v1043
        %v1114 = vpack.c.bf16 %v1046, %v1044
        %v1115 = vpack.c.bf16 %v1049, %v1047
        %v1116 = vpack.c.bf16 %v1050, %v1048
        %v1117 = vpack.c.bf16 %v1053, %v1051
        %v1118 = vpack.c.bf16 %v1054, %v1052
        %v1119 = vld [vmem:[%s5] sm:$0xff]
        %v1120 = vld [vmem:[%s5 + $0x8] sm:$0xff]
        %v1121 = vld [vmem:[%s5 + $0x10] sm:$0xff]
        %v1122 = vld [vmem:[%s5 + $0x18] sm:$0xff]
        %v1123 = vld [vmem:[%s5 + $0x20] sm:$0xff]
        %v1124 = vld [vmem:[%s5 + $0x28] sm:$0xff]
        %v1125 = vld [vmem:[%s5 + $0x30] sm:$0xff]
        %v1126 = vld [vmem:[%s5 + $0x38] sm:$0xff]
        %v1127 = vld [vmem:[%s5 + $0x40] sm:$0xff]
        %v1128 = vld [vmem:[%s5 + $0x48] sm:$0xff]
        %v1129 = vld [vmem:[%s5 + $0x50] sm:$0xff]
        %v1130 = vld [vmem:[%s5 + $0x58] sm:$0xff]
        %v1131 = vld [vmem:[%s5 + $0x60] sm:$0xff]
        %v1132 = vld [vmem:[%s5 + $0x68] sm:$0xff]
        %v1133 = vld [vmem:[%s5 + $0x70] sm:$0xff]
        %v1134 = vld [vmem:[%s5 + $0x78] sm:$0xff]
        %v1135 = vld [vmem:[%s5 + $0x80] sm:$0xff]
        %v1136 = vld [vmem:[%s5 + $0x88] sm:$0xff]
        %v1137 = vld [vmem:[%s5 + $0x90] sm:$0xff]
        %v1138 = vld [vmem:[%s5 + $0x98] sm:$0xff]
        %v1139 = vld [vmem:[%s5 + $0xa0] sm:$0xff]
        %v1140 = vld [vmem:[%s5 + $0xa8] sm:$0xff]
        %v1141 = vld [vmem:[%s5 + $0xb0] sm:$0xff]
        %v1142 = vld [vmem:[%s5 + $0xb8] sm:$0xff]
        %v1143 = vld [vmem:[%s5 + $0xc0] sm:$0xff]
        %v1144 = vld [vmem:[%s5 + $0xc8] sm:$0xff]
        %v1145 = vld [vmem:[%s5 + $0xd0] sm:$0xff]
        %v1146 = vld [vmem:[%s5 + $0xd8] sm:$0xff]
        %v1147 = vld [vmem:[%s5 + $0xe0] sm:$0xff]
        %v1148 = vld [vmem:[%s5 + $0xe8] sm:$0xff]
        %v1149 = vld [vmem:[%s5 + $0xf0] sm:$0xff]
        %v1150 = vld [vmem:[%s5 + $0xf8] sm:$0xff]
        %v1151 = vld [vmem:[%s6] sm:$0x3]
        %v1153 = vlaneseq
        %v1154 = vshrl.u32 %v1153, 7
        %v1155 = vsub.s32 0, %v1154
        %v1156 = vrot.slane %v1151, %v1155
        %v1157 = vlaneseq
        %v1158 = vshrl.u32 %v1157, 7
        %v1159 = vsub.s32 1, %v1158
        %v1160 = vrot.slane %v1151, %v1159
        %v1195 = vunpack.c.l.b16 %v1119
        %v1196 = vunpack.c.h.b16 %v1119
        %v1197 = vunpack.c.l.b16 %v1120
        %v1198 = vunpack.c.h.b16 %v1120
        %v1199 = vunpack.c.l.b16 %v1121
        %v1200 = vunpack.c.h.b16 %v1121
        %v1201 = vunpack.c.l.b16 %v1122
        %v1202 = vunpack.c.h.b16 %v1122
        %v1203 = vunpack.c.l.b16 %v1123
        %v1204 = vunpack.c.h.b16 %v1123
        %v1205 = vunpack.c.l.b16 %v1124
        %v1206 = vunpack.c.h.b16 %v1124
        %v1207 = vunpack.c.l.b16 %v1125
        %v1208 = vunpack.c.h.b16 %v1125
        %v1209 = vunpack.c.l.b16 %v1126
        %v1210 = vunpack.c.h.b16 %v1126
        %v1211 = vunpack.c.l.b16 %v1127
        %v1212 = vunpack.c.h.b16 %v1127
        %v1213 = vunpack.c.l.b16 %v1128
        %v1214 = vunpack.c.h.b16 %v1128
        %v1215 = vunpack.c.l.b16 %v1129
        %v1216 = vunpack.c.h.b16 %v1129
        %v1217 = vunpack.c.l.b16 %v1130
        %v1218 = vunpack.c.h.b16 %v1130
        %v1219 = vunpack.c.l.b16 %v1131
        %v1220 = vunpack.c.h.b16 %v1131
        %v1221 = vunpack.c.l.b16 %v1132
        %v1222 = vunpack.c.h.b16 %v1132
        %v1223 = vunpack.c.l.b16 %v1133
        %v1224 = vunpack.c.h.b16 %v1133
        %v1225 = vunpack.c.l.b16 %v1134
        %v1226 = vunpack.c.h.b16 %v1134
        %v1227 = vunpack.c.l.b16 %v1135
        %v1228 = vunpack.c.h.b16 %v1135
        %v1229 = vunpack.c.l.b16 %v1136
        %v1230 = vunpack.c.h.b16 %v1136
        %v1231 = vunpack.c.l.b16 %v1137
        %v1232 = vunpack.c.h.b16 %v1137
        %v1233 = vunpack.c.l.b16 %v1138
        %v1234 = vunpack.c.h.b16 %v1138
        %v1235 = vunpack.c.l.b16 %v1139
        %v1236 = vunpack.c.h.b16 %v1139
        %v1237 = vunpack.c.l.b16 %v1140
        %v1238 = vunpack.c.h.b16 %v1140
        %v1239 = vunpack.c.l.b16 %v1141
        %v1240 = vunpack.c.h.b16 %v1141
        %v1241 = vunpack.c.l.b16 %v1142
        %v1242 = vunpack.c.h.b16 %v1142
        %v1243 = vunpack.c.l.b16 %v1143
        %v1244 = vunpack.c.h.b16 %v1143
        %v1245 = vunpack.c.l.b16 %v1144
        %v1246 = vunpack.c.h.b16 %v1144
        %v1247 = vunpack.c.l.b16 %v1145
        %v1248 = vunpack.c.h.b16 %v1145
        %v1249 = vunpack.c.l.b16 %v1146
        %v1250 = vunpack.c.h.b16 %v1146
        %v1251 = vunpack.c.l.b16 %v1147
        %v1252 = vunpack.c.h.b16 %v1147
        %v1253 = vunpack.c.l.b16 %v1148
        %v1254 = vunpack.c.h.b16 %v1148
        %v1255 = vunpack.c.l.b16 %v1149
        %v1256 = vunpack.c.h.b16 %v1149
        %v1257 = vunpack.c.l.b16 %v1150
        %v1258 = vunpack.c.h.b16 %v1150
        %v1259 = vpack.c.b16 %v1197, %v1195
        %v1260 = vpack.c.b16 %v1198, %v1196
        %v1261 = vpack.c.b16 %v1201, %v1199
        %v1262 = vpack.c.b16 %v1202, %v1200
        %v1263 = vpack.c.b16 %v1205, %v1203
        %v1264 = vpack.c.b16 %v1206, %v1204
        %v1265 = vpack.c.b16 %v1209, %v1207
        %v1266 = vpack.c.b16 %v1210, %v1208
        %v1267 = vpack.c.b16 %v1213, %v1211
        %v1268 = vpack.c.b16 %v1214, %v1212
        %v1269 = vpack.c.b16 %v1217, %v1215
        %v1270 = vpack.c.b16 %v1218, %v1216
        %v1271 = vpack.c.b16 %v1221, %v1219
        %v1272 = vpack.c.b16 %v1222, %v1220
        %v1273 = vpack.c.b16 %v1225, %v1223
        %v1274 = vpack.c.b16 %v1226, %v1224
        %v1275 = vpack.c.b16 %v1229, %v1227
        %v1276 = vpack.c.b16 %v1230, %v1228
        %v1277 = vpack.c.b16 %v1233, %v1231
        %v1278 = vpack.c.b16 %v1234, %v1232
        %v1279 = vpack.c.b16 %v1237, %v1235
        %v1280 = vpack.c.b16 %v1238, %v1236
        %v1281 = vpack.c.b16 %v1241, %v1239
        %v1282 = vpack.c.b16 %v1242, %v1240
        %v1283 = vpack.c.b16 %v1245, %v1243
        %v1284 = vpack.c.b16 %v1246, %v1244
        %v1285 = vpack.c.b16 %v1249, %v1247
        %v1286 = vpack.c.b16 %v1250, %v1248
        %v1287 = vpack.c.b16 %v1253, %v1251
        %v1288 = vpack.c.b16 %v1254, %v1252
        %v1289 = vpack.c.b16 %v1257, %v1255
        %v1290 = vpack.c.b16 %v1258, %v1256
        %1323 = vmatprep.subr.bf16.mxu0 %v1274
        %1324 = vmatpush1.bf16.msra.mxu0 %v1273
        %1325 = vmatprep.subr.bf16.mxu0 %v1272
        %1326 = vmatpush1.bf16.msra.mxu0 %v1271
        %1327 = vmatprep.subr.bf16.mxu0 %v1270
        %1328 = vmatpush1.bf16.msra.mxu0 %v1269
        %1329 = vmatprep.subr.bf16.mxu0 %v1268
        %1330 = vmatpush1.bf16.msra.mxu0 %v1267
        %1331 = vmatprep.subr.bf16.mxu0 %v1266
        %1332 = vmatpush1.bf16.msra.mxu0 %v1265
        %1333 = vmatprep.subr.bf16.mxu0 %v1264
        %1334 = vmatpush1.bf16.msra.mxu0 %v1263
        %1335 = vmatprep.subr.bf16.mxu0 %v1262
        %1336 = vmatpush1.bf16.msra.mxu0 %v1261
        %1337 = vmatprep.subr.bf16.mxu0 %v1260
        %1338 = vmatpush1.bf16.msra.mxu0 %v1259
        %1339 = vmatprep.subr.bf16.mxu0 %v1290
        %1340 = vmatpush2.bf16.msra.mxu0 %v1289
        %1341 = vmatprep.subr.bf16.mxu0 %v1288
        %1342 = vmatpush2.bf16.msra.mxu0 %v1287
        %1343 = vmatprep.subr.bf16.mxu0 %v1286
        %1344 = vmatpush2.bf16.msra.mxu0 %v1285
        %1345 = vmatprep.subr.bf16.mxu0 %v1284
        %1346 = vmatpush2.bf16.msra.mxu0 %v1283
        %1347 = vmatprep.subr.bf16.mxu0 %v1282
        %1348 = vmatpush2.bf16.msra.mxu0 %v1281
        %1349 = vmatprep.subr.bf16.mxu0 %v1280
        %1350 = vmatpush2.bf16.msra.mxu0 %v1279
        %1351 = vmatprep.subr.bf16.mxu0 %v1278
        %1352 = vmatpush2.bf16.msra.mxu0 %v1277
        %1353 = vmatprep.subr.bf16.mxu0 %v1276
        %1354 = vmatpush2.bf16.msra.mxu0 %v1275
        %1355 = vmatprep.mubr.bf16.mxu0 %v1056
        %1356 = vmatmul.mubr.bf16.gmra.mxu0 %v1055
        %v1357 = vpop.f32.mrf.mxu0
        %v1358 = vadd.f32 %v1156, %v1357
        %v1359 = vpop.f32.mrf.mxu0
        %v1360 = vadd.f32 %v1160, %v1359
        %v1361 = vpop.f32.mrf.mxu0
        %v1362 = vadd.f32 %v1156, %v1361
        %v1363 = vpop.f32.mrf.mxu0
        %v1364 = vadd.f32 %v1160, %v1363
        %1365 = vmatprep.mubr.bf16.mxu0 %v1058
        %1366 = vmatmul.mubr.bf16.gmra.mxu0 %v1057
        %v1367 = vpop.f32.mrf.mxu0
        %v1368 = vadd.f32 %v1156, %v1367
        %v1369 = vpop.f32.mrf.mxu0
        %v1370 = vadd.f32 %v1160, %v1369
        %v1371 = vpop.f32.mrf.mxu0
        %v1372 = vadd.f32 %v1156, %v1371
        %v1373 = vpop.f32.mrf.mxu0
        %v1374 = vadd.f32 %v1160, %v1373
        %1375 = vmatprep.mubr.bf16.mxu0 %v1060
        %1376 = vmatmul.mubr.bf16.gmra.mxu0 %v1059
        %v1377 = vpop.f32.mrf.mxu0
        %v1378 = vadd.f32 %v1156, %v1377
        %v1379 = vpop.f32.mrf.mxu0
        %v1380 = vadd.f32 %v1160, %v1379
        %v1381 = vpop.f32.mrf.mxu0
        %v1382 = vadd.f32 %v1156, %v1381
        %v1383 = vpop.f32.mrf.mxu0
        %v1384 = vadd.f32 %v1160, %v1383
        %1385 = vmatprep.mubr.bf16.mxu0 %v1062
        %1386 = vmatmul.mubr.bf16.gmra.mxu0 %v1061
        %v1387 = vpop.f32.mrf.mxu0
        %v1388 = vadd.f32 %v1156, %v1387
        %v1389 = vpop.f32.mrf.mxu0
        %v1390 = vadd.f32 %v1160, %v1389
        %v1391 = vpop.f32.mrf.mxu0
        %v1392 = vadd.f32 %v1156, %v1391
        %v1393 = vpop.f32.mrf.mxu0
        %v1394 = vadd.f32 %v1160, %v1393
        %1395 = vmatprep.mubr.bf16.mxu0 %v1064
        %1396 = vmatmul.mubr.bf16.gmra.mxu0 %v1063
        %v1397 = vpop.f32.mrf.mxu0
        %v1398 = vadd.f32 %v1156, %v1397
        %v1399 = vpop.f32.mrf.mxu0
        %v1400 = vadd.f32 %v1160, %v1399
        %v1401 = vpop.f32.mrf.mxu0
        %v1402 = vadd.f32 %v1156, %v1401
        %v1403 = vpop.f32.mrf.mxu0
        %v1404 = vadd.f32 %v1160, %v1403
        %1405 = vmatprep.mubr.bf16.mxu0 %v1066
        %1406 = vmatmul.mubr.bf16.gmra.mxu0 %v1065
        %v1407 = vpop.f32.mrf.mxu0
        %v1408 = vadd.f32 %v1156, %v1407
        %v1409 = vpop.f32.mrf.mxu0
        %v1410 = vadd.f32 %v1160, %v1409
        %v1411 = vpop.f32.mrf.mxu0
        %v1412 = vadd.f32 %v1156, %v1411
        %v1413 = vpop.f32.mrf.mxu0
        %v1414 = vadd.f32 %v1160, %v1413
        %1415 = vmatprep.mubr.bf16.mxu0 %v1068
        %1416 = vmatmul.mubr.bf16.gmra.mxu0 %v1067
        %v1417 = vpop.f32.mrf.mxu0
        %v1418 = vadd.f32 %v1156, %v1417
        %v1419 = vpop.f32.mrf.mxu0
        %v1420 = vadd.f32 %v1160, %v1419
        %v1421 = vpop.f32.mrf.mxu0
        %v1422 = vadd.f32 %v1156, %v1421
        %v1423 = vpop.f32.mrf.mxu0
        %v1424 = vadd.f32 %v1160, %v1423
        %1425 = vmatprep.mubr.bf16.mxu0 %v1070
        %1426 = vmatmul.mubr.bf16.gmra.mxu0 %v1069
        %v1427 = vpop.f32.mrf.mxu0
        %v1428 = vadd.f32 %v1156, %v1427
        %v1429 = vpop.f32.mrf.mxu0
        %v1430 = vadd.f32 %v1160, %v1429
        %v1431 = vpop.f32.mrf.mxu0
        %v1432 = vadd.f32 %v1156, %v1431
        %v1433 = vpop.f32.mrf.mxu0
        %v1434 = vadd.f32 %v1160, %v1433
        %1435 = vmatprep.mubr.bf16.mxu0 %v1072
        %1436 = vmatmul.mubr.bf16.gmra.mxu0 %v1071
        %v1437 = vpop.f32.mrf.mxu0
        %v1438 = vadd.f32 %v1156, %v1437
        %v1439 = vpop.f32.mrf.mxu0
        %v1440 = vadd.f32 %v1160, %v1439
        %v1441 = vpop.f32.mrf.mxu0
        %v1442 = vadd.f32 %v1156, %v1441
        %v1443 = vpop.f32.mrf.mxu0
        %v1444 = vadd.f32 %v1160, %v1443
        %1445 = vmatprep.mubr.bf16.mxu0 %v1074
        %1446 = vmatmul.mubr.bf16.gmra.mxu0 %v1073
        %v1447 = vpop.f32.mrf.mxu0
        %v1448 = vadd.f32 %v1156, %v1447
        %v1449 = vpop.f32.mrf.mxu0
        %v1450 = vadd.f32 %v1160, %v1449
        %v1451 = vpop.f32.mrf.mxu0
        %v1452 = vadd.f32 %v1156, %v1451
        %v1453 = vpop.f32.mrf.mxu0
        %v1454 = vadd.f32 %v1160, %v1453
        %1455 = vmatprep.mubr.bf16.mxu0 %v1076
        %1456 = vmatmul.mubr.bf16.gmra.mxu0 %v1075
        %v1457 = vpop.f32.mrf.mxu0
        %v1458 = vadd.f32 %v1156, %v1457
        %v1459 = vpop.f32.mrf.mxu0
        %v1460 = vadd.f32 %v1160, %v1459
        %v1461 = vpop.f32.mrf.mxu0
        %v1462 = vadd.f32 %v1156, %v1461
        %v1463 = vpop.f32.mrf.mxu0
        %v1464 = vadd.f32 %v1160, %v1463
        %1465 = vmatprep.mubr.bf16.mxu0 %v1078
        %1466 = vmatmul.mubr.bf16.gmra.mxu0 %v1077
        %v1467 = vpop.f32.mrf.mxu0
        %v1468 = vadd.f32 %v1156, %v1467
        %v1469 = vpop.f32.mrf.mxu0
        %v1470 = vadd.f32 %v1160, %v1469
        %v1471 = vpop.f32.mrf.mxu0
        %v1472 = vadd.f32 %v1156, %v1471
        %v1473 = vpop.f32.mrf.mxu0
        %v1474 = vadd.f32 %v1160, %v1473
        %1475 = vmatprep.mubr.bf16.mxu0 %v1080
        %1476 = vmatmul.mubr.bf16.gmra.mxu0 %v1079
        %v1477 = vpop.f32.mrf.mxu0
        %v1478 = vadd.f32 %v1156, %v1477
        %v1479 = vpop.f32.mrf.mxu0
        %v1480 = vadd.f32 %v1160, %v1479
        %v1481 = vpop.f32.mrf.mxu0
        %v1482 = vadd.f32 %v1156, %v1481
        %v1483 = vpop.f32.mrf.mxu0
        %v1484 = vadd.f32 %v1160, %v1483
        %1485 = vmatprep.mubr.bf16.mxu0 %v1082
        %1486 = vmatmul.mubr.bf16.gmra.mxu0 %v1081
        %v1487 = vpop.f32.mrf.mxu0
        %v1488 = vadd.f32 %v1156, %v1487
        %v1489 = vpop.f32.mrf.mxu0
        %v1490 = vadd.f32 %v1160, %v1489
        %v1491 = vpop.f32.mrf.mxu0
        %v1492 = vadd.f32 %v1156, %v1491
        %v1493 = vpop.f32.mrf.mxu0
        %v1494 = vadd.f32 %v1160, %v1493
        %1495 = vmatprep.mubr.bf16.mxu0 %v1084
        %1496 = vmatmul.mubr.bf16.gmra.mxu0 %v1083
        %v1497 = vpop.f32.mrf.mxu0
        %v1498 = vadd.f32 %v1156, %v1497
        %v1499 = vpop.f32.mrf.mxu0
        %v1500 = vadd.f32 %v1160, %v1499
        %v1501 = vpop.f32.mrf.mxu0
        %v1502 = vadd.f32 %v1156, %v1501
        %v1503 = vpop.f32.mrf.mxu0
        %v1504 = vadd.f32 %v1160, %v1503
        %1505 = vmatprep.mubr.bf16.mxu0 %v1086
        %1506 = vmatmul.mubr.bf16.gmra.mxu0 %v1085
        %v1507 = vpop.f32.mrf.mxu0
        %v1508 = vadd.f32 %v1156, %v1507
        %v1509 = vpop.f32.mrf.mxu0
        %v1510 = vadd.f32 %v1160, %v1509
        %v1511 = vpop.f32.mrf.mxu0
        %v1512 = vadd.f32 %v1156, %v1511
        %v1513 = vpop.f32.mrf.mxu0
        %v1514 = vadd.f32 %v1160, %v1513
        %1515 = vmatprep.mubr.bf16.mxu0 %v1088
        %1516 = vmatmul.mubr.bf16.gmra.mxu0 %v1087
        %v1517 = vpop.f32.mrf.mxu0
        %v1518 = vadd.f32 %v1156, %v1517
        %v1519 = vpop.f32.mrf.mxu0
        %v1520 = vadd.f32 %v1160, %v1519
        %v1521 = vpop.f32.mrf.mxu0
        %v1522 = vadd.f32 %v1156, %v1521
        %v1523 = vpop.f32.mrf.mxu0
        %v1524 = vadd.f32 %v1160, %v1523
        %1525 = vmatprep.mubr.bf16.mxu0 %v1090
        %1526 = vmatmul.mubr.bf16.gmra.mxu0 %v1089
        %v1527 = vpop.f32.mrf.mxu0
        %v1528 = vadd.f32 %v1156, %v1527
        %v1529 = vpop.f32.mrf.mxu0
        %v1530 = vadd.f32 %v1160, %v1529
        %v1531 = vpop.f32.mrf.mxu0
        %v1532 = vadd.f32 %v1156, %v1531
        %v1533 = vpop.f32.mrf.mxu0
        %v1534 = vadd.f32 %v1160, %v1533
        %1535 = vmatprep.mubr.bf16.mxu0 %v1092
        %1536 = vmatmul.mubr.bf16.gmra.mxu0 %v1091
        %v1537 = vpop.f32.mrf.mxu0
        %v1538 = vadd.f32 %v1156, %v1537
        %v1539 = vpop.f32.mrf.mxu0
        %v1540 = vadd.f32 %v1160, %v1539
        %v1541 = vpop.f32.mrf.mxu0
        %v1542 = vadd.f32 %v1156, %v1541
        %v1543 = vpop.f32.mrf.mxu0
        %v1544 = vadd.f32 %v1160, %v1543
        %1545 = vmatprep.mubr.bf16.mxu0 %v1094
        %1546 = vmatmul.mubr.bf16.gmra.mxu0 %v1093
        %v1547 = vpop.f32.mrf.mxu0
        %v1548 = vadd.f32 %v1156, %v1547
        %v1549 = vpop.f32.mrf.mxu0
        %v1550 = vadd.f32 %v1160, %v1549
        %v1551 = vpop.f32.mrf.mxu0
        %v1552 = vadd.f32 %v1156, %v1551
        %v1553 = vpop.f32.mrf.mxu0
        %v1554 = vadd.f32 %v1160, %v1553
        %1555 = vmatprep.mubr.bf16.mxu0 %v1096
        %1556 = vmatmul.mubr.bf16.gmra.mxu0 %v1095
        %v1557 = vpop.f32.mrf.mxu0
        %v1558 = vadd.f32 %v1156, %v1557
        %v1559 = vpop.f32.mrf.mxu0
        %v1560 = vadd.f32 %v1160, %v1559
        %v1561 = vpop.f32.mrf.mxu0
        %v1562 = vadd.f32 %v1156, %v1561
        %v1563 = vpop.f32.mrf.mxu0
        %v1564 = vadd.f32 %v1160, %v1563
        %1565 = vmatprep.mubr.bf16.mxu0 %v1098
        %1566 = vmatmul.mubr.bf16.gmra.mxu0 %v1097
        %v1567 = vpop.f32.mrf.mxu0
        %v1568 = vadd.f32 %v1156, %v1567
        %v1569 = vpop.f32.mrf.mxu0
        %v1570 = vadd.f32 %v1160, %v1569
        %v1571 = vpop.f32.mrf.mxu0
        %v1572 = vadd.f32 %v1156, %v1571
        %v1573 = vpop.f32.mrf.mxu0
        %v1574 = vadd.f32 %v1160, %v1573
        %1575 = vmatprep.mubr.bf16.mxu0 %v1100
        %1576 = vmatmul.mubr.bf16.gmra.mxu0 %v1099
        %v1577 = vpop.f32.mrf.mxu0
        %v1578 = vadd.f32 %v1156, %v1577
        %v1579 = vpop.f32.mrf.mxu0
        %v1580 = vadd.f32 %v1160, %v1579
        %v1581 = vpop.f32.mrf.mxu0
        %v1582 = vadd.f32 %v1156, %v1581
        %v1583 = vpop.f32.mrf.mxu0
        %v1584 = vadd.f32 %v1160, %v1583
        %1585 = vmatprep.mubr.bf16.mxu0 %v1102
        %1586 = vmatmul.mubr.bf16.gmra.mxu0 %v1101
        %v1587 = vpop.f32.mrf.mxu0
        %v1588 = vadd.f32 %v1156, %v1587
        %v1589 = vpop.f32.mrf.mxu0
        %v1590 = vadd.f32 %v1160, %v1589
        %v1591 = vpop.f32.mrf.mxu0
        %v1592 = vadd.f32 %v1156, %v1591
        %v1593 = vpop.f32.mrf.mxu0
        %v1594 = vadd.f32 %v1160, %v1593
        %1595 = vmatprep.mubr.bf16.mxu0 %v1104
        %1596 = vmatmul.mubr.bf16.gmra.mxu0 %v1103
        %v1597 = vpop.f32.mrf.mxu0
        %v1598 = vadd.f32 %v1156, %v1597
        %v1599 = vpop.f32.mrf.mxu0
        %v1600 = vadd.f32 %v1160, %v1599
        %v1601 = vpop.f32.mrf.mxu0
        %v1602 = vadd.f32 %v1156, %v1601
        %v1603 = vpop.f32.mrf.mxu0
        %v1604 = vadd.f32 %v1160, %v1603
        %1605 = vmatprep.mubr.bf16.mxu0 %v1106
        %1606 = vmatmul.mubr.bf16.gmra.mxu0 %v1105
        %v1607 = vpop.f32.mrf.mxu0
        %v1608 = vadd.f32 %v1156, %v1607
        %v1609 = vpop.f32.mrf.mxu0
        %v1610 = vadd.f32 %v1160, %v1609
        %v1611 = vpop.f32.mrf.mxu0
        %v1612 = vadd.f32 %v1156, %v1611
        %v1613 = vpop.f32.mrf.mxu0
        %v1614 = vadd.f32 %v1160, %v1613
        %1615 = vmatprep.mubr.bf16.mxu0 %v1108
        %1616 = vmatmul.mubr.bf16.gmra.mxu0 %v1107
        %v1617 = vpop.f32.mrf.mxu0
        %v1618 = vadd.f32 %v1156, %v1617
        %v1619 = vpop.f32.mrf.mxu0
        %v1620 = vadd.f32 %v1160, %v1619
        %v1621 = vpop.f32.mrf.mxu0
        %v1622 = vadd.f32 %v1156, %v1621
        %v1623 = vpop.f32.mrf.mxu0
        %v1624 = vadd.f32 %v1160, %v1623
        %1625 = vmatprep.mubr.bf16.mxu0 %v1110
        %1626 = vmatmul.mubr.bf16.gmra.mxu0 %v1109
        %v1627 = vpop.f32.mrf.mxu0
        %v1628 = vadd.f32 %v1156, %v1627
        %v1629 = vpop.f32.mrf.mxu0
        %v1630 = vadd.f32 %v1160, %v1629
        %v1631 = vpop.f32.mrf.mxu0
        %v1632 = vadd.f32 %v1156, %v1631
        %v1633 = vpop.f32.mrf.mxu0
        %v1634 = vadd.f32 %v1160, %v1633
        %1635 = vmatprep.mubr.bf16.mxu0 %v1112
        %1636 = vmatmul.mubr.bf16.gmra.mxu0 %v1111
        %v1637 = vpop.f32.mrf.mxu0
        %v1638 = vadd.f32 %v1156, %v1637
        %v1639 = vpop.f32.mrf.mxu0
        %v1640 = vadd.f32 %v1160, %v1639
        %v1641 = vpop.f32.mrf.mxu0
        %v1642 = vadd.f32 %v1156, %v1641
        %v1643 = vpop.f32.mrf.mxu0
        %v1644 = vadd.f32 %v1160, %v1643
        %1645 = vmatprep.mubr.bf16.mxu0 %v1114
        %1646 = vmatmul.mubr.bf16.gmra.mxu0 %v1113
        %v1647 = vpop.f32.mrf.mxu0
        %v1648 = vadd.f32 %v1156, %v1647
        %v1649 = vpop.f32.mrf.mxu0
        %v1650 = vadd.f32 %v1160, %v1649
        %v1651 = vpop.f32.mrf.mxu0
        %v1652 = vadd.f32 %v1156, %v1651
        %v1653 = vpop.f32.mrf.mxu0
        %v1654 = vadd.f32 %v1160, %v1653
        %1655 = vmatprep.mubr.bf16.mxu0 %v1116
        %1656 = vmatmul.mubr.bf16.gmra.mxu0 %v1115
        %v1657 = vpop.f32.mrf.mxu0
        %v1658 = vadd.f32 %v1156, %v1657
        %v1659 = vpop.f32.mrf.mxu0
        %v1660 = vadd.f32 %v1160, %v1659
        %v1661 = vpop.f32.mrf.mxu0
        %v1662 = vadd.f32 %v1156, %v1661
        %v1663 = vpop.f32.mrf.mxu0
        %v1664 = vadd.f32 %v1160, %v1663
        %1665 = vmatprep.mubr.bf16.mxu0 %v1118
        %1666 = vmatmul.mubr.bf16.gmra.mxu0 %v1117
        %v1667 = vpop.f32.mrf.mxu0
        %v1668 = vadd.f32 %v1156, %v1667
        %v1669 = vpop.f32.mrf.mxu0
        %v1670 = vadd.f32 %v1160, %v1669
        %v1671 = vpop.f32.mrf.mxu0
        %v1672 = vadd.f32 %v1156, %v1671
        %v1673 = vpop.f32.mrf.mxu0
        %v1674 = vadd.f32 %v1160, %v1673
        %1675 = vdwg.mxu0
        %v1676 = vmax.f32 %v1358, 0.0
        %v1677 = vmax.f32 %v1360, 0.0
        %v1678 = vmax.f32 %v1362, 0.0
        %v1679 = vmax.f32 %v1364, 0.0
        %v1680 = vmax.f32 %v1368, 0.0
        %v1681 = vmax.f32 %v1370, 0.0
        %v1682 = vmax.f32 %v1372, 0.0
        %v1683 = vmax.f32 %v1374, 0.0
        %v1684 = vmax.f32 %v1378, 0.0
        %v1685 = vmax.f32 %v1380, 0.0
        %v1686 = vmax.f32 %v1382, 0.0
        %v1687 = vmax.f32 %v1384, 0.0
        %v1688 = vmax.f32 %v1388, 0.0
        %v1689 = vmax.f32 %v1390, 0.0
        %v1690 = vmax.f32 %v1392, 0.0
        %v1691 = vmax.f32 %v1394, 0.0
        %v1692 = vmax.f32 %v1398, 0.0
        %v1693 = vmax.f32 %v1400, 0.0
        %v1694 = vmax.f32 %v1402, 0.0
        %v1695 = vmax.f32 %v1404, 0.0
        %v1696 = vmax.f32 %v1408, 0.0
        %v1697 = vmax.f32 %v1410, 0.0
        %v1698 = vmax.f32 %v1412, 0.0
        %v1699 = vmax.f32 %v1414, 0.0
        %v1700 = vmax.f32 %v1418, 0.0
        %v1701 = vmax.f32 %v1420, 0.0
        %v1702 = vmax.f32 %v1422, 0.0
        %v1703 = vmax.f32 %v1424, 0.0
        %v1704 = vmax.f32 %v1428, 0.0
        %v1705 = vmax.f32 %v1430, 0.0
        %v1706 = vmax.f32 %v1432, 0.0
        %v1707 = vmax.f32 %v1434, 0.0
        %v1708 = vmax.f32 %v1438, 0.0
        %v1709 = vmax.f32 %v1440, 0.0
        %v1710 = vmax.f32 %v1442, 0.0
        %v1711 = vmax.f32 %v1444, 0.0
        %v1712 = vmax.f32 %v1448, 0.0
        %v1713 = vmax.f32 %v1450, 0.0
        %v1714 = vmax.f32 %v1452, 0.0
        %v1715 = vmax.f32 %v1454, 0.0
        %v1716 = vmax.f32 %v1458, 0.0
        %v1717 = vmax.f32 %v1460, 0.0
        %v1718 = vmax.f32 %v1462, 0.0
        %v1719 = vmax.f32 %v1464, 0.0
        %v1720 = vmax.f32 %v1468, 0.0
        %v1721 = vmax.f32 %v1470, 0.0
        %v1722 = vmax.f32 %v1472, 0.0
        %v1723 = vmax.f32 %v1474, 0.0
        %v1724 = vmax.f32 %v1478, 0.0
        %v1725 = vmax.f32 %v1480, 0.0
        %v1726 = vmax.f32 %v1482, 0.0
        %v1727 = vmax.f32 %v1484, 0.0
        %v1728 = vmax.f32 %v1488, 0.0
        %v1729 = vmax.f32 %v1490, 0.0
        %v1730 = vmax.f32 %v1492, 0.0
        %v1731 = vmax.f32 %v1494, 0.0
        %v1732 = vmax.f32 %v1498, 0.0
        %v1733 = vmax.f32 %v1500, 0.0
        %v1734 = vmax.f32 %v1502, 0.0
        %v1735 = vmax.f32 %v1504, 0.0
        %v1736 = vmax.f32 %v1508, 0.0
        %v1737 = vmax.f32 %v1510, 0.0
        %v1738 = vmax.f32 %v1512, 0.0
        %v1739 = vmax.f32 %v1514, 0.0
        %v1740 = vmax.f32 %v1518, 0.0
        %v1741 = vmax.f32 %v1520, 0.0
        %v1742 = vmax.f32 %v1522, 0.0
        %v1743 = vmax.f32 %v1524, 0.0
        %v1744 = vmax.f32 %v1528, 0.0
        %v1745 = vmax.f32 %v1530, 0.0
        %v1746 = vmax.f32 %v1532, 0.0
        %v1747 = vmax.f32 %v1534, 0.0
        %v1748 = vmax.f32 %v1538, 0.0
        %v1749 = vmax.f32 %v1540, 0.0
        %v1750 = vmax.f32 %v1542, 0.0
        %v1751 = vmax.f32 %v1544, 0.0
        %v1752 = vmax.f32 %v1548, 0.0
        %v1753 = vmax.f32 %v1550, 0.0
        %v1754 = vmax.f32 %v1552, 0.0
        %v1755 = vmax.f32 %v1554, 0.0
        %v1756 = vmax.f32 %v1558, 0.0
        %v1757 = vmax.f32 %v1560, 0.0
        %v1758 = vmax.f32 %v1562, 0.0
        %v1759 = vmax.f32 %v1564, 0.0
        %v1760 = vmax.f32 %v1568, 0.0
        %v1761 = vmax.f32 %v1570, 0.0
        %v1762 = vmax.f32 %v1572, 0.0
        %v1763 = vmax.f32 %v1574, 0.0
        %v1764 = vmax.f32 %v1578, 0.0
        %v1765 = vmax.f32 %v1580, 0.0
        %v1766 = vmax.f32 %v1582, 0.0
        %v1767 = vmax.f32 %v1584, 0.0
        %v1768 = vmax.f32 %v1588, 0.0
        %v1769 = vmax.f32 %v1590, 0.0
        %v1770 = vmax.f32 %v1592, 0.0
        %v1771 = vmax.f32 %v1594, 0.0
        %v1772 = vmax.f32 %v1598, 0.0
        %v1773 = vmax.f32 %v1600, 0.0
        %v1774 = vmax.f32 %v1602, 0.0
        %v1775 = vmax.f32 %v1604, 0.0
        %v1776 = vmax.f32 %v1608, 0.0
        %v1777 = vmax.f32 %v1610, 0.0
        %v1778 = vmax.f32 %v1612, 0.0
        %v1779 = vmax.f32 %v1614, 0.0
        %v1780 = vmax.f32 %v1618, 0.0
        %v1781 = vmax.f32 %v1620, 0.0
        %v1782 = vmax.f32 %v1622, 0.0
        %v1783 = vmax.f32 %v1624, 0.0
        %v1784 = vmax.f32 %v1628, 0.0
        %v1785 = vmax.f32 %v1630, 0.0
        %v1786 = vmax.f32 %v1632, 0.0
        %v1787 = vmax.f32 %v1634, 0.0
        %v1788 = vmax.f32 %v1638, 0.0
        %v1789 = vmax.f32 %v1640, 0.0
        %v1790 = vmax.f32 %v1642, 0.0
        %v1791 = vmax.f32 %v1644, 0.0
        %v1792 = vmax.f32 %v1648, 0.0
        %v1793 = vmax.f32 %v1650, 0.0
        %v1794 = vmax.f32 %v1652, 0.0
        %v1795 = vmax.f32 %v1654, 0.0
        %v1796 = vmax.f32 %v1658, 0.0
        %v1797 = vmax.f32 %v1660, 0.0
        %v1798 = vmax.f32 %v1662, 0.0
        %v1799 = vmax.f32 %v1664, 0.0
        %v1800 = vmax.f32 %v1668, 0.0
        %v1801 = vmax.f32 %v1670, 0.0
        %v1802 = vmax.f32 %v1672, 0.0
        %v1803 = vmax.f32 %v1674, 0.0
        %v1804 = vpack.c.bf16 %v1678, %v1676
        %v1805 = vpack.c.bf16 %v1679, %v1677
        %v1806 = vpack.c.bf16 %v1682, %v1680
        %v1807 = vpack.c.bf16 %v1683, %v1681
        %v1808 = vpack.c.bf16 %v1686, %v1684
        %v1809 = vpack.c.bf16 %v1687, %v1685
        %v1810 = vpack.c.bf16 %v1690, %v1688
        %v1811 = vpack.c.bf16 %v1691, %v1689
        %v1812 = vpack.c.bf16 %v1694, %v1692
        %v1813 = vpack.c.bf16 %v1695, %v1693
        %v1814 = vpack.c.bf16 %v1698, %v1696
        %v1815 = vpack.c.bf16 %v1699, %v1697
        %v1816 = vpack.c.bf16 %v1702, %v1700
        %v1817 = vpack.c.bf16 %v1703, %v1701
        %v1818 = vpack.c.bf16 %v1706, %v1704
        %v1819 = vpack.c.bf16 %v1707, %v1705
        %v1820 = vpack.c.bf16 %v1710, %v1708
        %v1821 = vpack.c.bf16 %v1711, %v1709
        %v1822 = vpack.c.bf16 %v1714, %v1712
        %v1823 = vpack.c.bf16 %v1715, %v1713
        %v1824 = vpack.c.bf16 %v1718, %v1716
        %v1825 = vpack.c.bf16 %v1719, %v1717
        %v1826 = vpack.c.bf16 %v1722, %v1720
        %v1827 = vpack.c.bf16 %v1723, %v1721
        %v1828 = vpack.c.bf16 %v1726, %v1724
        %v1829 = vpack.c.bf16 %v1727, %v1725
        %v1830 = vpack.c.bf16 %v1730, %v1728
        %v1831 = vpack.c.bf16 %v1731, %v1729
        %v1832 = vpack.c.bf16 %v1734, %v1732
        %v1833 = vpack.c.bf16 %v1735, %v1733
        %v1834 = vpack.c.bf16 %v1738, %v1736
        %v1835 = vpack.c.bf16 %v1739, %v1737
        %v1836 = vpack.c.bf16 %v1742, %v1740
        %v1837 = vpack.c.bf16 %v1743, %v1741
        %v1838 = vpack.c.bf16 %v1746, %v1744
        %v1839 = vpack.c.bf16 %v1747, %v1745
        %v1840 = vpack.c.bf16 %v1750, %v1748
        %v1841 = vpack.c.bf16 %v1751, %v1749
        %v1842 = vpack.c.bf16 %v1754, %v1752
        %v1843 = vpack.c.bf16 %v1755, %v1753
        %v1844 = vpack.c.bf16 %v1758, %v1756
        %v1845 = vpack.c.bf16 %v1759, %v1757
        %v1846 = vpack.c.bf16 %v1762, %v1760
        %v1847 = vpack.c.bf16 %v1763, %v1761
        %v1848 = vpack.c.bf16 %v1766, %v1764
        %v1849 = vpack.c.bf16 %v1767, %v1765
        %v1850 = vpack.c.bf16 %v1770, %v1768
        %v1851 = vpack.c.bf16 %v1771, %v1769
        %v1852 = vpack.c.bf16 %v1774, %v1772
        %v1853 = vpack.c.bf16 %v1775, %v1773
        %v1854 = vpack.c.bf16 %v1778, %v1776
        %v1855 = vpack.c.bf16 %v1779, %v1777
        %v1856 = vpack.c.bf16 %v1782, %v1780
        %v1857 = vpack.c.bf16 %v1783, %v1781
        %v1858 = vpack.c.bf16 %v1786, %v1784
        %v1859 = vpack.c.bf16 %v1787, %v1785
        %v1860 = vpack.c.bf16 %v1790, %v1788
        %v1861 = vpack.c.bf16 %v1791, %v1789
        %v1862 = vpack.c.bf16 %v1794, %v1792
        %v1863 = vpack.c.bf16 %v1795, %v1793
        %v1864 = vpack.c.bf16 %v1798, %v1796
        %v1865 = vpack.c.bf16 %v1799, %v1797
        %v1866 = vpack.c.bf16 %v1802, %v1800
        %v1867 = vpack.c.bf16 %v1803, %v1801
        %v1868 = vld [vmem:[%s7] sm:$0xff]
        %v1869 = vld [vmem:[%s7 + $0x8] sm:$0xff]
        %v1870 = vld [vmem:[%s7 + $0x10] sm:$0xff]
        %v1871 = vld [vmem:[%s7 + $0x18] sm:$0xff]
        %v1872 = vld [vmem:[%s7 + $0x20] sm:$0xff]
        %v1873 = vld [vmem:[%s7 + $0x28] sm:$0xff]
        %v1874 = vld [vmem:[%s7 + $0x30] sm:$0xff]
        %v1875 = vld [vmem:[%s7 + $0x38] sm:$0xff]
        %v1876 = vld [vmem:[%s7 + $0x40] sm:$0xff]
        %v1877 = vld [vmem:[%s7 + $0x48] sm:$0xff]
        %v1878 = vld [vmem:[%s7 + $0x50] sm:$0xff]
        %v1879 = vld [vmem:[%s7 + $0x58] sm:$0xff]
        %v1880 = vld [vmem:[%s7 + $0x60] sm:$0xff]
        %v1881 = vld [vmem:[%s7 + $0x68] sm:$0xff]
        %v1882 = vld [vmem:[%s7 + $0x70] sm:$0xff]
        %v1883 = vld [vmem:[%s7 + $0x78] sm:$0xff]
        %v1884 = vld [vmem:[%s7 + $0x80] sm:$0xff]
        %v1885 = vld [vmem:[%s7 + $0x88] sm:$0xff]
        %v1886 = vld [vmem:[%s7 + $0x90] sm:$0xff]
        %v1887 = vld [vmem:[%s7 + $0x98] sm:$0xff]
        %v1888 = vld [vmem:[%s7 + $0xa0] sm:$0xff]
        %v1889 = vld [vmem:[%s7 + $0xa8] sm:$0xff]
        %v1890 = vld [vmem:[%s7 + $0xb0] sm:$0xff]
        %v1891 = vld [vmem:[%s7 + $0xb8] sm:$0xff]
        %v1892 = vld [vmem:[%s7 + $0xc0] sm:$0xff]
        %v1893 = vld [vmem:[%s7 + $0xc8] sm:$0xff]
        %v1894 = vld [vmem:[%s7 + $0xd0] sm:$0xff]
        %v1895 = vld [vmem:[%s7 + $0xd8] sm:$0xff]
        %v1896 = vld [vmem:[%s7 + $0xe0] sm:$0xff]
        %v1897 = vld [vmem:[%s7 + $0xe8] sm:$0xff]
        %v1898 = vld [vmem:[%s7 + $0xf0] sm:$0xff]
        %v1899 = vld [vmem:[%s7 + $0xf8] sm:$0xff]
        %v1900 = vld [vmem:[%s8] sm:$0x3]
        %v1902 = vlaneseq
        %v1903 = vshrl.u32 %v1902, 7
        %v1904 = vsub.s32 0, %v1903
        %v1905 = vrot.slane %v1900, %v1904
        %v1906 = vlaneseq
        %v1907 = vshrl.u32 %v1906, 7
        %v1908 = vsub.s32 1, %v1907
        %v1909 = vrot.slane %v1900, %v1908
        %v1944 = vunpack.c.l.b16 %v1868
        %v1945 = vunpack.c.h.b16 %v1868
        %v1946 = vunpack.c.l.b16 %v1869
        %v1947 = vunpack.c.h.b16 %v1869
        %v1948 = vunpack.c.l.b16 %v1870
        %v1949 = vunpack.c.h.b16 %v1870
        %v1950 = vunpack.c.l.b16 %v1871
        %v1951 = vunpack.c.h.b16 %v1871
        %v1952 = vunpack.c.l.b16 %v1872
        %v1953 = vunpack.c.h.b16 %v1872
        %v1954 = vunpack.c.l.b16 %v1873
        %v1955 = vunpack.c.h.b16 %v1873
        %v1956 = vunpack.c.l.b16 %v1874
        %v1957 = vunpack.c.h.b16 %v1874
        %v1958 = vunpack.c.l.b16 %v1875
        %v1959 = vunpack.c.h.b16 %v1875
        %v1960 = vunpack.c.l.b16 %v1876
        %v1961 = vunpack.c.h.b16 %v1876
        %v1962 = vunpack.c.l.b16 %v1877
        %v1963 = vunpack.c.h.b16 %v1877
        %v1964 = vunpack.c.l.b16 %v1878
        %v1965 = vunpack.c.h.b16 %v1878
        %v1966 = vunpack.c.l.b16 %v1879
        %v1967 = vunpack.c.h.b16 %v1879
        %v1968 = vunpack.c.l.b16 %v1880
        %v1969 = vunpack.c.h.b16 %v1880
        %v1970 = vunpack.c.l.b16 %v1881
        %v1971 = vunpack.c.h.b16 %v1881
        %v1972 = vunpack.c.l.b16 %v1882
        %v1973 = vunpack.c.h.b16 %v1882
        %v1974 = vunpack.c.l.b16 %v1883
        %v1975 = vunpack.c.h.b16 %v1883
        %v1976 = vunpack.c.l.b16 %v1884
        %v1977 = vunpack.c.h.b16 %v1884
        %v1978 = vunpack.c.l.b16 %v1885
        %v1979 = vunpack.c.h.b16 %v1885
        %v1980 = vunpack.c.l.b16 %v1886
        %v1981 = vunpack.c.h.b16 %v1886
        %v1982 = vunpack.c.l.b16 %v1887
        %v1983 = vunpack.c.h.b16 %v1887
        %v1984 = vunpack.c.l.b16 %v1888
        %v1985 = vunpack.c.h.b16 %v1888
        %v1986 = vunpack.c.l.b16 %v1889
        %v1987 = vunpack.c.h.b16 %v1889
        %v1988 = vunpack.c.l.b16 %v1890
        %v1989 = vunpack.c.h.b16 %v1890
        %v1990 = vunpack.c.l.b16 %v1891
        %v1991 = vunpack.c.h.b16 %v1891
        %v1992 = vunpack.c.l.b16 %v1892
        %v1993 = vunpack.c.h.b16 %v1892
        %v1994 = vunpack.c.l.b16 %v1893
        %v1995 = vunpack.c.h.b16 %v1893
        %v1996 = vunpack.c.l.b16 %v1894
        %v1997 = vunpack.c.h.b16 %v1894
        %v1998 = vunpack.c.l.b16 %v1895
        %v1999 = vunpack.c.h.b16 %v1895
        %v2000 = vunpack.c.l.b16 %v1896
        %v2001 = vunpack.c.h.b16 %v1896
        %v2002 = vunpack.c.l.b16 %v1897
        %v2003 = vunpack.c.h.b16 %v1897
        %v2004 = vunpack.c.l.b16 %v1898
        %v2005 = vunpack.c.h.b16 %v1898
        %v2006 = vunpack.c.l.b16 %v1899
        %v2007 = vunpack.c.h.b16 %v1899
        %v2008 = vpack.c.b16 %v1946, %v1944
        %v2009 = vpack.c.b16 %v1947, %v1945
        %v2010 = vpack.c.b16 %v1950, %v1948
        %v2011 = vpack.c.b16 %v1951, %v1949
        %v2012 = vpack.c.b16 %v1954, %v1952
        %v2013 = vpack.c.b16 %v1955, %v1953
        %v2014 = vpack.c.b16 %v1958, %v1956
        %v2015 = vpack.c.b16 %v1959, %v1957
        %v2016 = vpack.c.b16 %v1962, %v1960
        %v2017 = vpack.c.b16 %v1963, %v1961
        %v2018 = vpack.c.b16 %v1966, %v1964
        %v2019 = vpack.c.b16 %v1967, %v1965
        %v2020 = vpack.c.b16 %v1970, %v1968
        %v2021 = vpack.c.b16 %v1971, %v1969
        %v2022 = vpack.c.b16 %v1974, %v1972
        %v2023 = vpack.c.b16 %v1975, %v1973
        %v2024 = vpack.c.b16 %v1978, %v1976
        %v2025 = vpack.c.b16 %v1979, %v1977
        %v2026 = vpack.c.b16 %v1982, %v1980
        %v2027 = vpack.c.b16 %v1983, %v1981
        %v2028 = vpack.c.b16 %v1986, %v1984
        %v2029 = vpack.c.b16 %v1987, %v1985
        %v2030 = vpack.c.b16 %v1990, %v1988
        %v2031 = vpack.c.b16 %v1991, %v1989
        %v2032 = vpack.c.b16 %v1994, %v1992
        %v2033 = vpack.c.b16 %v1995, %v1993
        %v2034 = vpack.c.b16 %v1998, %v1996
        %v2035 = vpack.c.b16 %v1999, %v1997
        %v2036 = vpack.c.b16 %v2002, %v2000
        %v2037 = vpack.c.b16 %v2003, %v2001
        %v2038 = vpack.c.b16 %v2006, %v2004
        %v2039 = vpack.c.b16 %v2007, %v2005
        %2072 = vmatprep.subr.bf16.mxu0 %v2023
        %2073 = vmatpush1.bf16.msra.mxu0 %v2022
        %2074 = vmatprep.subr.bf16.mxu0 %v2021
        %2075 = vmatpush1.bf16.msra.mxu0 %v2020
        %2076 = vmatprep.subr.bf16.mxu0 %v2019
        %2077 = vmatpush1.bf16.msra.mxu0 %v2018
        %2078 = vmatprep.subr.bf16.mxu0 %v2017
        %2079 = vmatpush1.bf16.msra.mxu0 %v2016
        %2080 = vmatprep.subr.bf16.mxu0 %v2015
        %2081 = vmatpush1.bf16.msra.mxu0 %v2014
        %2082 = vmatprep.subr.bf16.mxu0 %v2013
        %2083 = vmatpush1.bf16.msra.mxu0 %v2012
        %2084 = vmatprep.subr.bf16.mxu0 %v2011
        %2085 = vmatpush1.bf16.msra.mxu0 %v2010
        %2086 = vmatprep.subr.bf16.mxu0 %v2009
        %2087 = vmatpush1.bf16.msra.mxu0 %v2008
        %2088 = vmatprep.subr.bf16.mxu0 %v2039
        %2089 = vmatpush2.bf16.msra.mxu0 %v2038
        %2090 = vmatprep.subr.bf16.mxu0 %v2037
        %2091 = vmatpush2.bf16.msra.mxu0 %v2036
        %2092 = vmatprep.subr.bf16.mxu0 %v2035
        %2093 = vmatpush2.bf16.msra.mxu0 %v2034
        %2094 = vmatprep.subr.bf16.mxu0 %v2033
        %2095 = vmatpush2.bf16.msra.mxu0 %v2032
        %2096 = vmatprep.subr.bf16.mxu0 %v2031
        %2097 = vmatpush2.bf16.msra.mxu0 %v2030
        %2098 = vmatprep.subr.bf16.mxu0 %v2029
        %2099 = vmatpush2.bf16.msra.mxu0 %v2028
        %2100 = vmatprep.subr.bf16.mxu0 %v2027
        %2101 = vmatpush2.bf16.msra.mxu0 %v2026
        %2102 = vmatprep.subr.bf16.mxu0 %v2025
        %2103 = vmatpush2.bf16.msra.mxu0 %v2024
        %2104 = vmatprep.mubr.bf16.mxu0 %v1805
        %2105 = vmatmul.mubr.bf16.gmra.mxu0 %v1804
        %v2106 = vpop.f32.mrf.mxu0
        %v2107 = vadd.f32 %v1905, %v2106
        %v2108 = vpop.f32.mrf.mxu0
        %v2109 = vadd.f32 %v1909, %v2108
        %v2110 = vpop.f32.mrf.mxu0
        %v2111 = vadd.f32 %v1905, %v2110
        %v2112 = vpop.f32.mrf.mxu0
        %v2113 = vadd.f32 %v1909, %v2112
        %2114 = vmatprep.mubr.bf16.mxu0 %v1807
        %2115 = vmatmul.mubr.bf16.gmra.mxu0 %v1806
        %v2116 = vpop.f32.mrf.mxu0
        %v2117 = vadd.f32 %v1905, %v2116
        %v2118 = vpop.f32.mrf.mxu0
        %v2119 = vadd.f32 %v1909, %v2118
        %v2120 = vpop.f32.mrf.mxu0
        %v2121 = vadd.f32 %v1905, %v2120
        %v2122 = vpop.f32.mrf.mxu0
        %v2123 = vadd.f32 %v1909, %v2122
        %2124 = vmatprep.mubr.bf16.mxu0 %v1809
        %2125 = vmatmul.mubr.bf16.gmra.mxu0 %v1808
        %v2126 = vpop.f32.mrf.mxu0
        %v2127 = vadd.f32 %v1905, %v2126
        %v2128 = vpop.f32.mrf.mxu0
        %v2129 = vadd.f32 %v1909, %v2128
        %v2130 = vpop.f32.mrf.mxu0
        %v2131 = vadd.f32 %v1905, %v2130
        %v2132 = vpop.f32.mrf.mxu0
        %v2133 = vadd.f32 %v1909, %v2132
        %2134 = vmatprep.mubr.bf16.mxu0 %v1811
        %2135 = vmatmul.mubr.bf16.gmra.mxu0 %v1810
        %v2136 = vpop.f32.mrf.mxu0
        %v2137 = vadd.f32 %v1905, %v2136
        %v2138 = vpop.f32.mrf.mxu0
        %v2139 = vadd.f32 %v1909, %v2138
        %v2140 = vpop.f32.mrf.mxu0
        %v2141 = vadd.f32 %v1905, %v2140
        %v2142 = vpop.f32.mrf.mxu0
        %v2143 = vadd.f32 %v1909, %v2142
        %2144 = vmatprep.mubr.bf16.mxu0 %v1813
        %2145 = vmatmul.mubr.bf16.gmra.mxu0 %v1812
        %v2146 = vpop.f32.mrf.mxu0
        %v2147 = vadd.f32 %v1905, %v2146
        %v2148 = vpop.f32.mrf.mxu0
        %v2149 = vadd.f32 %v1909, %v2148
        %v2150 = vpop.f32.mrf.mxu0
        %v2151 = vadd.f32 %v1905, %v2150
        %v2152 = vpop.f32.mrf.mxu0
        %v2153 = vadd.f32 %v1909, %v2152
        %2154 = vmatprep.mubr.bf16.mxu0 %v1815
        %2155 = vmatmul.mubr.bf16.gmra.mxu0 %v1814
        %v2156 = vpop.f32.mrf.mxu0
        %v2157 = vadd.f32 %v1905, %v2156
        %v2158 = vpop.f32.mrf.mxu0
        %v2159 = vadd.f32 %v1909, %v2158
        %v2160 = vpop.f32.mrf.mxu0
        %v2161 = vadd.f32 %v1905, %v2160
        %v2162 = vpop.f32.mrf.mxu0
        %v2163 = vadd.f32 %v1909, %v2162
        %2164 = vmatprep.mubr.bf16.mxu0 %v1817
        %2165 = vmatmul.mubr.bf16.gmra.mxu0 %v1816
        %v2166 = vpop.f32.mrf.mxu0
        %v2167 = vadd.f32 %v1905, %v2166
        %v2168 = vpop.f32.mrf.mxu0
        %v2169 = vadd.f32 %v1909, %v2168
        %v2170 = vpop.f32.mrf.mxu0
        %v2171 = vadd.f32 %v1905, %v2170
        %v2172 = vpop.f32.mrf.mxu0
        %v2173 = vadd.f32 %v1909, %v2172
        %2174 = vmatprep.mubr.bf16.mxu0 %v1819
        %2175 = vmatmul.mubr.bf16.gmra.mxu0 %v1818
        %v2176 = vpop.f32.mrf.mxu0
        %v2177 = vadd.f32 %v1905, %v2176
        %v2178 = vpop.f32.mrf.mxu0
        %v2179 = vadd.f32 %v1909, %v2178
        %v2180 = vpop.f32.mrf.mxu0
        %v2181 = vadd.f32 %v1905, %v2180
        %v2182 = vpop.f32.mrf.mxu0
        %v2183 = vadd.f32 %v1909, %v2182
        %2184 = vmatprep.mubr.bf16.mxu0 %v1821
        %2185 = vmatmul.mubr.bf16.gmra.mxu0 %v1820
        %v2186 = vpop.f32.mrf.mxu0
        %v2187 = vadd.f32 %v1905, %v2186
        %v2188 = vpop.f32.mrf.mxu0
        %v2189 = vadd.f32 %v1909, %v2188
        %v2190 = vpop.f32.mrf.mxu0
        %v2191 = vadd.f32 %v1905, %v2190
        %v2192 = vpop.f32.mrf.mxu0
        %v2193 = vadd.f32 %v1909, %v2192
        %2194 = vmatprep.mubr.bf16.mxu0 %v1823
        %2195 = vmatmul.mubr.bf16.gmra.mxu0 %v1822
        %v2196 = vpop.f32.mrf.mxu0
        %v2197 = vadd.f32 %v1905, %v2196
        %v2198 = vpop.f32.mrf.mxu0
        %v2199 = vadd.f32 %v1909, %v2198
        %v2200 = vpop.f32.mrf.mxu0
        %v2201 = vadd.f32 %v1905, %v2200
        %v2202 = vpop.f32.mrf.mxu0
        %v2203 = vadd.f32 %v1909, %v2202
        %2204 = vmatprep.mubr.bf16.mxu0 %v1825
        %2205 = vmatmul.mubr.bf16.gmra.mxu0 %v1824
        %v2206 = vpop.f32.mrf.mxu0
        %v2207 = vadd.f32 %v1905, %v2206
        %v2208 = vpop.f32.mrf.mxu0
        %v2209 = vadd.f32 %v1909, %v2208
        %v2210 = vpop.f32.mrf.mxu0
        %v2211 = vadd.f32 %v1905, %v2210
        %v2212 = vpop.f32.mrf.mxu0
        %v2213 = vadd.f32 %v1909, %v2212
        %2214 = vmatprep.mubr.bf16.mxu0 %v1827
        %2215 = vmatmul.mubr.bf16.gmra.mxu0 %v1826
        %v2216 = vpop.f32.mrf.mxu0
        %v2217 = vadd.f32 %v1905, %v2216
        %v2218 = vpop.f32.mrf.mxu0
        %v2219 = vadd.f32 %v1909, %v2218
        %v2220 = vpop.f32.mrf.mxu0
        %v2221 = vadd.f32 %v1905, %v2220
        %v2222 = vpop.f32.mrf.mxu0
        %v2223 = vadd.f32 %v1909, %v2222
        %2224 = vmatprep.mubr.bf16.mxu0 %v1829
        %2225 = vmatmul.mubr.bf16.gmra.mxu0 %v1828
        %v2226 = vpop.f32.mrf.mxu0
        %v2227 = vadd.f32 %v1905, %v2226
        %v2228 = vpop.f32.mrf.mxu0
        %v2229 = vadd.f32 %v1909, %v2228
        %v2230 = vpop.f32.mrf.mxu0
        %v2231 = vadd.f32 %v1905, %v2230
        %v2232 = vpop.f32.mrf.mxu0
        %v2233 = vadd.f32 %v1909, %v2232
        %2234 = vmatprep.mubr.bf16.mxu0 %v1831
        %2235 = vmatmul.mubr.bf16.gmra.mxu0 %v1830
        %v2236 = vpop.f32.mrf.mxu0
        %v2237 = vadd.f32 %v1905, %v2236
        %v2238 = vpop.f32.mrf.mxu0
        %v2239 = vadd.f32 %v1909, %v2238
        %v2240 = vpop.f32.mrf.mxu0
        %v2241 = vadd.f32 %v1905, %v2240
        %v2242 = vpop.f32.mrf.mxu0
        %v2243 = vadd.f32 %v1909, %v2242
        %2244 = vmatprep.mubr.bf16.mxu0 %v1833
        %2245 = vmatmul.mubr.bf16.gmra.mxu0 %v1832
        %v2246 = vpop.f32.mrf.mxu0
        %v2247 = vadd.f32 %v1905, %v2246
        %v2248 = vpop.f32.mrf.mxu0
        %v2249 = vadd.f32 %v1909, %v2248
        %v2250 = vpop.f32.mrf.mxu0
        %v2251 = vadd.f32 %v1905, %v2250
        %v2252 = vpop.f32.mrf.mxu0
        %v2253 = vadd.f32 %v1909, %v2252
        %2254 = vmatprep.mubr.bf16.mxu0 %v1835
        %2255 = vmatmul.mubr.bf16.gmra.mxu0 %v1834
        %v2256 = vpop.f32.mrf.mxu0
        %v2257 = vadd.f32 %v1905, %v2256
        %v2258 = vpop.f32.mrf.mxu0
        %v2259 = vadd.f32 %v1909, %v2258
        %v2260 = vpop.f32.mrf.mxu0
        %v2261 = vadd.f32 %v1905, %v2260
        %v2262 = vpop.f32.mrf.mxu0
        %v2263 = vadd.f32 %v1909, %v2262
        %2264 = vmatprep.mubr.bf16.mxu0 %v1837
        %2265 = vmatmul.mubr.bf16.gmra.mxu0 %v1836
        %v2266 = vpop.f32.mrf.mxu0
        %v2267 = vadd.f32 %v1905, %v2266
        %v2268 = vpop.f32.mrf.mxu0
        %v2269 = vadd.f32 %v1909, %v2268
        %v2270 = vpop.f32.mrf.mxu0
        %v2271 = vadd.f32 %v1905, %v2270
        %v2272 = vpop.f32.mrf.mxu0
        %v2273 = vadd.f32 %v1909, %v2272
        %2274 = vmatprep.mubr.bf16.mxu0 %v1839
        %2275 = vmatmul.mubr.bf16.gmra.mxu0 %v1838
        %v2276 = vpop.f32.mrf.mxu0
        %v2277 = vadd.f32 %v1905, %v2276
        %v2278 = vpop.f32.mrf.mxu0
        %v2279 = vadd.f32 %v1909, %v2278
        %v2280 = vpop.f32.mrf.mxu0
        %v2281 = vadd.f32 %v1905, %v2280
        %v2282 = vpop.f32.mrf.mxu0
        %v2283 = vadd.f32 %v1909, %v2282
        %2284 = vmatprep.mubr.bf16.mxu0 %v1841
        %2285 = vmatmul.mubr.bf16.gmra.mxu0 %v1840
        %v2286 = vpop.f32.mrf.mxu0
        %v2287 = vadd.f32 %v1905, %v2286
        %v2288 = vpop.f32.mrf.mxu0
        %v2289 = vadd.f32 %v1909, %v2288
        %v2290 = vpop.f32.mrf.mxu0
        %v2291 = vadd.f32 %v1905, %v2290
        %v2292 = vpop.f32.mrf.mxu0
        %v2293 = vadd.f32 %v1909, %v2292
        %2294 = vmatprep.mubr.bf16.mxu0 %v1843
        %2295 = vmatmul.mubr.bf16.gmra.mxu0 %v1842
        %v2296 = vpop.f32.mrf.mxu0
        %v2297 = vadd.f32 %v1905, %v2296
        %v2298 = vpop.f32.mrf.mxu0
        %v2299 = vadd.f32 %v1909, %v2298
        %v2300 = vpop.f32.mrf.mxu0
        %v2301 = vadd.f32 %v1905, %v2300
        %v2302 = vpop.f32.mrf.mxu0
        %v2303 = vadd.f32 %v1909, %v2302
        %2304 = vmatprep.mubr.bf16.mxu0 %v1845
        %2305 = vmatmul.mubr.bf16.gmra.mxu0 %v1844
        %v2306 = vpop.f32.mrf.mxu0
        %v2307 = vadd.f32 %v1905, %v2306
        %v2308 = vpop.f32.mrf.mxu0
        %v2309 = vadd.f32 %v1909, %v2308
        %v2310 = vpop.f32.mrf.mxu0
        %v2311 = vadd.f32 %v1905, %v2310
        %v2312 = vpop.f32.mrf.mxu0
        %v2313 = vadd.f32 %v1909, %v2312
        %2314 = vmatprep.mubr.bf16.mxu0 %v1847
        %2315 = vmatmul.mubr.bf16.gmra.mxu0 %v1846
        %v2316 = vpop.f32.mrf.mxu0
        %v2317 = vadd.f32 %v1905, %v2316
        %v2318 = vpop.f32.mrf.mxu0
        %v2319 = vadd.f32 %v1909, %v2318
        %v2320 = vpop.f32.mrf.mxu0
        %v2321 = vadd.f32 %v1905, %v2320
        %v2322 = vpop.f32.mrf.mxu0
        %v2323 = vadd.f32 %v1909, %v2322
        %2324 = vmatprep.mubr.bf16.mxu0 %v1849
        %2325 = vmatmul.mubr.bf16.gmra.mxu0 %v1848
        %v2326 = vpop.f32.mrf.mxu0
        %v2327 = vadd.f32 %v1905, %v2326
        %v2328 = vpop.f32.mrf.mxu0
        %v2329 = vadd.f32 %v1909, %v2328
        %v2330 = vpop.f32.mrf.mxu0
        %v2331 = vadd.f32 %v1905, %v2330
        %v2332 = vpop.f32.mrf.mxu0
        %v2333 = vadd.f32 %v1909, %v2332
        %2334 = vmatprep.mubr.bf16.mxu0 %v1851
        %2335 = vmatmul.mubr.bf16.gmra.mxu0 %v1850
        %v2336 = vpop.f32.mrf.mxu0
        %v2337 = vadd.f32 %v1905, %v2336
        %v2338 = vpop.f32.mrf.mxu0
        %v2339 = vadd.f32 %v1909, %v2338
        %v2340 = vpop.f32.mrf.mxu0
        %v2341 = vadd.f32 %v1905, %v2340
        %v2342 = vpop.f32.mrf.mxu0
        %v2343 = vadd.f32 %v1909, %v2342
        %2344 = vmatprep.mubr.bf16.mxu0 %v1853
        %2345 = vmatmul.mubr.bf16.gmra.mxu0 %v1852
        %v2346 = vpop.f32.mrf.mxu0
        %v2347 = vadd.f32 %v1905, %v2346
        %v2348 = vpop.f32.mrf.mxu0
        %v2349 = vadd.f32 %v1909, %v2348
        %v2350 = vpop.f32.mrf.mxu0
        %v2351 = vadd.f32 %v1905, %v2350
        %v2352 = vpop.f32.mrf.mxu0
        %v2353 = vadd.f32 %v1909, %v2352
        %2354 = vmatprep.mubr.bf16.mxu0 %v1855
        %2355 = vmatmul.mubr.bf16.gmra.mxu0 %v1854
        %v2356 = vpop.f32.mrf.mxu0
        %v2357 = vadd.f32 %v1905, %v2356
        %v2358 = vpop.f32.mrf.mxu0
        %v2359 = vadd.f32 %v1909, %v2358
        %v2360 = vpop.f32.mrf.mxu0
        %v2361 = vadd.f32 %v1905, %v2360
        %v2362 = vpop.f32.mrf.mxu0
        %v2363 = vadd.f32 %v1909, %v2362
        %2364 = vmatprep.mubr.bf16.mxu0 %v1857
        %2365 = vmatmul.mubr.bf16.gmra.mxu0 %v1856
        %v2366 = vpop.f32.mrf.mxu0
        %v2367 = vadd.f32 %v1905, %v2366
        %v2368 = vpop.f32.mrf.mxu0
        %v2369 = vadd.f32 %v1909, %v2368
        %v2370 = vpop.f32.mrf.mxu0
        %v2371 = vadd.f32 %v1905, %v2370
        %v2372 = vpop.f32.mrf.mxu0
        %v2373 = vadd.f32 %v1909, %v2372
        %2374 = vmatprep.mubr.bf16.mxu0 %v1859
        %2375 = vmatmul.mubr.bf16.gmra.mxu0 %v1858
        %v2376 = vpop.f32.mrf.mxu0
        %v2377 = vadd.f32 %v1905, %v2376
        %v2378 = vpop.f32.mrf.mxu0
        %v2379 = vadd.f32 %v1909, %v2378
        %v2380 = vpop.f32.mrf.mxu0
        %v2381 = vadd.f32 %v1905, %v2380
        %v2382 = vpop.f32.mrf.mxu0
        %v2383 = vadd.f32 %v1909, %v2382
        %2384 = vmatprep.mubr.bf16.mxu0 %v1861
        %2385 = vmatmul.mubr.bf16.gmra.mxu0 %v1860
        %v2386 = vpop.f32.mrf.mxu0
        %v2387 = vadd.f32 %v1905, %v2386
        %v2388 = vpop.f32.mrf.mxu0
        %v2389 = vadd.f32 %v1909, %v2388
        %v2390 = vpop.f32.mrf.mxu0
        %v2391 = vadd.f32 %v1905, %v2390
        %v2392 = vpop.f32.mrf.mxu0
        %v2393 = vadd.f32 %v1909, %v2392
        %2394 = vmatprep.mubr.bf16.mxu0 %v1863
        %2395 = vmatmul.mubr.bf16.gmra.mxu0 %v1862
        %v2396 = vpop.f32.mrf.mxu0
        %v2397 = vadd.f32 %v1905, %v2396
        %v2398 = vpop.f32.mrf.mxu0
        %v2399 = vadd.f32 %v1909, %v2398
        %v2400 = vpop.f32.mrf.mxu0
        %v2401 = vadd.f32 %v1905, %v2400
        %v2402 = vpop.f32.mrf.mxu0
        %v2403 = vadd.f32 %v1909, %v2402
        %2404 = vmatprep.mubr.bf16.mxu0 %v1865
        %2405 = vmatmul.mubr.bf16.gmra.mxu0 %v1864
        %v2406 = vpop.f32.mrf.mxu0
        %v2407 = vadd.f32 %v1905, %v2406
        %v2408 = vpop.f32.mrf.mxu0
        %v2409 = vadd.f32 %v1909, %v2408
        %v2410 = vpop.f32.mrf.mxu0
        %v2411 = vadd.f32 %v1905, %v2410
        %v2412 = vpop.f32.mrf.mxu0
        %v2413 = vadd.f32 %v1909, %v2412
        %2414 = vmatprep.mubr.bf16.mxu0 %v1867
        %2415 = vmatmul.mubr.bf16.gmra.mxu0 %v1866
        %v2416 = vpop.f32.mrf.mxu0
        %v2417 = vadd.f32 %v1905, %v2416
        %v2418 = vpop.f32.mrf.mxu0
        %v2419 = vadd.f32 %v1909, %v2418
        %v2420 = vpop.f32.mrf.mxu0
        %v2421 = vadd.f32 %v1905, %v2420
        %v2422 = vpop.f32.mrf.mxu0
        %v2423 = vadd.f32 %v1909, %v2422
        %2424 = vdwg.mxu0
        %v2425 = vmax.f32 %v2109, -20.0
        %v2426 = vmax.f32 %v2113, -20.0
        %v2427 = vmax.f32 %v2119, -20.0
        %v2428 = vmax.f32 %v2123, -20.0
        %v2429 = vmax.f32 %v2129, -20.0
        %v2430 = vmax.f32 %v2133, -20.0
        %v2431 = vmax.f32 %v2139, -20.0
        %v2432 = vmax.f32 %v2143, -20.0
        %v2433 = vmax.f32 %v2149, -20.0
        %v2434 = vmax.f32 %v2153, -20.0
        %v2435 = vmax.f32 %v2159, -20.0
        %v2436 = vmax.f32 %v2163, -20.0
        %v2437 = vmax.f32 %v2169, -20.0
        %v2438 = vmax.f32 %v2173, -20.0
        %v2439 = vmax.f32 %v2179, -20.0
        %v2440 = vmax.f32 %v2183, -20.0
        %v2441 = vmax.f32 %v2189, -20.0
        %v2442 = vmax.f32 %v2193, -20.0
        %v2443 = vmax.f32 %v2199, -20.0
        %v2444 = vmax.f32 %v2203, -20.0
        %v2445 = vmax.f32 %v2209, -20.0
        %v2446 = vmax.f32 %v2213, -20.0
        %v2447 = vmax.f32 %v2219, -20.0
        %v2448 = vmax.f32 %v2223, -20.0
        %v2449 = vmax.f32 %v2229, -20.0
        %v2450 = vmax.f32 %v2233, -20.0
        %v2451 = vmax.f32 %v2239, -20.0
        %v2452 = vmax.f32 %v2243, -20.0
        %v2453 = vmax.f32 %v2249, -20.0
        %v2454 = vmax.f32 %v2253, -20.0
        %v2455 = vmax.f32 %v2259, -20.0
        %v2456 = vmax.f32 %v2263, -20.0
        %v2457 = vmax.f32 %v2269, -20.0
        %v2458 = vmax.f32 %v2273, -20.0
        %v2459 = vmax.f32 %v2279, -20.0
        %v2460 = vmax.f32 %v2283, -20.0
        %v2461 = vmax.f32 %v2289, -20.0
        %v2462 = vmax.f32 %v2293, -20.0
        %v2463 = vmax.f32 %v2299, -20.0
        %v2464 = vmax.f32 %v2303, -20.0
        %v2465 = vmax.f32 %v2309, -20.0
        %v2466 = vmax.f32 %v2313, -20.0
        %v2467 = vmax.f32 %v2319, -20.0
        %v2468 = vmax.f32 %v2323, -20.0
        %v2469 = vmax.f32 %v2329, -20.0
        %v2470 = vmax.f32 %v2333, -20.0
        %v2471 = vmax.f32 %v2339, -20.0
        %v2472 = vmax.f32 %v2343, -20.0
        %v2473 = vmax.f32 %v2349, -20.0
        %v2474 = vmax.f32 %v2353, -20.0
        %v2475 = vmax.f32 %v2359, -20.0
        %v2476 = vmax.f32 %v2363, -20.0
        %v2477 = vmax.f32 %v2369, -20.0
        %v2478 = vmax.f32 %v2373, -20.0
        %v2479 = vmax.f32 %v2379, -20.0
        %v2480 = vmax.f32 %v2383, -20.0
        %v2481 = vmax.f32 %v2389, -20.0
        %v2482 = vmax.f32 %v2393, -20.0
        %v2483 = vmax.f32 %v2399, -20.0
        %v2484 = vmax.f32 %v2403, -20.0
        %v2485 = vmax.f32 %v2409, -20.0
        %v2486 = vmax.f32 %v2413, -20.0
        %v2487 = vmax.f32 %v2419, -20.0
        %v2488 = vmax.f32 %v2423, -20.0
        %v2489 = vmin.f32 %v2425, 2.0
        %v2490 = vmin.f32 %v2426, 2.0
        %v2491 = vmin.f32 %v2427, 2.0
        %v2492 = vmin.f32 %v2428, 2.0
        %v2493 = vmin.f32 %v2429, 2.0
        %v2494 = vmin.f32 %v2430, 2.0
        %v2495 = vmin.f32 %v2431, 2.0
        %v2496 = vmin.f32 %v2432, 2.0
        %v2497 = vmin.f32 %v2433, 2.0
        %v2498 = vmin.f32 %v2434, 2.0
        %v2499 = vmin.f32 %v2435, 2.0
        %v2500 = vmin.f32 %v2436, 2.0
        %v2501 = vmin.f32 %v2437, 2.0
        %v2502 = vmin.f32 %v2438, 2.0
        %v2503 = vmin.f32 %v2439, 2.0
        %v2504 = vmin.f32 %v2440, 2.0
        %v2505 = vmin.f32 %v2441, 2.0
        %v2506 = vmin.f32 %v2442, 2.0
        %v2507 = vmin.f32 %v2443, 2.0
        %v2508 = vmin.f32 %v2444, 2.0
        %v2509 = vmin.f32 %v2445, 2.0
        %v2510 = vmin.f32 %v2446, 2.0
        %v2511 = vmin.f32 %v2447, 2.0
        %v2512 = vmin.f32 %v2448, 2.0
        %v2513 = vmin.f32 %v2449, 2.0
        %v2514 = vmin.f32 %v2450, 2.0
        %v2515 = vmin.f32 %v2451, 2.0
        %v2516 = vmin.f32 %v2452, 2.0
        %v2517 = vmin.f32 %v2453, 2.0
        %v2518 = vmin.f32 %v2454, 2.0
        %v2519 = vmin.f32 %v2455, 2.0
        %v2520 = vmin.f32 %v2456, 2.0
        %v2521 = vmin.f32 %v2457, 2.0
        %v2522 = vmin.f32 %v2458, 2.0
        %v2523 = vmin.f32 %v2459, 2.0
        %v2524 = vmin.f32 %v2460, 2.0
        %v2525 = vmin.f32 %v2461, 2.0
        %v2526 = vmin.f32 %v2462, 2.0
        %v2527 = vmin.f32 %v2463, 2.0
        %v2528 = vmin.f32 %v2464, 2.0
        %v2529 = vmin.f32 %v2465, 2.0
        %v2530 = vmin.f32 %v2466, 2.0
        %v2531 = vmin.f32 %v2467, 2.0
        %v2532 = vmin.f32 %v2468, 2.0
        %v2533 = vmin.f32 %v2469, 2.0
        %v2534 = vmin.f32 %v2470, 2.0
        %v2535 = vmin.f32 %v2471, 2.0
        %v2536 = vmin.f32 %v2472, 2.0
        %v2537 = vmin.f32 %v2473, 2.0
        %v2538 = vmin.f32 %v2474, 2.0
        %v2539 = vmin.f32 %v2475, 2.0
        %v2540 = vmin.f32 %v2476, 2.0
        %v2541 = vmin.f32 %v2477, 2.0
        %v2542 = vmin.f32 %v2478, 2.0
        %v2543 = vmin.f32 %v2479, 2.0
        %v2544 = vmin.f32 %v2480, 2.0
        %v2545 = vmin.f32 %v2481, 2.0
        %v2546 = vmin.f32 %v2482, 2.0
        %v2547 = vmin.f32 %v2483, 2.0
        %v2548 = vmin.f32 %v2484, 2.0
        %v2549 = vmin.f32 %v2485, 2.0
        %v2550 = vmin.f32 %v2486, 2.0
        %v2551 = vmin.f32 %v2487, 2.0
        %v2552 = vmin.f32 %v2488, 2.0
        %v2553 = vmul.f32 %v2489, 1.442695
        %v2554 = vpow.pop %v2553
        %v2555 = vmul.f32 %v2490, 1.442695
        %v2556 = vpow.pop %v2555
        %v2557 = vmul.f32 %v2491, 1.442695
        %v2558 = vpow.pop %v2557
        %v2559 = vmul.f32 %v2492, 1.442695
        %v2560 = vpow.pop %v2559
        %v2561 = vmul.f32 %v2493, 1.442695
        %v2562 = vpow.pop %v2561
        %v2563 = vmul.f32 %v2494, 1.442695
        %v2564 = vpow.pop %v2563
        %v2565 = vmul.f32 %v2495, 1.442695
        %v2566 = vpow.pop %v2565
        %v2567 = vmul.f32 %v2496, 1.442695
        %v2568 = vpow.pop %v2567
        %v2569 = vmul.f32 %v2497, 1.442695
        %v2570 = vpow.pop %v2569
        %v2571 = vmul.f32 %v2498, 1.442695
        %v2572 = vpow.pop %v2571
        %v2573 = vmul.f32 %v2499, 1.442695
        %v2574 = vpow.pop %v2573
        %v2575 = vmul.f32 %v2500, 1.442695
        %v2576 = vpow.pop %v2575
        %v2577 = vmul.f32 %v2501, 1.442695
        %v2578 = vpow.pop %v2577
        %v2579 = vmul.f32 %v2502, 1.442695
        %v2580 = vpow.pop %v2579
        %v2581 = vmul.f32 %v2503, 1.442695
        %v2582 = vpow.pop %v2581
        %v2583 = vmul.f32 %v2504, 1.442695
        %v2584 = vpow.pop %v2583
        %v2585 = vmul.f32 %v2505, 1.442695
        %v2586 = vpow.pop %v2585
        %v2587 = vmul.f32 %v2506, 1.442695
        %v2588 = vpow.pop %v2587
        %v2589 = vmul.f32 %v2507, 1.442695
        %v2590 = vpow.pop %v2589
        %v2591 = vmul.f32 %v2508, 1.442695
        %v2592 = vpow.pop %v2591
        %v2593 = vmul.f32 %v2509, 1.442695
        %v2594 = vpow.pop %v2593
        %v2595 = vmul.f32 %v2510, 1.442695
        %v2596 = vpow.pop %v2595
        %v2597 = vmul.f32 %v2511, 1.442695
        %v2598 = vpow.pop %v2597
        %v2599 = vmul.f32 %v2512, 1.442695
        %v2600 = vpow.pop %v2599
        %v2601 = vmul.f32 %v2513, 1.442695
        %v2602 = vpow.pop %v2601
        %v2603 = vmul.f32 %v2514, 1.442695
        %v2604 = vpow.pop %v2603
        %v2605 = vmul.f32 %v2515, 1.442695
        %v2606 = vpow.pop %v2605
        %v2607 = vmul.f32 %v2516, 1.442695
        %v2608 = vpow.pop %v2607
        %v2609 = vmul.f32 %v2517, 1.442695
        %v2610 = vpow.pop %v2609
        %v2611 = vmul.f32 %v2518, 1.442695
        %v2612 = vpow.pop %v2611
        %v2613 = vmul.f32 %v2519, 1.442695
        %v2614 = vpow.pop %v2613
        %v2615 = vmul.f32 %v2520, 1.442695
        %v2616 = vpow.pop %v2615
        %v2617 = vmul.f32 %v2521, 1.442695
        %v2618 = vpow.pop %v2617
        %v2619 = vmul.f32 %v2522, 1.442695
        %v2620 = vpow.pop %v2619
        %v2621 = vmul.f32 %v2523, 1.442695
        %v2622 = vpow.pop %v2621
        %v2623 = vmul.f32 %v2524, 1.442695
        %v2624 = vpow.pop %v2623
        %v2625 = vmul.f32 %v2525, 1.442695
        %v2626 = vpow.pop %v2625
        %v2627 = vmul.f32 %v2526, 1.442695
        %v2628 = vpow.pop %v2627
        %v2629 = vmul.f32 %v2527, 1.442695
        %v2630 = vpow.pop %v2629
        %v2631 = vmul.f32 %v2528, 1.442695
        %v2632 = vpow.pop %v2631
        %v2633 = vmul.f32 %v2529, 1.442695
        %v2634 = vpow.pop %v2633
        %v2635 = vmul.f32 %v2530, 1.442695
        %v2636 = vpow.pop %v2635
        %v2637 = vmul.f32 %v2531, 1.442695
        %v2638 = vpow.pop %v2637
        %v2639 = vmul.f32 %v2532, 1.442695
        %v2640 = vpow.pop %v2639
        %v2641 = vmul.f32 %v2533, 1.442695
        %v2642 = vpow.pop %v2641
        %v2643 = vmul.f32 %v2534, 1.442695
        %v2644 = vpow.pop %v2643
        %v2645 = vmul.f32 %v2535, 1.442695
        %v2646 = vpow.pop %v2645
        %v2647 = vmul.f32 %v2536, 1.442695
        %v2648 = vpow.pop %v2647
        %v2649 = vmul.f32 %v2537, 1.442695
        %v2650 = vpow.pop %v2649
        %v2651 = vmul.f32 %v2538, 1.442695
        %v2652 = vpow.pop %v2651
        %v2653 = vmul.f32 %v2539, 1.442695
        %v2654 = vpow.pop %v2653
        %v2655 = vmul.f32 %v2540, 1.442695
        %v2656 = vpow.pop %v2655
        %v2657 = vmul.f32 %v2541, 1.442695
        %v2658 = vpow.pop %v2657
        %v2659 = vmul.f32 %v2542, 1.442695
        %v2660 = vpow.pop %v2659
        %v2661 = vmul.f32 %v2543, 1.442695
        %v2662 = vpow.pop %v2661
        %v2663 = vmul.f32 %v2544, 1.442695
        %v2664 = vpow.pop %v2663
        %v2665 = vmul.f32 %v2545, 1.442695
        %v2666 = vpow.pop %v2665
        %v2667 = vmul.f32 %v2546, 1.442695
        %v2668 = vpow.pop %v2667
        %v2669 = vmul.f32 %v2547, 1.442695
        %v2670 = vpow.pop %v2669
        %v2671 = vmul.f32 %v2548, 1.442695
        %v2672 = vpow.pop %v2671
        %v2673 = vmul.f32 %v2549, 1.442695
        %v2674 = vpow.pop %v2673
        %v2675 = vmul.f32 %v2550, 1.442695
        %v2676 = vpow.pop %v2675
        %v2677 = vmul.f32 %v2551, 1.442695
        %v2678 = vpow.pop %v2677
        %v2679 = vmul.f32 %v2552, 1.442695
        %v2680 = vpow.pop %v2679
        %v2681 = vld [vmem:[%s353] sm:$0xff]
        %v2682 = vld [vmem:[%s353 + $0x8] sm:$0xff]
        %v2683 = vld [vmem:[%s353 + $0x10] sm:$0xff]
        %v2684 = vld [vmem:[%s353 + $0x18] sm:$0xff]
        %v2685 = vld [vmem:[%s353 + $0x20] sm:$0xff]
        %v2686 = vld [vmem:[%s353 + $0x28] sm:$0xff]
        %v2687 = vld [vmem:[%s353 + $0x30] sm:$0xff]
        %v2688 = vld [vmem:[%s353 + $0x38] sm:$0xff]
        %v2689 = vld [vmem:[%s353 + $0x40] sm:$0xff]
        %v2690 = vld [vmem:[%s353 + $0x48] sm:$0xff]
        %v2691 = vld [vmem:[%s353 + $0x50] sm:$0xff]
        %v2692 = vld [vmem:[%s353 + $0x58] sm:$0xff]
        %v2693 = vld [vmem:[%s353 + $0x60] sm:$0xff]
        %v2694 = vld [vmem:[%s353 + $0x68] sm:$0xff]
        %v2695 = vld [vmem:[%s353 + $0x70] sm:$0xff]
        %v2696 = vld [vmem:[%s353 + $0x78] sm:$0xff]
        %v2697 = vld [vmem:[%s353 + $0x80] sm:$0xff]
        %v2698 = vld [vmem:[%s353 + $0x88] sm:$0xff]
        %v2699 = vld [vmem:[%s353 + $0x90] sm:$0xff]
        %v2700 = vld [vmem:[%s353 + $0x98] sm:$0xff]
        %v2701 = vld [vmem:[%s353 + $0xa0] sm:$0xff]
        %v2702 = vld [vmem:[%s353 + $0xa8] sm:$0xff]
        %v2703 = vld [vmem:[%s353 + $0xb0] sm:$0xff]
        %v2704 = vld [vmem:[%s353 + $0xb8] sm:$0xff]
        %v2705 = vld [vmem:[%s353 + $0xc0] sm:$0xff]
        %v2706 = vld [vmem:[%s353 + $0xc8] sm:$0xff]
        %v2707 = vld [vmem:[%s353 + $0xd0] sm:$0xff]
        %v2708 = vld [vmem:[%s353 + $0xd8] sm:$0xff]
        %v2709 = vld [vmem:[%s353 + $0xe0] sm:$0xff]
        %v2710 = vld [vmem:[%s353 + $0xe8] sm:$0xff]
        %v2711 = vld [vmem:[%s353 + $0xf0] sm:$0xff]
        %v2712 = vld [vmem:[%s353 + $0xf8] sm:$0xff]
        %v2713 = vld [vmem:[%s353 + $0x100] sm:$0xff]
        %v2714 = vld [vmem:[%s353 + $0x108] sm:$0xff]
        %v2715 = vld [vmem:[%s353 + $0x110] sm:$0xff]
        %v2716 = vld [vmem:[%s353 + $0x118] sm:$0xff]
        %v2717 = vld [vmem:[%s353 + $0x120] sm:$0xff]
        %v2718 = vld [vmem:[%s353 + $0x128] sm:$0xff]
        %v2719 = vld [vmem:[%s353 + $0x130] sm:$0xff]
        %v2720 = vld [vmem:[%s353 + $0x138] sm:$0xff]
        %v2721 = vld [vmem:[%s353 + $0x140] sm:$0xff]
        %v2722 = vld [vmem:[%s353 + $0x148] sm:$0xff]
        %v2723 = vld [vmem:[%s353 + $0x150] sm:$0xff]
        %v2724 = vld [vmem:[%s353 + $0x158] sm:$0xff]
        %v2725 = vld [vmem:[%s353 + $0x160] sm:$0xff]
        %v2726 = vld [vmem:[%s353 + $0x168] sm:$0xff]
        %v2727 = vld [vmem:[%s353 + $0x170] sm:$0xff]
        %v2728 = vld [vmem:[%s353 + $0x178] sm:$0xff]
        %v2729 = vld [vmem:[%s353 + $0x180] sm:$0xff]
        %v2730 = vld [vmem:[%s353 + $0x188] sm:$0xff]
        %v2731 = vld [vmem:[%s353 + $0x190] sm:$0xff]
        %v2732 = vld [vmem:[%s353 + $0x198] sm:$0xff]
        %v2733 = vld [vmem:[%s353 + $0x1a0] sm:$0xff]
        %v2734 = vld [vmem:[%s353 + $0x1a8] sm:$0xff]
        %v2735 = vld [vmem:[%s353 + $0x1b0] sm:$0xff]
        %v2736 = vld [vmem:[%s353 + $0x1b8] sm:$0xff]
        %v2737 = vld [vmem:[%s353 + $0x1c0] sm:$0xff]
        %v2738 = vld [vmem:[%s353 + $0x1c8] sm:$0xff]
        %v2739 = vld [vmem:[%s353 + $0x1d0] sm:$0xff]
        %v2740 = vld [vmem:[%s353 + $0x1d8] sm:$0xff]
        %v2741 = vld [vmem:[%s353 + $0x1e0] sm:$0xff]
        %v2742 = vld [vmem:[%s353 + $0x1e8] sm:$0xff]
        %v2743 = vld [vmem:[%s353 + $0x1f0] sm:$0xff]
        %v2744 = vld [vmem:[%s353 + $0x1f8] sm:$0xff]
        %v2745 = vld [vmem:[%s2] sm:$0xff]
        %vm2746 = vcmask 64512
        %v2748 = vsel %vm2746, %v2681, 0
        %v2751 = vsel %vm2746, %v2682, 0
        %v2754 = vsel %vm2746, %v2683, 0
        %v2757 = vsel %vm2746, %v2684, 0
        %v2760 = vsel %vm2746, %v2685, 0
        %v2763 = vsel %vm2746, %v2686, 0
        %v2766 = vsel %vm2746, %v2687, 0
        %v2769 = vsel %vm2746, %v2688, 0
        %v2772 = vsel %vm2746, %v2689, 0
        %v2775 = vsel %vm2746, %v2690, 0
        %v2778 = vsel %vm2746, %v2691, 0
        %v2781 = vsel %vm2746, %v2692, 0
        %v2784 = vsel %vm2746, %v2693, 0
        %v2787 = vsel %vm2746, %v2694, 0
        %v2790 = vsel %vm2746, %v2695, 0
        %v2793 = vsel %vm2746, %v2696, 0
        %v2796 = vsel %vm2746, %v2697, 0
        %v2799 = vsel %vm2746, %v2698, 0
        %v2802 = vsel %vm2746, %v2699, 0
        %v2805 = vsel %vm2746, %v2700, 0
        %v2808 = vsel %vm2746, %v2701, 0
        %v2811 = vsel %vm2746, %v2702, 0
        %v2814 = vsel %vm2746, %v2703, 0
        %v2817 = vsel %vm2746, %v2704, 0
        %v2820 = vsel %vm2746, %v2705, 0
        %v2823 = vsel %vm2746, %v2706, 0
        %v2826 = vsel %vm2746, %v2707, 0
        %v2829 = vsel %vm2746, %v2708, 0
        %v2832 = vsel %vm2746, %v2709, 0
        %v2835 = vsel %vm2746, %v2710, 0
        %v2838 = vsel %vm2746, %v2711, 0
        %v2841 = vsel %vm2746, %v2712, 0
        %v2844 = vsel %vm2746, %v2713, 0
        %v2847 = vsel %vm2746, %v2714, 0
        %v2850 = vsel %vm2746, %v2715, 0
        %v2853 = vsel %vm2746, %v2716, 0
        %v2856 = vsel %vm2746, %v2717, 0
        %v2859 = vsel %vm2746, %v2718, 0
        %v2862 = vsel %vm2746, %v2719, 0
        %v2865 = vsel %vm2746, %v2720, 0
        %v2868 = vsel %vm2746, %v2721, 0
        %v2871 = vsel %vm2746, %v2722, 0
        %v2874 = vsel %vm2746, %v2723, 0
        %v2877 = vsel %vm2746, %v2724, 0
        %v2880 = vsel %vm2746, %v2725, 0
        %v2883 = vsel %vm2746, %v2726, 0
        %v2886 = vsel %vm2746, %v2727, 0
        %v2889 = vsel %vm2746, %v2728, 0
        %v2892 = vsel %vm2746, %v2729, 0
        %v2895 = vsel %vm2746, %v2730, 0
        %v2898 = vsel %vm2746, %v2731, 0
        %v2901 = vsel %vm2746, %v2732, 0
        %v2904 = vsel %vm2746, %v2733, 0
        %v2907 = vsel %vm2746, %v2734, 0
        %v2910 = vsel %vm2746, %v2735, 0
        %v2913 = vsel %vm2746, %v2736, 0
        %v2916 = vsel %vm2746, %v2737, 0
        %v2919 = vsel %vm2746, %v2738, 0
        %v2922 = vsel %vm2746, %v2739, 0
        %v2925 = vsel %vm2746, %v2740, 0
        %v2928 = vsel %vm2746, %v2741, 0
        %v2931 = vsel %vm2746, %v2742, 0
        %v2934 = vsel %vm2746, %v2743, 0
        %v2937 = vsel %vm2746, %v2744, 0
        %2939 = vmatprep.subr.mxu0 0.0
        %2940 = vmatpush1.msra.mxu0 0.0
        %2941 = vmatprep.subr.mxu0 0.0
        %2942 = vmatpush1.msra.mxu0 0.0
        %2943 = vmatprep.subr.mxu0 0.0
        %2944 = vmatpush1.msra.mxu0 0.0
        %2945 = vmatprep.subr.mxu0 0.0
        %2946 = vmatpush1.msra.mxu0 0.0
        %2947 = vmatprep.subr.mxu0 0.0
        %2948 = vmatpush1.msra.mxu0 0.0
        %2949 = vmatprep.subr.mxu0 0.0
        %2950 = vmatpush1.msra.mxu0 0.0
        %2951 = vmatprep.subr.mxu0 0.0
        %2952 = vmatpush1.msra.mxu0 0.0
        %2953 = vmatprep.subr.mxu0 0.0
        %2954 = vmatpush1.msra.mxu0 0.0
        %2955 = vmatprep.subr.mxu0 0.0
        %2956 = vmatpush1.msra.mxu0 0.0
        %2957 = vmatprep.subr.mxu0 0.0
        %2958 = vmatpush1.msra.mxu0 0.0
        %2959 = vmatprep.subr.mxu0 0.0
        %2960 = vmatpush1.msra.mxu0 0.0
        %2961 = vmatprep.subr.mxu0 0.0
        %2962 = vmatpush1.msra.mxu0 0.0
        %2963 = vmatprep.subr.mxu0 0.0
        %2964 = vmatpush1.msra.mxu0 0.0
        %2965 = vmatprep.subr.mxu0 0.0
        %2966 = vmatpush1.msra.mxu0 0.0
        %2967 = vmatprep.subr.mxu0 0.0
        %2968 = vmatpush1.msra.mxu0 0.0
        %2969 = vmatprep.subr.mxu0 0.0
        %2970 = vmatpush1.msra.mxu0 %v2745
        %2971 = vmatprep.subr.mxu0 0.0
        %2972 = vmatpush2.msra.mxu0 0.0
        %2973 = vmatprep.subr.mxu0 0.0
        %2974 = vmatpush2.msra.mxu0 0.0
        %2975 = vmatprep.subr.mxu0 0.0
        %2976 = vmatpush2.msra.mxu0 0.0
        %2977 = vmatprep.subr.mxu0 0.0
        %2978 = vmatpush2.msra.mxu0 0.0
        %2979 = vmatprep.subr.mxu0 0.0
        %2980 = vmatpush2.msra.mxu0 0.0
        %2981 = vmatprep.subr.mxu0 0.0
        %2982 = vmatpush2.msra.mxu0 0.0
        %2983 = vmatprep.subr.mxu0 0.0
        %2984 = vmatpush2.msra.mxu0 0.0
        %2985 = vmatprep.subr.mxu0 0.0
        %2986 = vmatpush2.msra.mxu0 0.0
        %2987 = vmatprep.subr.mxu0 0.0
        %2988 = vmatpush2.msra.mxu0 0.0
        %2989 = vmatprep.subr.mxu0 0.0
        %2990 = vmatpush2.msra.mxu0 0.0
        %2991 = vmatprep.subr.mxu0 0.0
        %2992 = vmatpush2.msra.mxu0 0.0
        %2993 = vmatprep.subr.mxu0 0.0
        %2994 = vmatpush2.msra.mxu0 0.0
        %2995 = vmatprep.subr.mxu0 0.0
        %2996 = vmatpush2.msra.mxu0 0.0
        %2997 = vmatprep.subr.mxu0 0.0
        %2998 = vmatpush2.msra.mxu0 0.0
        %2999 = vmatprep.subr.mxu0 0.0
        %3000 = vmatpush2.msra.mxu0 0.0
        %3001 = vmatprep.subr.mxu0 0.0
        %3002 = vmatpush2.msra.mxu0 0.0
        %3003 = vmatprep.mubr.f32.mxu0 0.0
        %3004 = vmatmul.mubr.f32.gmra.mxu0 %v2748
        %v3005 = vpop.f32.mrf.mxu0
        %v3006 = vadd.f32 0.0, %v3005
        %v3007 = vpop.f32.mrf.mxu0
        %3008 = vmatprep.mubr.f32.mxu0 0.0
        %3009 = vmatmul.mubr.f32.gmra.mxu0 %v2751
        %v3010 = vpop.f32.mrf.mxu0
        %v3011 = vadd.f32 0.0, %v3010
        %v3012 = vpop.f32.mrf.mxu0
        %3013 = vmatprep.mubr.f32.mxu0 0.0
        %3014 = vmatmul.mubr.f32.gmra.mxu0 %v2754
        %v3015 = vpop.f32.mrf.mxu0
        %v3016 = vadd.f32 0.0, %v3015
        %v3017 = vpop.f32.mrf.mxu0
        %3018 = vmatprep.mubr.f32.mxu0 0.0
        %3019 = vmatmul.mubr.f32.gmra.mxu0 %v2757
        %v3020 = vpop.f32.mrf.mxu0
        %v3021 = vadd.f32 0.0, %v3020
        %v3022 = vpop.f32.mrf.mxu0
        %3023 = vmatprep.mubr.f32.mxu0 0.0
        %3024 = vmatmul.mubr.f32.gmra.mxu0 %v2760
        %v3025 = vpop.f32.mrf.mxu0
        %v3026 = vadd.f32 0.0, %v3025
        %v3027 = vpop.f32.mrf.mxu0
        %3028 = vmatprep.mubr.f32.mxu0 0.0
        %3029 = vmatmul.mubr.f32.gmra.mxu0 %v2763
        %v3030 = vpop.f32.mrf.mxu0
        %v3031 = vadd.f32 0.0, %v3030
        %v3032 = vpop.f32.mrf.mxu0
        %3033 = vmatprep.mubr.f32.mxu0 0.0
        %3034 = vmatmul.mubr.f32.gmra.mxu0 %v2766
        %v3035 = vpop.f32.mrf.mxu0
        %v3036 = vadd.f32 0.0, %v3035
        %v3037 = vpop.f32.mrf.mxu0
        %3038 = vmatprep.mubr.f32.mxu0 0.0
        %3039 = vmatmul.mubr.f32.gmra.mxu0 %v2769
        %v3040 = vpop.f32.mrf.mxu0
        %v3041 = vadd.f32 0.0, %v3040
        %v3042 = vpop.f32.mrf.mxu0
        %3043 = vmatprep.mubr.f32.mxu0 0.0
        %3044 = vmatmul.mubr.f32.gmra.mxu0 %v2772
        %v3045 = vpop.f32.mrf.mxu0
        %v3046 = vadd.f32 0.0, %v3045
        %v3047 = vpop.f32.mrf.mxu0
        %3048 = vmatprep.mubr.f32.mxu0 0.0
        %3049 = vmatmul.mubr.f32.gmra.mxu0 %v2775
        %v3050 = vpop.f32.mrf.mxu0
        %v3051 = vadd.f32 0.0, %v3050
        %v3052 = vpop.f32.mrf.mxu0
        %3053 = vmatprep.mubr.f32.mxu0 0.0
        %3054 = vmatmul.mubr.f32.gmra.mxu0 %v2778
        %v3055 = vpop.f32.mrf.mxu0
        %v3056 = vadd.f32 0.0, %v3055
        %v3057 = vpop.f32.mrf.mxu0
        %3058 = vmatprep.mubr.f32.mxu0 0.0
        %3059 = vmatmul.mubr.f32.gmra.mxu0 %v2781
        %v3060 = vpop.f32.mrf.mxu0
        %v3061 = vadd.f32 0.0, %v3060
        %v3062 = vpop.f32.mrf.mxu0
        %3063 = vmatprep.mubr.f32.mxu0 0.0
        %3064 = vmatmul.mubr.f32.gmra.mxu0 %v2784
        %v3065 = vpop.f32.mrf.mxu0
        %v3066 = vadd.f32 0.0, %v3065
        %v3067 = vpop.f32.mrf.mxu0
        %3068 = vmatprep.mubr.f32.mxu0 0.0
        %3069 = vmatmul.mubr.f32.gmra.mxu0 %v2787
        %v3070 = vpop.f32.mrf.mxu0
        %v3071 = vadd.f32 0.0, %v3070
        %v3072 = vpop.f32.mrf.mxu0
        %3073 = vmatprep.mubr.f32.mxu0 0.0
        %3074 = vmatmul.mubr.f32.gmra.mxu0 %v2790
        %v3075 = vpop.f32.mrf.mxu0
        %v3076 = vadd.f32 0.0, %v3075
        %v3077 = vpop.f32.mrf.mxu0
        %3078 = vmatprep.mubr.f32.mxu0 0.0
        %3079 = vmatmul.mubr.f32.gmra.mxu0 %v2793
        %v3080 = vpop.f32.mrf.mxu0
        %v3081 = vadd.f32 0.0, %v3080
        %v3082 = vpop.f32.mrf.mxu0
        %3083 = vmatprep.mubr.f32.mxu0 0.0
        %3084 = vmatmul.mubr.f32.gmra.mxu0 %v2796
        %v3085 = vpop.f32.mrf.mxu0
        %v3086 = vadd.f32 0.0, %v3085
        %v3087 = vpop.f32.mrf.mxu0
        %3088 = vmatprep.mubr.f32.mxu0 0.0
        %3089 = vmatmul.mubr.f32.gmra.mxu0 %v2799
        %v3090 = vpop.f32.mrf.mxu0
        %v3091 = vadd.f32 0.0, %v3090
        %v3092 = vpop.f32.mrf.mxu0
        %3093 = vmatprep.mubr.f32.mxu0 0.0
        %3094 = vmatmul.mubr.f32.gmra.mxu0 %v2802
        %v3095 = vpop.f32.mrf.mxu0
        %v3096 = vadd.f32 0.0, %v3095
        %v3097 = vpop.f32.mrf.mxu0
        %3098 = vmatprep.mubr.f32.mxu0 0.0
        %3099 = vmatmul.mubr.f32.gmra.mxu0 %v2805
        %v3100 = vpop.f32.mrf.mxu0
        %v3101 = vadd.f32 0.0, %v3100
        %v3102 = vpop.f32.mrf.mxu0
        %3103 = vmatprep.mubr.f32.mxu0 0.0
        %3104 = vmatmul.mubr.f32.gmra.mxu0 %v2808
        %v3105 = vpop.f32.mrf.mxu0
        %v3106 = vadd.f32 0.0, %v3105
        %v3107 = vpop.f32.mrf.mxu0
        %3108 = vmatprep.mubr.f32.mxu0 0.0
        %3109 = vmatmul.mubr.f32.gmra.mxu0 %v2811
        %v3110 = vpop.f32.mrf.mxu0
        %v3111 = vadd.f32 0.0, %v3110
        %v3112 = vpop.f32.mrf.mxu0
        %3113 = vmatprep.mubr.f32.mxu0 0.0
        %3114 = vmatmul.mubr.f32.gmra.mxu0 %v2814
        %v3115 = vpop.f32.mrf.mxu0
        %v3116 = vadd.f32 0.0, %v3115
        %v3117 = vpop.f32.mrf.mxu0
        %3118 = vmatprep.mubr.f32.mxu0 0.0
        %3119 = vmatmul.mubr.f32.gmra.mxu0 %v2817
        %v3120 = vpop.f32.mrf.mxu0
        %v3121 = vadd.f32 0.0, %v3120
        %v3122 = vpop.f32.mrf.mxu0
        %3123 = vmatprep.mubr.f32.mxu0 0.0
        %3124 = vmatmul.mubr.f32.gmra.mxu0 %v2820
        %v3125 = vpop.f32.mrf.mxu0
        %v3126 = vadd.f32 0.0, %v3125
        %v3127 = vpop.f32.mrf.mxu0
        %3128 = vmatprep.mubr.f32.mxu0 0.0
        %3129 = vmatmul.mubr.f32.gmra.mxu0 %v2823
        %v3130 = vpop.f32.mrf.mxu0
        %v3131 = vadd.f32 0.0, %v3130
        %v3132 = vpop.f32.mrf.mxu0
        %3133 = vmatprep.mubr.f32.mxu0 0.0
        %3134 = vmatmul.mubr.f32.gmra.mxu0 %v2826
        %v3135 = vpop.f32.mrf.mxu0
        %v3136 = vadd.f32 0.0, %v3135
        %v3137 = vpop.f32.mrf.mxu0
        %3138 = vmatprep.mubr.f32.mxu0 0.0
        %3139 = vmatmul.mubr.f32.gmra.mxu0 %v2829
        %v3140 = vpop.f32.mrf.mxu0
        %v3141 = vadd.f32 0.0, %v3140
        %v3142 = vpop.f32.mrf.mxu0
        %3143 = vmatprep.mubr.f32.mxu0 0.0
        %3144 = vmatmul.mubr.f32.gmra.mxu0 %v2832
        %v3145 = vpop.f32.mrf.mxu0
        %v3146 = vadd.f32 0.0, %v3145
        %v3147 = vpop.f32.mrf.mxu0
        %3148 = vmatprep.mubr.f32.mxu0 0.0
        %3149 = vmatmul.mubr.f32.gmra.mxu0 %v2835
        %v3150 = vpop.f32.mrf.mxu0
        %v3151 = vadd.f32 0.0, %v3150
        %v3152 = vpop.f32.mrf.mxu0
        %3153 = vmatprep.mubr.f32.mxu0 0.0
        %3154 = vmatmul.mubr.f32.gmra.mxu0 %v2838
        %v3155 = vpop.f32.mrf.mxu0
        %v3156 = vadd.f32 0.0, %v3155
        %v3157 = vpop.f32.mrf.mxu0
        %3158 = vmatprep.mubr.f32.mxu0 0.0
        %3159 = vmatmul.mubr.f32.gmra.mxu0 %v2841
        %v3160 = vpop.f32.mrf.mxu0
        %v3161 = vadd.f32 0.0, %v3160
        %v3162 = vpop.f32.mrf.mxu0
        %3163 = vmatprep.mubr.f32.mxu0 0.0
        %3164 = vmatmul.mubr.f32.gmra.mxu0 %v2844
        %v3165 = vpop.f32.mrf.mxu0
        %v3166 = vadd.f32 0.0, %v3165
        %v3167 = vpop.f32.mrf.mxu0
        %3168 = vmatprep.mubr.f32.mxu0 0.0
        %3169 = vmatmul.mubr.f32.gmra.mxu0 %v2847
        %v3170 = vpop.f32.mrf.mxu0
        %v3171 = vadd.f32 0.0, %v3170
        %v3172 = vpop.f32.mrf.mxu0
        %3173 = vmatprep.mubr.f32.mxu0 0.0
        %3174 = vmatmul.mubr.f32.gmra.mxu0 %v2850
        %v3175 = vpop.f32.mrf.mxu0
        %v3176 = vadd.f32 0.0, %v3175
        %v3177 = vpop.f32.mrf.mxu0
        %3178 = vmatprep.mubr.f32.mxu0 0.0
        %3179 = vmatmul.mubr.f32.gmra.mxu0 %v2853
        %v3180 = vpop.f32.mrf.mxu0
        %v3181 = vadd.f32 0.0, %v3180
        %v3182 = vpop.f32.mrf.mxu0
        %3183 = vmatprep.mubr.f32.mxu0 0.0
        %3184 = vmatmul.mubr.f32.gmra.mxu0 %v2856
        %v3185 = vpop.f32.mrf.mxu0
        %v3186 = vadd.f32 0.0, %v3185
        %v3187 = vpop.f32.mrf.mxu0
        %3188 = vmatprep.mubr.f32.mxu0 0.0
        %3189 = vmatmul.mubr.f32.gmra.mxu0 %v2859
        %v3190 = vpop.f32.mrf.mxu0
        %v3191 = vadd.f32 0.0, %v3190
        %v3192 = vpop.f32.mrf.mxu0
        %3193 = vmatprep.mubr.f32.mxu0 0.0
        %3194 = vmatmul.mubr.f32.gmra.mxu0 %v2862
        %v3195 = vpop.f32.mrf.mxu0
        %v3196 = vadd.f32 0.0, %v3195
        %v3197 = vpop.f32.mrf.mxu0
        %3198 = vmatprep.mubr.f32.mxu0 0.0
        %3199 = vmatmul.mubr.f32.gmra.mxu0 %v2865
        %v3200 = vpop.f32.mrf.mxu0
        %v3201 = vadd.f32 0.0, %v3200
        %v3202 = vpop.f32.mrf.mxu0
        %3203 = vmatprep.mubr.f32.mxu0 0.0
        %3204 = vmatmul.mubr.f32.gmra.mxu0 %v2868
        %v3205 = vpop.f32.mrf.mxu0
        %v3206 = vadd.f32 0.0, %v3205
        %v3207 = vpop.f32.mrf.mxu0
        %3208 = vmatprep.mubr.f32.mxu0 0.0
        %3209 = vmatmul.mubr.f32.gmra.mxu0 %v2871
        %v3210 = vpop.f32.mrf.mxu0
        %v3211 = vadd.f32 0.0, %v3210
        %v3212 = vpop.f32.mrf.mxu0
        %3213 = vmatprep.mubr.f32.mxu0 0.0
        %3214 = vmatmul.mubr.f32.gmra.mxu0 %v2874
        %v3215 = vpop.f32.mrf.mxu0
        %v3216 = vadd.f32 0.0, %v3215
        %v3217 = vpop.f32.mrf.mxu0
        %3218 = vmatprep.mubr.f32.mxu0 0.0
        %3219 = vmatmul.mubr.f32.gmra.mxu0 %v2877
        %v3220 = vpop.f32.mrf.mxu0
        %v3221 = vadd.f32 0.0, %v3220
        %v3222 = vpop.f32.mrf.mxu0
        %3223 = vmatprep.mubr.f32.mxu0 0.0
        %3224 = vmatmul.mubr.f32.gmra.mxu0 %v2880
        %v3225 = vpop.f32.mrf.mxu0
        %v3226 = vadd.f32 0.0, %v3225
        %v3227 = vpop.f32.mrf.mxu0
        %3228 = vmatprep.mubr.f32.mxu0 0.0
        %3229 = vmatmul.mubr.f32.gmra.mxu0 %v2883
        %v3230 = vpop.f32.mrf.mxu0
        %v3231 = vadd.f32 0.0, %v3230
        %v3232 = vpop.f32.mrf.mxu0
        %3233 = vmatprep.mubr.f32.mxu0 0.0
        %3234 = vmatmul.mubr.f32.gmra.mxu0 %v2886
        %v3235 = vpop.f32.mrf.mxu0
        %v3236 = vadd.f32 0.0, %v3235
        %v3237 = vpop.f32.mrf.mxu0
        %3238 = vmatprep.mubr.f32.mxu0 0.0
        %3239 = vmatmul.mubr.f32.gmra.mxu0 %v2889
        %v3240 = vpop.f32.mrf.mxu0
        %v3241 = vadd.f32 0.0, %v3240
        %v3242 = vpop.f32.mrf.mxu0
        %3243 = vmatprep.mubr.f32.mxu0 0.0
        %3244 = vmatmul.mubr.f32.gmra.mxu0 %v2892
        %v3245 = vpop.f32.mrf.mxu0
        %v3246 = vadd.f32 0.0, %v3245
        %v3247 = vpop.f32.mrf.mxu0
        %3248 = vmatprep.mubr.f32.mxu0 0.0
        %3249 = vmatmul.mubr.f32.gmra.mxu0 %v2895
        %v3250 = vpop.f32.mrf.mxu0
        %v3251 = vadd.f32 0.0, %v3250
        %v3252 = vpop.f32.mrf.mxu0
        %3253 = vmatprep.mubr.f32.mxu0 0.0
        %3254 = vmatmul.mubr.f32.gmra.mxu0 %v2898
        %v3255 = vpop.f32.mrf.mxu0
        %v3256 = vadd.f32 0.0, %v3255
        %v3257 = vpop.f32.mrf.mxu0
        %3258 = vmatprep.mubr.f32.mxu0 0.0
        %3259 = vmatmul.mubr.f32.gmra.mxu0 %v2901
        %v3260 = vpop.f32.mrf.mxu0
        %v3261 = vadd.f32 0.0, %v3260
        %v3262 = vpop.f32.mrf.mxu0
        %3263 = vmatprep.mubr.f32.mxu0 0.0
        %3264 = vmatmul.mubr.f32.gmra.mxu0 %v2904
        %v3265 = vpop.f32.mrf.mxu0
        %v3266 = vadd.f32 0.0, %v3265
        %v3267 = vpop.f32.mrf.mxu0
        %3268 = vmatprep.mubr.f32.mxu0 0.0
        %3269 = vmatmul.mubr.f32.gmra.mxu0 %v2907
        %v3270 = vpop.f32.mrf.mxu0
        %v3271 = vadd.f32 0.0, %v3270
        %v3272 = vpop.f32.mrf.mxu0
        %3273 = vmatprep.mubr.f32.mxu0 0.0
        %3274 = vmatmul.mubr.f32.gmra.mxu0 %v2910
        %v3275 = vpop.f32.mrf.mxu0
        %v3276 = vadd.f32 0.0, %v3275
        %v3277 = vpop.f32.mrf.mxu0
        %3278 = vmatprep.mubr.f32.mxu0 0.0
        %3279 = vmatmul.mubr.f32.gmra.mxu0 %v2913
        %v3280 = vpop.f32.mrf.mxu0
        %v3281 = vadd.f32 0.0, %v3280
        %v3282 = vpop.f32.mrf.mxu0
        %3283 = vmatprep.mubr.f32.mxu0 0.0
        %3284 = vmatmul.mubr.f32.gmra.mxu0 %v2916
        %v3285 = vpop.f32.mrf.mxu0
        %v3286 = vadd.f32 0.0, %v3285
        %v3287 = vpop.f32.mrf.mxu0
        %3288 = vmatprep.mubr.f32.mxu0 0.0
        %3289 = vmatmul.mubr.f32.gmra.mxu0 %v2919
        %v3290 = vpop.f32.mrf.mxu0
        %v3291 = vadd.f32 0.0, %v3290
        %v3292 = vpop.f32.mrf.mxu0
        %3293 = vmatprep.mubr.f32.mxu0 0.0
        %3294 = vmatmul.mubr.f32.gmra.mxu0 %v2922
        %v3295 = vpop.f32.mrf.mxu0
        %v3296 = vadd.f32 0.0, %v3295
        %v3297 = vpop.f32.mrf.mxu0
        %3298 = vmatprep.mubr.f32.mxu0 0.0
        %3299 = vmatmul.mubr.f32.gmra.mxu0 %v2925
        %v3300 = vpop.f32.mrf.mxu0
        %v3301 = vadd.f32 0.0, %v3300
        %v3302 = vpop.f32.mrf.mxu0
        %3303 = vmatprep.mubr.f32.mxu0 0.0
        %3304 = vmatmul.mubr.f32.gmra.mxu0 %v2928
        %v3305 = vpop.f32.mrf.mxu0
        %v3306 = vadd.f32 0.0, %v3305
        %v3307 = vpop.f32.mrf.mxu0
        %3308 = vmatprep.mubr.f32.mxu0 0.0
        %3309 = vmatmul.mubr.f32.gmra.mxu0 %v2931
        %v3310 = vpop.f32.mrf.mxu0
        %v3311 = vadd.f32 0.0, %v3310
        %v3312 = vpop.f32.mrf.mxu0
        %3313 = vmatprep.mubr.f32.mxu0 0.0
        %3314 = vmatmul.mubr.f32.gmra.mxu0 %v2934
        %v3315 = vpop.f32.mrf.mxu0
        %v3316 = vadd.f32 0.0, %v3315
        %v3317 = vpop.f32.mrf.mxu0
        %3318 = vmatprep.mubr.f32.mxu0 0.0
        %3319 = vmatmul.mubr.f32.gmra.mxu0 %v2937
        %v3320 = vpop.f32.mrf.mxu0
        %v3321 = vadd.f32 0.0, %v3320
        %v3322 = vpop.f32.mrf.mxu0
        %3323 = vdwg.mxu0
        %v3324 = vmul.f32 %v2554, %v3006
        %v3325 = vmul.f32 %v2556, %v3011
        %v3326 = vmul.f32 %v2558, %v3016
        %v3327 = vmul.f32 %v2560, %v3021
        %v3328 = vmul.f32 %v2562, %v3026
        %v3329 = vmul.f32 %v2564, %v3031
        %v3330 = vmul.f32 %v2566, %v3036
        %v3331 = vmul.f32 %v2568, %v3041
        %v3332 = vmul.f32 %v2570, %v3046
        %v3333 = vmul.f32 %v2572, %v3051
        %v3334 = vmul.f32 %v2574, %v3056
        %v3335 = vmul.f32 %v2576, %v3061
        %v3336 = vmul.f32 %v2578, %v3066
        %v3337 = vmul.f32 %v2580, %v3071
        %v3338 = vmul.f32 %v2582, %v3076
        %v3339 = vmul.f32 %v2584, %v3081
        %v3340 = vmul.f32 %v2586, %v3086
        %v3341 = vmul.f32 %v2588, %v3091
        %v3342 = vmul.f32 %v2590, %v3096
        %v3343 = vmul.f32 %v2592, %v3101
        %v3344 = vmul.f32 %v2594, %v3106
        %v3345 = vmul.f32 %v2596, %v3111
        %v3346 = vmul.f32 %v2598, %v3116
        %v3347 = vmul.f32 %v2600, %v3121
        %v3348 = vmul.f32 %v2602, %v3126
        %v3349 = vmul.f32 %v2604, %v3131
        %v3350 = vmul.f32 %v2606, %v3136
        %v3351 = vmul.f32 %v2608, %v3141
        %v3352 = vmul.f32 %v2610, %v3146
        %v3353 = vmul.f32 %v2612, %v3151
        %v3354 = vmul.f32 %v2614, %v3156
        %v3355 = vmul.f32 %v2616, %v3161
        %v3356 = vmul.f32 %v2618, %v3166
        %v3357 = vmul.f32 %v2620, %v3171
        %v3358 = vmul.f32 %v2622, %v3176
        %v3359 = vmul.f32 %v2624, %v3181
        %v3360 = vmul.f32 %v2626, %v3186
        %v3361 = vmul.f32 %v2628, %v3191
        %v3362 = vmul.f32 %v2630, %v3196
        %v3363 = vmul.f32 %v2632, %v3201
        %v3364 = vmul.f32 %v2634, %v3206
        %v3365 = vmul.f32 %v2636, %v3211
        %v3366 = vmul.f32 %v2638, %v3216
        %v3367 = vmul.f32 %v2640, %v3221
        %v3368 = vmul.f32 %v2642, %v3226
        %v3369 = vmul.f32 %v2644, %v3231
        %v3370 = vmul.f32 %v2646, %v3236
        %v3371 = vmul.f32 %v2648, %v3241
        %v3372 = vmul.f32 %v2650, %v3246
        %v3373 = vmul.f32 %v2652, %v3251
        %v3374 = vmul.f32 %v2654, %v3256
        %v3375 = vmul.f32 %v2656, %v3261
        %v3376 = vmul.f32 %v2658, %v3266
        %v3377 = vmul.f32 %v2660, %v3271
        %v3378 = vmul.f32 %v2662, %v3276
        %v3379 = vmul.f32 %v2664, %v3281
        %v3380 = vmul.f32 %v2666, %v3286
        %v3381 = vmul.f32 %v2668, %v3291
        %v3382 = vmul.f32 %v2670, %v3296
        %v3383 = vmul.f32 %v2672, %v3301
        %v3384 = vmul.f32 %v2674, %v3306
        %v3385 = vmul.f32 %v2676, %v3311
        %v3386 = vmul.f32 %v2678, %v3316
        %v3387 = vmul.f32 %v2680, %v3321
        %v3388 = vadd.f32 %v2107, %v3324
        %v3389 = vadd.f32 %v2111, %v3325
        %v3390 = vadd.f32 %v2117, %v3326
        %v3391 = vadd.f32 %v2121, %v3327
        %v3392 = vadd.f32 %v2127, %v3328
        %v3393 = vadd.f32 %v2131, %v3329
        %v3394 = vadd.f32 %v2137, %v3330
        %v3395 = vadd.f32 %v2141, %v3331
        %v3396 = vadd.f32 %v2147, %v3332
        %v3397 = vadd.f32 %v2151, %v3333
        %v3398 = vadd.f32 %v2157, %v3334
        %v3399 = vadd.f32 %v2161, %v3335
        %v3400 = vadd.f32 %v2167, %v3336
        %v3401 = vadd.f32 %v2171, %v3337
        %v3402 = vadd.f32 %v2177, %v3338
        %v3403 = vadd.f32 %v2181, %v3339
        %v3404 = vadd.f32 %v2187, %v3340
        %v3405 = vadd.f32 %v2191, %v3341
        %v3406 = vadd.f32 %v2197, %v3342
        %v3407 = vadd.f32 %v2201, %v3343
        %v3408 = vadd.f32 %v2207, %v3344
        %v3409 = vadd.f32 %v2211, %v3345
        %v3410 = vadd.f32 %v2217, %v3346
        %v3411 = vadd.f32 %v2221, %v3347
        %v3412 = vadd.f32 %v2227, %v3348
        %v3413 = vadd.f32 %v2231, %v3349
        %v3414 = vadd.f32 %v2237, %v3350
        %v3415 = vadd.f32 %v2241, %v3351
        %v3416 = vadd.f32 %v2247, %v3352
        %v3417 = vadd.f32 %v2251, %v3353
        %v3418 = vadd.f32 %v2257, %v3354
        %v3419 = vadd.f32 %v2261, %v3355
        %v3420 = vadd.f32 %v2267, %v3356
        %v3421 = vadd.f32 %v2271, %v3357
        %v3422 = vadd.f32 %v2277, %v3358
        %v3423 = vadd.f32 %v2281, %v3359
        %v3424 = vadd.f32 %v2287, %v3360
        %v3425 = vadd.f32 %v2291, %v3361
        %v3426 = vadd.f32 %v2297, %v3362
        %v3427 = vadd.f32 %v2301, %v3363
        %v3428 = vadd.f32 %v2307, %v3364
        %v3429 = vadd.f32 %v2311, %v3365
        %v3430 = vadd.f32 %v2317, %v3366
        %v3431 = vadd.f32 %v2321, %v3367
        %v3432 = vadd.f32 %v2327, %v3368
        %v3433 = vadd.f32 %v2331, %v3369
        %v3434 = vadd.f32 %v2337, %v3370
        %v3435 = vadd.f32 %v2341, %v3371
        %v3436 = vadd.f32 %v2347, %v3372
        %v3437 = vadd.f32 %v2351, %v3373
        %v3438 = vadd.f32 %v2357, %v3374
        %v3439 = vadd.f32 %v2361, %v3375
        %v3440 = vadd.f32 %v2367, %v3376
        %v3441 = vadd.f32 %v2371, %v3377
        %v3442 = vadd.f32 %v2377, %v3378
        %v3443 = vadd.f32 %v2381, %v3379
        %v3444 = vadd.f32 %v2387, %v3380
        %v3445 = vadd.f32 %v2391, %v3381
        %v3446 = vadd.f32 %v2397, %v3382
        %v3447 = vadd.f32 %v2401, %v3383
        %v3448 = vadd.f32 %v2407, %v3384
        %v3449 = vadd.f32 %v2411, %v3385
        %v3450 = vadd.f32 %v2417, %v3386
        %v3451 = vadd.f32 %v2421, %v3387
        %v3452 = vmul.f32 %v3388, -2.0
        %v3453 = vmul.f32 %v3389, -2.0
        %v3454 = vmul.f32 %v3390, -2.0
        %v3455 = vmul.f32 %v3391, -2.0
        %v3456 = vmul.f32 %v3392, -2.0
        %v3457 = vmul.f32 %v3393, -2.0
        %v3458 = vmul.f32 %v3394, -2.0
        %v3459 = vmul.f32 %v3395, -2.0
        %v3460 = vmul.f32 %v3396, -2.0
        %v3461 = vmul.f32 %v3397, -2.0
        %v3462 = vmul.f32 %v3398, -2.0
        %v3463 = vmul.f32 %v3399, -2.0
        %v3464 = vmul.f32 %v3400, -2.0
        %v3465 = vmul.f32 %v3401, -2.0
        %v3466 = vmul.f32 %v3402, -2.0
        %v3467 = vmul.f32 %v3403, -2.0
        %v3468 = vmul.f32 %v3404, -2.0
        %v3469 = vmul.f32 %v3405, -2.0
        %v3470 = vmul.f32 %v3406, -2.0
        %v3471 = vmul.f32 %v3407, -2.0
        %v3472 = vmul.f32 %v3408, -2.0
        %v3473 = vmul.f32 %v3409, -2.0
        %v3474 = vmul.f32 %v3410, -2.0
        %v3475 = vmul.f32 %v3411, -2.0
        %v3476 = vmul.f32 %v3412, -2.0
        %v3477 = vmul.f32 %v3413, -2.0
        %v3478 = vmul.f32 %v3414, -2.0
        %v3479 = vmul.f32 %v3415, -2.0
        %v3480 = vmul.f32 %v3416, -2.0
        %v3481 = vmul.f32 %v3417, -2.0
        %v3482 = vmul.f32 %v3418, -2.0
        %v3483 = vmul.f32 %v3419, -2.0
        %v3484 = vmul.f32 %v3420, -2.0
        %v3485 = vmul.f32 %v3421, -2.0
        %v3486 = vmul.f32 %v3422, -2.0
        %v3487 = vmul.f32 %v3423, -2.0
        %v3488 = vmul.f32 %v3424, -2.0
        %v3489 = vmul.f32 %v3425, -2.0
        %v3490 = vmul.f32 %v3426, -2.0
        %v3491 = vmul.f32 %v3427, -2.0
        %v3492 = vmul.f32 %v3428, -2.0
        %v3493 = vmul.f32 %v3429, -2.0
        %v3494 = vmul.f32 %v3430, -2.0
        %v3495 = vmul.f32 %v3431, -2.0
        %v3496 = vmul.f32 %v3432, -2.0
        %v3497 = vmul.f32 %v3433, -2.0
        %v3498 = vmul.f32 %v3434, -2.0
        %v3499 = vmul.f32 %v3435, -2.0
        %v3500 = vmul.f32 %v3436, -2.0
        %v3501 = vmul.f32 %v3437, -2.0
        %v3502 = vmul.f32 %v3438, -2.0
        %v3503 = vmul.f32 %v3439, -2.0
        %v3504 = vmul.f32 %v3440, -2.0
        %v3505 = vmul.f32 %v3441, -2.0
        %v3506 = vmul.f32 %v3442, -2.0
        %v3507 = vmul.f32 %v3443, -2.0
        %v3508 = vmul.f32 %v3444, -2.0
        %v3509 = vmul.f32 %v3445, -2.0
        %v3510 = vmul.f32 %v3446, -2.0
        %v3511 = vmul.f32 %v3447, -2.0
        %v3512 = vmul.f32 %v3448, -2.0
        %v3513 = vmul.f32 %v3449, -2.0
        %v3514 = vmul.f32 %v3450, -2.0
        %v3515 = vmul.f32 %v3451, -2.0
        %v3516 = vmax.f32 %v3452, 0.0
        %v3517 = vmax.f32 %v3453, 0.0
        %v3518 = vmax.f32 %v3454, 0.0
        %v3519 = vmax.f32 %v3455, 0.0
        %v3520 = vmax.f32 %v3456, 0.0
        %v3521 = vmax.f32 %v3457, 0.0
        %v3522 = vmax.f32 %v3458, 0.0
        %v3523 = vmax.f32 %v3459, 0.0
        %v3524 = vmax.f32 %v3460, 0.0
        %v3525 = vmax.f32 %v3461, 0.0
        %v3526 = vmax.f32 %v3462, 0.0
        %v3527 = vmax.f32 %v3463, 0.0
        %v3528 = vmax.f32 %v3464, 0.0
        %v3529 = vmax.f32 %v3465, 0.0
        %v3530 = vmax.f32 %v3466, 0.0
        %v3531 = vmax.f32 %v3467, 0.0
        %v3532 = vmax.f32 %v3468, 0.0
        %v3533 = vmax.f32 %v3469, 0.0
        %v3534 = vmax.f32 %v3470, 0.0
        %v3535 = vmax.f32 %v3471, 0.0
        %v3536 = vmax.f32 %v3472, 0.0
        %v3537 = vmax.f32 %v3473, 0.0
        %v3538 = vmax.f32 %v3474, 0.0
        %v3539 = vmax.f32 %v3475, 0.0
        %v3540 = vmax.f32 %v3476, 0.0
        %v3541 = vmax.f32 %v3477, 0.0
        %v3542 = vmax.f32 %v3478, 0.0
        %v3543 = vmax.f32 %v3479, 0.0
        %v3544 = vmax.f32 %v3480, 0.0
        %v3545 = vmax.f32 %v3481, 0.0
        %v3546 = vmax.f32 %v3482, 0.0
        %v3547 = vmax.f32 %v3483, 0.0
        %v3548 = vmax.f32 %v3484, 0.0
        %v3549 = vmax.f32 %v3485, 0.0
        %v3550 = vmax.f32 %v3486, 0.0
        %v3551 = vmax.f32 %v3487, 0.0
        %v3552 = vmax.f32 %v3488, 0.0
        %v3553 = vmax.f32 %v3489, 0.0
        %v3554 = vmax.f32 %v3490, 0.0
        %v3555 = vmax.f32 %v3491, 0.0
        %v3556 = vmax.f32 %v3492, 0.0
        %v3557 = vmax.f32 %v3493, 0.0
        %v3558 = vmax.f32 %v3494, 0.0
        %v3559 = vmax.f32 %v3495, 0.0
        %v3560 = vmax.f32 %v3496, 0.0
        %v3561 = vmax.f32 %v3497, 0.0
        %v3562 = vmax.f32 %v3498, 0.0
        %v3563 = vmax.f32 %v3499, 0.0
        %v3564 = vmax.f32 %v3500, 0.0
        %v3565 = vmax.f32 %v3501, 0.0
        %v3566 = vmax.f32 %v3502, 0.0
        %v3567 = vmax.f32 %v3503, 0.0
        %v3568 = vmax.f32 %v3504, 0.0
        %v3569 = vmax.f32 %v3505, 0.0
        %v3570 = vmax.f32 %v3506, 0.0
        %v3571 = vmax.f32 %v3507, 0.0
        %v3572 = vmax.f32 %v3508, 0.0
        %v3573 = vmax.f32 %v3509, 0.0
        %v3574 = vmax.f32 %v3510, 0.0
        %v3575 = vmax.f32 %v3511, 0.0
        %v3576 = vmax.f32 %v3512, 0.0
        %v3577 = vmax.f32 %v3513, 0.0
        %v3578 = vmax.f32 %v3514, 0.0
        %v3579 = vmax.f32 %v3515, 0.0
        %v3580 = vand.u32 2147483647, %v3452
        %v3581 = vand.u32 2147483647, %v3453
        %v3582 = vand.u32 2147483647, %v3454
        %v3583 = vand.u32 2147483647, %v3455
        %v3584 = vand.u32 2147483647, %v3456
        %v3585 = vand.u32 2147483647, %v3457
        %v3586 = vand.u32 2147483647, %v3458
        %v3587 = vand.u32 2147483647, %v3459
        %v3588 = vand.u32 2147483647, %v3460
        %v3589 = vand.u32 2147483647, %v3461
        %v3590 = vand.u32 2147483647, %v3462
        %v3591 = vand.u32 2147483647, %v3463
        %v3592 = vand.u32 2147483647, %v3464
        %v3593 = vand.u32 2147483647, %v3465
        %v3594 = vand.u32 2147483647, %v3466
        %v3595 = vand.u32 2147483647, %v3467
        %v3596 = vand.u32 2147483647, %v3468
        %v3597 = vand.u32 2147483647, %v3469
        %v3598 = vand.u32 2147483647, %v3470
        %v3599 = vand.u32 2147483647, %v3471
        %v3600 = vand.u32 2147483647, %v3472
        %v3601 = vand.u32 2147483647, %v3473
        %v3602 = vand.u32 2147483647, %v3474
        %v3603 = vand.u32 2147483647, %v3475
        %v3604 = vand.u32 2147483647, %v3476
        %v3605 = vand.u32 2147483647, %v3477
        %v3606 = vand.u32 2147483647, %v3478
        %v3607 = vand.u32 2147483647, %v3479
        %v3608 = vand.u32 2147483647, %v3480
        %v3609 = vand.u32 2147483647, %v3481
        %v3610 = vand.u32 2147483647, %v3482
        %v3611 = vand.u32 2147483647, %v3483
        %v3612 = vand.u32 2147483647, %v3484
        %v3613 = vand.u32 2147483647, %v3485
        %v3614 = vand.u32 2147483647, %v3486
        %v3615 = vand.u32 2147483647, %v3487
        %v3616 = vand.u32 2147483647, %v3488
        %v3617 = vand.u32 2147483647, %v3489
        %v3618 = vand.u32 2147483647, %v3490
        %v3619 = vand.u32 2147483647, %v3491
        %v3620 = vand.u32 2147483647, %v3492
        %v3621 = vand.u32 2147483647, %v3493
        %v3622 = vand.u32 2147483647, %v3494
        %v3623 = vand.u32 2147483647, %v3495
        %v3624 = vand.u32 2147483647, %v3496
        %v3625 = vand.u32 2147483647, %v3497
        %v3626 = vand.u32 2147483647, %v3498
        %v3627 = vand.u32 2147483647, %v3499
        %v3628 = vand.u32 2147483647, %v3500
        %v3629 = vand.u32 2147483647, %v3501
        %v3630 = vand.u32 2147483647, %v3502
        %v3631 = vand.u32 2147483647, %v3503
        %v3632 = vand.u32 2147483647, %v3504
        %v3633 = vand.u32 2147483647, %v3505
        %v3634 = vand.u32 2147483647, %v3506
        %v3635 = vand.u32 2147483647, %v3507
        %v3636 = vand.u32 2147483647, %v3508
        %v3637 = vand.u32 2147483647, %v3509
        %v3638 = vand.u32 2147483647, %v3510
        %v3639 = vand.u32 2147483647, %v3511
        %v3640 = vand.u32 2147483647, %v3512
        %v3641 = vand.u32 2147483647, %v3513
        %v3642 = vand.u32 2147483647, %v3514
        %v3643 = vand.u32 2147483647, %v3515
        %v3644 = vsub.f32 0.0, %v3580
        %v3645 = vsub.f32 0.0, %v3581
        %v3646 = vsub.f32 0.0, %v3582
        %v3647 = vsub.f32 0.0, %v3583
        %v3648 = vsub.f32 0.0, %v3584
        %v3649 = vsub.f32 0.0, %v3585
        %v3650 = vsub.f32 0.0, %v3586
        %v3651 = vsub.f32 0.0, %v3587
        %v3652 = vsub.f32 0.0, %v3588
        %v3653 = vsub.f32 0.0, %v3589
        %v3654 = vsub.f32 0.0, %v3590
        %v3655 = vsub.f32 0.0, %v3591
        %v3656 = vsub.f32 0.0, %v3592
        %v3657 = vsub.f32 0.0, %v3593
        %v3658 = vsub.f32 0.0, %v3594
        %v3659 = vsub.f32 0.0, %v3595
        %v3660 = vsub.f32 0.0, %v3596
        %v3661 = vsub.f32 0.0, %v3597
        %v3662 = vsub.f32 0.0, %v3598
        %v3663 = vsub.f32 0.0, %v3599
        %v3664 = vsub.f32 0.0, %v3600
        %v3665 = vsub.f32 0.0, %v3601
        %v3666 = vsub.f32 0.0, %v3602
        %v3667 = vsub.f32 0.0, %v3603
        %v3668 = vsub.f32 0.0, %v3604
        %v3669 = vsub.f32 0.0, %v3605
        %v3670 = vsub.f32 0.0, %v3606
        %v3671 = vsub.f32 0.0, %v3607
        %v3672 = vsub.f32 0.0, %v3608
        %v3673 = vsub.f32 0.0, %v3609
        %v3674 = vsub.f32 0.0, %v3610
        %v3675 = vsub.f32 0.0, %v3611
        %v3676 = vsub.f32 0.0, %v3612
        %v3677 = vsub.f32 0.0, %v3613
        %v3678 = vsub.f32 0.0, %v3614
        %v3679 = vsub.f32 0.0, %v3615
        %v3680 = vsub.f32 0.0, %v3616
        %v3681 = vsub.f32 0.0, %v3617
        %v3682 = vsub.f32 0.0, %v3618
        %v3683 = vsub.f32 0.0, %v3619
        %v3684 = vsub.f32 0.0, %v3620
        %v3685 = vsub.f32 0.0, %v3621
        %v3686 = vsub.f32 0.0, %v3622
        %v3687 = vsub.f32 0.0, %v3623
        %v3688 = vsub.f32 0.0, %v3624
        %v3689 = vsub.f32 0.0, %v3625
        %v3690 = vsub.f32 0.0, %v3626
        %v3691 = vsub.f32 0.0, %v3627
        %v3692 = vsub.f32 0.0, %v3628
        %v3693 = vsub.f32 0.0, %v3629
        %v3694 = vsub.f32 0.0, %v3630
        %v3695 = vsub.f32 0.0, %v3631
        %v3696 = vsub.f32 0.0, %v3632
        %v3697 = vsub.f32 0.0, %v3633
        %v3698 = vsub.f32 0.0, %v3634
        %v3699 = vsub.f32 0.0, %v3635
        %v3700 = vsub.f32 0.0, %v3636
        %v3701 = vsub.f32 0.0, %v3637
        %v3702 = vsub.f32 0.0, %v3638
        %v3703 = vsub.f32 0.0, %v3639
        %v3704 = vsub.f32 0.0, %v3640
        %v3705 = vsub.f32 0.0, %v3641
        %v3706 = vsub.f32 0.0, %v3642
        %v3707 = vsub.f32 0.0, %v3643
        %v3708 = vmul.f32 %v3644, 1.442695
        %v3709 = vpow.pop %v3708
        %v3710 = vmul.f32 %v3645, 1.442695
        %v3711 = vpow.pop %v3710
        %v3712 = vmul.f32 %v3646, 1.442695
        %v3713 = vpow.pop %v3712
        %v3714 = vmul.f32 %v3647, 1.442695
        %v3715 = vpow.pop %v3714
        %v3716 = vmul.f32 %v3648, 1.442695
        %v3717 = vpow.pop %v3716
        %v3718 = vmul.f32 %v3649, 1.442695
        %v3719 = vpow.pop %v3718
        %v3720 = vmul.f32 %v3650, 1.442695
        %v3721 = vpow.pop %v3720
        %v3722 = vmul.f32 %v3651, 1.442695
        %v3723 = vpow.pop %v3722
        %v3724 = vmul.f32 %v3652, 1.442695
        %v3725 = vpow.pop %v3724
        %v3726 = vmul.f32 %v3653, 1.442695
        %v3727 = vpow.pop %v3726
        %v3728 = vmul.f32 %v3654, 1.442695
        %v3729 = vpow.pop %v3728
        %v3730 = vmul.f32 %v3655, 1.442695
        %v3731 = vpow.pop %v3730
        %v3732 = vmul.f32 %v3656, 1.442695
        %v3733 = vpow.pop %v3732
        %v3734 = vmul.f32 %v3657, 1.442695
        %v3735 = vpow.pop %v3734
        %v3736 = vmul.f32 %v3658, 1.442695
        %v3737 = vpow.pop %v3736
        %v3738 = vmul.f32 %v3659, 1.442695
        %v3739 = vpow.pop %v3738
        %v3740 = vmul.f32 %v3660, 1.442695
        %v3741 = vpow.pop %v3740
        %v3742 = vmul.f32 %v3661, 1.442695
        %v3743 = vpow.pop %v3742
        %v3744 = vmul.f32 %v3662, 1.442695
        %v3745 = vpow.pop %v3744
        %v3746 = vmul.f32 %v3663, 1.442695
        %v3747 = vpow.pop %v3746
        %v3748 = vmul.f32 %v3664, 1.442695
        %v3749 = vpow.pop %v3748
        %v3750 = vmul.f32 %v3665, 1.442695
        %v3751 = vpow.pop %v3750
        %v3752 = vmul.f32 %v3666, 1.442695
        %v3753 = vpow.pop %v3752
        %v3754 = vmul.f32 %v3667, 1.442695
        %v3755 = vpow.pop %v3754
        %v3756 = vmul.f32 %v3668, 1.442695
        %v3757 = vpow.pop %v3756
        %v3758 = vmul.f32 %v3669, 1.442695
        %v3759 = vpow.pop %v3758
        %v3760 = vmul.f32 %v3670, 1.442695
        %v3761 = vpow.pop %v3760
        %v3762 = vmul.f32 %v3671, 1.442695
        %v3763 = vpow.pop %v3762
        %v3764 = vmul.f32 %v3672, 1.442695
        %v3765 = vpow.pop %v3764
        %v3766 = vmul.f32 %v3673, 1.442695
        %v3767 = vpow.pop %v3766
        %v3768 = vmul.f32 %v3674, 1.442695
        %v3769 = vpow.pop %v3768
        %v3770 = vmul.f32 %v3675, 1.442695
        %v3771 = vpow.pop %v3770
        %v3772 = vmul.f32 %v3676, 1.442695
        %v3773 = vpow.pop %v3772
        %v3774 = vmul.f32 %v3677, 1.442695
        %v3775 = vpow.pop %v3774
        %v3776 = vmul.f32 %v3678, 1.442695
        %v3777 = vpow.pop %v3776
        %v3778 = vmul.f32 %v3679, 1.442695
        %v3779 = vpow.pop %v3778
        %v3780 = vmul.f32 %v3680, 1.442695
        %v3781 = vpow.pop %v3780
        %v3782 = vmul.f32 %v3681, 1.442695
        %v3783 = vpow.pop %v3782
        %v3784 = vmul.f32 %v3682, 1.442695
        %v3785 = vpow.pop %v3784
        %v3786 = vmul.f32 %v3683, 1.442695
        %v3787 = vpow.pop %v3786
        %v3788 = vmul.f32 %v3684, 1.442695
        %v3789 = vpow.pop %v3788
        %v3790 = vmul.f32 %v3685, 1.442695
        %v3791 = vpow.pop %v3790
        %v3792 = vmul.f32 %v3686, 1.442695
        %v3793 = vpow.pop %v3792
        %v3794 = vmul.f32 %v3687, 1.442695
        %v3795 = vpow.pop %v3794
        %v3796 = vmul.f32 %v3688, 1.442695
        %v3797 = vpow.pop %v3796
        %v3798 = vmul.f32 %v3689, 1.442695
        %v3799 = vpow.pop %v3798
        %v3800 = vmul.f32 %v3690, 1.442695
        %v3801 = vpow.pop %v3800
        %v3802 = vmul.f32 %v3691, 1.442695
        %v3803 = vpow.pop %v3802
        %v3804 = vmul.f32 %v3692, 1.442695
        %v3805 = vpow.pop %v3804
        %v3806 = vmul.f32 %v3693, 1.442695
        %v3807 = vpow.pop %v3806
        %v3808 = vmul.f32 %v3694, 1.442695
        %v3809 = vpow.pop %v3808
        %v3810 = vmul.f32 %v3695, 1.442695
        %v3811 = vpow.pop %v3810
        %v3812 = vmul.f32 %v3696, 1.442695
        %v3813 = vpow.pop %v3812
        %v3814 = vmul.f32 %v3697, 1.442695
        %v3815 = vpow.pop %v3814
        %v3816 = vmul.f32 %v3698, 1.442695
        %v3817 = vpow.pop %v3816
        %v3818 = vmul.f32 %v3699, 1.442695
        %v3819 = vpow.pop %v3818
        %v3820 = vmul.f32 %v3700, 1.442695
        %v3821 = vpow.pop %v3820
        %v3822 = vmul.f32 %v3701, 1.442695
        %v3823 = vpow.pop %v3822
        %v3824 = vmul.f32 %v3702, 1.442695
        %v3825 = vpow.pop %v3824
        %v3826 = vmul.f32 %v3703, 1.442695
        %v3827 = vpow.pop %v3826
        %v3828 = vmul.f32 %v3704, 1.442695
        %v3829 = vpow.pop %v3828
        %v3830 = vmul.f32 %v3705, 1.442695
        %v3831 = vpow.pop %v3830
        %v3832 = vmul.f32 %v3706, 1.442695
        %v3833 = vpow.pop %v3832
        %v3834 = vmul.f32 %v3707, 1.442695
        %v3835 = vpow.pop %v3834
        %v3836 = vadd.f32 %v3709, 1.0
        %v3837 = vlog2.pop %v3836
        %v3838 = vmul.f32 %v3837, 0.6931472
        %v3839 = vmul.f32 -0.5, %v3709
        %v3840 = vadd.f32 %v3839, 1.0
        %v3841 = vmul.f32 %v3840, %v3709
        %v3842 = vand.u32 2147483647, %v3709
        %vm3843 = vcmp.lt.f32.partialorder %v3842, 0.0004427343
        %v3844 = vsel %vm3843, %v3841, %v3838
        %v3845 = vadd.f32 %v3711, 1.0
        %v3846 = vlog2.pop %v3845
        %v3847 = vmul.f32 %v3846, 0.6931472
        %v3848 = vmul.f32 -0.5, %v3711
        %v3849 = vadd.f32 %v3848, 1.0
        %v3850 = vmul.f32 %v3849, %v3711
        %v3851 = vand.u32 2147483647, %v3711
        %vm3852 = vcmp.lt.f32.partialorder %v3851, 0.0004427343
        %v3853 = vsel %vm3852, %v3850, %v3847
        %v3854 = vadd.f32 %v3713, 1.0
        %v3855 = vlog2.pop %v3854
        %v3856 = vmul.f32 %v3855, 0.6931472
        %v3857 = vmul.f32 -0.5, %v3713
        %v3858 = vadd.f32 %v3857, 1.0
        %v3859 = vmul.f32 %v3858, %v3713
        %v3860 = vand.u32 2147483647, %v3713
        %vm3861 = vcmp.lt.f32.partialorder %v3860, 0.0004427343
        %v3862 = vsel %vm3861, %v3859, %v3856
        %v3863 = vadd.f32 %v3715, 1.0
        %v3864 = vlog2.pop %v3863
        %v3865 = vmul.f32 %v3864, 0.6931472
        %v3866 = vmul.f32 -0.5, %v3715
        %v3867 = vadd.f32 %v3866, 1.0
        %v3868 = vmul.f32 %v3867, %v3715
        %v3869 = vand.u32 2147483647, %v3715
        %vm3870 = vcmp.lt.f32.partialorder %v3869, 0.0004427343
        %v3871 = vsel %vm3870, %v3868, %v3865
        %v3872 = vadd.f32 %v3717, 1.0
        %v3873 = vlog2.pop %v3872
        %v3874 = vmul.f32 %v3873, 0.6931472
        %v3875 = vmul.f32 -0.5, %v3717
        %v3876 = vadd.f32 %v3875, 1.0
        %v3877 = vmul.f32 %v3876, %v3717
        %v3878 = vand.u32 2147483647, %v3717
        %vm3879 = vcmp.lt.f32.partialorder %v3878, 0.0004427343
        %v3880 = vsel %vm3879, %v3877, %v3874
        %v3881 = vadd.f32 %v3719, 1.0
        %v3882 = vlog2.pop %v3881
        %v3883 = vmul.f32 %v3882, 0.6931472
        %v3884 = vmul.f32 -0.5, %v3719
        %v3885 = vadd.f32 %v3884, 1.0
        %v3886 = vmul.f32 %v3885, %v3719
        %v3887 = vand.u32 2147483647, %v3719
        %vm3888 = vcmp.lt.f32.partialorder %v3887, 0.0004427343
        %v3889 = vsel %vm3888, %v3886, %v3883
        %v3890 = vadd.f32 %v3721, 1.0
        %v3891 = vlog2.pop %v3890
        %v3892 = vmul.f32 %v3891, 0.6931472
        %v3893 = vmul.f32 -0.5, %v3721
        %v3894 = vadd.f32 %v3893, 1.0
        %v3895 = vmul.f32 %v3894, %v3721
        %v3896 = vand.u32 2147483647, %v3721
        %vm3897 = vcmp.lt.f32.partialorder %v3896, 0.0004427343
        %v3898 = vsel %vm3897, %v3895, %v3892
        %v3899 = vadd.f32 %v3723, 1.0
        %v3900 = vlog2.pop %v3899
        %v3901 = vmul.f32 %v3900, 0.6931472
        %v3902 = vmul.f32 -0.5, %v3723
        %v3903 = vadd.f32 %v3902, 1.0
        %v3904 = vmul.f32 %v3903, %v3723
        %v3905 = vand.u32 2147483647, %v3723
        %vm3906 = vcmp.lt.f32.partialorder %v3905, 0.0004427343
        %v3907 = vsel %vm3906, %v3904, %v3901
        %v3908 = vadd.f32 %v3725, 1.0
        %v3909 = vlog2.pop %v3908
        %v3910 = vmul.f32 %v3909, 0.6931472
        %v3911 = vmul.f32 -0.5, %v3725
        %v3912 = vadd.f32 %v3911, 1.0
        %v3913 = vmul.f32 %v3912, %v3725
        %v3914 = vand.u32 2147483647, %v3725
        %vm3915 = vcmp.lt.f32.partialorder %v3914, 0.0004427343
        %v3916 = vsel %vm3915, %v3913, %v3910
        %v3917 = vadd.f32 %v3727, 1.0
        %v3918 = vlog2.pop %v3917
        %v3919 = vmul.f32 %v3918, 0.6931472
        %v3920 = vmul.f32 -0.5, %v3727
        %v3921 = vadd.f32 %v3920, 1.0
        %v3922 = vmul.f32 %v3921, %v3727
        %v3923 = vand.u32 2147483647, %v3727
        %vm3924 = vcmp.lt.f32.partialorder %v3923, 0.0004427343
        %v3925 = vsel %vm3924, %v3922, %v3919
        %v3926 = vadd.f32 %v3729, 1.0
        %v3927 = vlog2.pop %v3926
        %v3928 = vmul.f32 %v3927, 0.6931472
        %v3929 = vmul.f32 -0.5, %v3729
        %v3930 = vadd.f32 %v3929, 1.0
        %v3931 = vmul.f32 %v3930, %v3729
        %v3932 = vand.u32 2147483647, %v3729
        %vm3933 = vcmp.lt.f32.partialorder %v3932, 0.0004427343
        %v3934 = vsel %vm3933, %v3931, %v3928
        %v3935 = vadd.f32 %v3731, 1.0
        %v3936 = vlog2.pop %v3935
        %v3937 = vmul.f32 %v3936, 0.6931472
        %v3938 = vmul.f32 -0.5, %v3731
        %v3939 = vadd.f32 %v3938, 1.0
        %v3940 = vmul.f32 %v3939, %v3731
        %v3941 = vand.u32 2147483647, %v3731
        %vm3942 = vcmp.lt.f32.partialorder %v3941, 0.0004427343
        %v3943 = vsel %vm3942, %v3940, %v3937
        %v3944 = vadd.f32 %v3733, 1.0
        %v3945 = vlog2.pop %v3944
        %v3946 = vmul.f32 %v3945, 0.6931472
        %v3947 = vmul.f32 -0.5, %v3733
        %v3948 = vadd.f32 %v3947, 1.0
        %v3949 = vmul.f32 %v3948, %v3733
        %v3950 = vand.u32 2147483647, %v3733
        %vm3951 = vcmp.lt.f32.partialorder %v3950, 0.0004427343
        %v3952 = vsel %vm3951, %v3949, %v3946
        %v3953 = vadd.f32 %v3735, 1.0
        %v3954 = vlog2.pop %v3953
        %v3955 = vmul.f32 %v3954, 0.6931472
        %v3956 = vmul.f32 -0.5, %v3735
        %v3957 = vadd.f32 %v3956, 1.0
        %v3958 = vmul.f32 %v3957, %v3735
        %v3959 = vand.u32 2147483647, %v3735
        %vm3960 = vcmp.lt.f32.partialorder %v3959, 0.0004427343
        %v3961 = vsel %vm3960, %v3958, %v3955
        %v3962 = vadd.f32 %v3737, 1.0
        %v3963 = vlog2.pop %v3962
        %v3964 = vmul.f32 %v3963, 0.6931472
        %v3965 = vmul.f32 -0.5, %v3737
        %v3966 = vadd.f32 %v3965, 1.0
        %v3967 = vmul.f32 %v3966, %v3737
        %v3968 = vand.u32 2147483647, %v3737
        %vm3969 = vcmp.lt.f32.partialorder %v3968, 0.0004427343
        %v3970 = vsel %vm3969, %v3967, %v3964
        %v3971 = vadd.f32 %v3739, 1.0
        %v3972 = vlog2.pop %v3971
        %v3973 = vmul.f32 %v3972, 0.6931472
        %v3974 = vmul.f32 -0.5, %v3739
        %v3975 = vadd.f32 %v3974, 1.0
        %v3976 = vmul.f32 %v3975, %v3739
        %v3977 = vand.u32 2147483647, %v3739
        %vm3978 = vcmp.lt.f32.partialorder %v3977, 0.0004427343
        %v3979 = vsel %vm3978, %v3976, %v3973
        %v3980 = vadd.f32 %v3741, 1.0
        %v3981 = vlog2.pop %v3980
        %v3982 = vmul.f32 %v3981, 0.6931472
        %v3983 = vmul.f32 -0.5, %v3741
        %v3984 = vadd.f32 %v3983, 1.0
        %v3985 = vmul.f32 %v3984, %v3741
        %v3986 = vand.u32 2147483647, %v3741
        %vm3987 = vcmp.lt.f32.partialorder %v3986, 0.0004427343
        %v3988 = vsel %vm3987, %v3985, %v3982
        %v3989 = vadd.f32 %v3743, 1.0
        %v3990 = vlog2.pop %v3989
        %v3991 = vmul.f32 %v3990, 0.6931472
        %v3992 = vmul.f32 -0.5, %v3743
        %v3993 = vadd.f32 %v3992, 1.0
        %v3994 = vmul.f32 %v3993, %v3743
        %v3995 = vand.u32 2147483647, %v3743
        %vm3996 = vcmp.lt.f32.partialorder %v3995, 0.0004427343
        %v3997 = vsel %vm3996, %v3994, %v3991
        %v3998 = vadd.f32 %v3745, 1.0
        %v3999 = vlog2.pop %v3998
        %v4000 = vmul.f32 %v3999, 0.6931472
        %v4001 = vmul.f32 -0.5, %v3745
        %v4002 = vadd.f32 %v4001, 1.0
        %v4003 = vmul.f32 %v4002, %v3745
        %v4004 = vand.u32 2147483647, %v3745
        %vm4005 = vcmp.lt.f32.partialorder %v4004, 0.0004427343
        %v4006 = vsel %vm4005, %v4003, %v4000
        %v4007 = vadd.f32 %v3747, 1.0
        %v4008 = vlog2.pop %v4007
        %v4009 = vmul.f32 %v4008, 0.6931472
        %v4010 = vmul.f32 -0.5, %v3747
        %v4011 = vadd.f32 %v4010, 1.0
        %v4012 = vmul.f32 %v4011, %v3747
        %v4013 = vand.u32 2147483647, %v3747
        %vm4014 = vcmp.lt.f32.partialorder %v4013, 0.0004427343
        %v4015 = vsel %vm4014, %v4012, %v4009
        %v4016 = vadd.f32 %v3749, 1.0
        %v4017 = vlog2.pop %v4016
        %v4018 = vmul.f32 %v4017, 0.6931472
        %v4019 = vmul.f32 -0.5, %v3749
        %v4020 = vadd.f32 %v4019, 1.0
        %v4021 = vmul.f32 %v4020, %v3749
        %v4022 = vand.u32 2147483647, %v3749
        %vm4023 = vcmp.lt.f32.partialorder %v4022, 0.0004427343
        %v4024 = vsel %vm4023, %v4021, %v4018
        %v4025 = vadd.f32 %v3751, 1.0
        %v4026 = vlog2.pop %v4025
        %v4027 = vmul.f32 %v4026, 0.6931472
        %v4028 = vmul.f32 -0.5, %v3751
        %v4029 = vadd.f32 %v4028, 1.0
        %v4030 = vmul.f32 %v4029, %v3751
        %v4031 = vand.u32 2147483647, %v3751
        %vm4032 = vcmp.lt.f32.partialorder %v4031, 0.0004427343
        %v4033 = vsel %vm4032, %v4030, %v4027
        %v4034 = vadd.f32 %v3753, 1.0
        %v4035 = vlog2.pop %v4034
        %v4036 = vmul.f32 %v4035, 0.6931472
        %v4037 = vmul.f32 -0.5, %v3753
        %v4038 = vadd.f32 %v4037, 1.0
        %v4039 = vmul.f32 %v4038, %v3753
        %v4040 = vand.u32 2147483647, %v3753
        %vm4041 = vcmp.lt.f32.partialorder %v4040, 0.0004427343
        %v4042 = vsel %vm4041, %v4039, %v4036
        %v4043 = vadd.f32 %v3755, 1.0
        %v4044 = vlog2.pop %v4043
        %v4045 = vmul.f32 %v4044, 0.6931472
        %v4046 = vmul.f32 -0.5, %v3755
        %v4047 = vadd.f32 %v4046, 1.0
        %v4048 = vmul.f32 %v4047, %v3755
        %v4049 = vand.u32 2147483647, %v3755
        %vm4050 = vcmp.lt.f32.partialorder %v4049, 0.0004427343
        %v4051 = vsel %vm4050, %v4048, %v4045
        %v4052 = vadd.f32 %v3757, 1.0
        %v4053 = vlog2.pop %v4052
        %v4054 = vmul.f32 %v4053, 0.6931472
        %v4055 = vmul.f32 -0.5, %v3757
        %v4056 = vadd.f32 %v4055, 1.0
        %v4057 = vmul.f32 %v4056, %v3757
        %v4058 = vand.u32 2147483647, %v3757
        %vm4059 = vcmp.lt.f32.partialorder %v4058, 0.0004427343
        %v4060 = vsel %vm4059, %v4057, %v4054
        %v4061 = vadd.f32 %v3759, 1.0
        %v4062 = vlog2.pop %v4061
        %v4063 = vmul.f32 %v4062, 0.6931472
        %v4064 = vmul.f32 -0.5, %v3759
        %v4065 = vadd.f32 %v4064, 1.0
        %v4066 = vmul.f32 %v4065, %v3759
        %v4067 = vand.u32 2147483647, %v3759
        %vm4068 = vcmp.lt.f32.partialorder %v4067, 0.0004427343
        %v4069 = vsel %vm4068, %v4066, %v4063
        %v4070 = vadd.f32 %v3761, 1.0
        %v4071 = vlog2.pop %v4070
        %v4072 = vmul.f32 %v4071, 0.6931472
        %v4073 = vmul.f32 -0.5, %v3761
        %v4074 = vadd.f32 %v4073, 1.0
        %v4075 = vmul.f32 %v4074, %v3761
        %v4076 = vand.u32 2147483647, %v3761
        %vm4077 = vcmp.lt.f32.partialorder %v4076, 0.0004427343
        %v4078 = vsel %vm4077, %v4075, %v4072
        %v4079 = vadd.f32 %v3763, 1.0
        %v4080 = vlog2.pop %v4079
        %v4081 = vmul.f32 %v4080, 0.6931472
        %v4082 = vmul.f32 -0.5, %v3763
        %v4083 = vadd.f32 %v4082, 1.0
        %v4084 = vmul.f32 %v4083, %v3763
        %v4085 = vand.u32 2147483647, %v3763
        %vm4086 = vcmp.lt.f32.partialorder %v4085, 0.0004427343
        %v4087 = vsel %vm4086, %v4084, %v4081
        %v4088 = vadd.f32 %v3765, 1.0
        %v4089 = vlog2.pop %v4088
        %v4090 = vmul.f32 %v4089, 0.6931472
        %v4091 = vmul.f32 -0.5, %v3765
        %v4092 = vadd.f32 %v4091, 1.0
        %v4093 = vmul.f32 %v4092, %v3765
        %v4094 = vand.u32 2147483647, %v3765
        %vm4095 = vcmp.lt.f32.partialorder %v4094, 0.0004427343
        %v4096 = vsel %vm4095, %v4093, %v4090
        %v4097 = vadd.f32 %v3767, 1.0
        %v4098 = vlog2.pop %v4097
        %v4099 = vmul.f32 %v4098, 0.6931472
        %v4100 = vmul.f32 -0.5, %v3767
        %v4101 = vadd.f32 %v4100, 1.0
        %v4102 = vmul.f32 %v4101, %v3767
        %v4103 = vand.u32 2147483647, %v3767
        %vm4104 = vcmp.lt.f32.partialorder %v4103, 0.0004427343
        %v4105 = vsel %vm4104, %v4102, %v4099
        %v4106 = vadd.f32 %v3769, 1.0
        %v4107 = vlog2.pop %v4106
        %v4108 = vmul.f32 %v4107, 0.6931472
        %v4109 = vmul.f32 -0.5, %v3769
        %v4110 = vadd.f32 %v4109, 1.0
        %v4111 = vmul.f32 %v4110, %v3769
        %v4112 = vand.u32 2147483647, %v3769
        %vm4113 = vcmp.lt.f32.partialorder %v4112, 0.0004427343
        %v4114 = vsel %vm4113, %v4111, %v4108
        %v4115 = vadd.f32 %v3771, 1.0
        %v4116 = vlog2.pop %v4115
        %v4117 = vmul.f32 %v4116, 0.6931472
        %v4118 = vmul.f32 -0.5, %v3771
        %v4119 = vadd.f32 %v4118, 1.0
        %v4120 = vmul.f32 %v4119, %v3771
        %v4121 = vand.u32 2147483647, %v3771
        %vm4122 = vcmp.lt.f32.partialorder %v4121, 0.0004427343
        %v4123 = vsel %vm4122, %v4120, %v4117
        %v4124 = vadd.f32 %v3773, 1.0
        %v4125 = vlog2.pop %v4124
        %v4126 = vmul.f32 %v4125, 0.6931472
        %v4127 = vmul.f32 -0.5, %v3773
        %v4128 = vadd.f32 %v4127, 1.0
        %v4129 = vmul.f32 %v4128, %v3773
        %v4130 = vand.u32 2147483647, %v3773
        %vm4131 = vcmp.lt.f32.partialorder %v4130, 0.0004427343
        %v4132 = vsel %vm4131, %v4129, %v4126
        %v4133 = vadd.f32 %v3775, 1.0
        %v4134 = vlog2.pop %v4133
        %v4135 = vmul.f32 %v4134, 0.6931472
        %v4136 = vmul.f32 -0.5, %v3775
        %v4137 = vadd.f32 %v4136, 1.0
        %v4138 = vmul.f32 %v4137, %v3775
        %v4139 = vand.u32 2147483647, %v3775
        %vm4140 = vcmp.lt.f32.partialorder %v4139, 0.0004427343
        %v4141 = vsel %vm4140, %v4138, %v4135
        %v4142 = vadd.f32 %v3777, 1.0
        %v4143 = vlog2.pop %v4142
        %v4144 = vmul.f32 %v4143, 0.6931472
        %v4145 = vmul.f32 -0.5, %v3777
        %v4146 = vadd.f32 %v4145, 1.0
        %v4147 = vmul.f32 %v4146, %v3777
        %v4148 = vand.u32 2147483647, %v3777
        %vm4149 = vcmp.lt.f32.partialorder %v4148, 0.0004427343
        %v4150 = vsel %vm4149, %v4147, %v4144
        %v4151 = vadd.f32 %v3779, 1.0
        %v4152 = vlog2.pop %v4151
        %v4153 = vmul.f32 %v4152, 0.6931472
        %v4154 = vmul.f32 -0.5, %v3779
        %v4155 = vadd.f32 %v4154, 1.0
        %v4156 = vmul.f32 %v4155, %v3779
        %v4157 = vand.u32 2147483647, %v3779
        %vm4158 = vcmp.lt.f32.partialorder %v4157, 0.0004427343
        %v4159 = vsel %vm4158, %v4156, %v4153
        %v4160 = vadd.f32 %v3781, 1.0
        %v4161 = vlog2.pop %v4160
        %v4162 = vmul.f32 %v4161, 0.6931472
        %v4163 = vmul.f32 -0.5, %v3781
        %v4164 = vadd.f32 %v4163, 1.0
        %v4165 = vmul.f32 %v4164, %v3781
        %v4166 = vand.u32 2147483647, %v3781
        %vm4167 = vcmp.lt.f32.partialorder %v4166, 0.0004427343
        %v4168 = vsel %vm4167, %v4165, %v4162
        %v4169 = vadd.f32 %v3783, 1.0
        %v4170 = vlog2.pop %v4169
        %v4171 = vmul.f32 %v4170, 0.6931472
        %v4172 = vmul.f32 -0.5, %v3783
        %v4173 = vadd.f32 %v4172, 1.0
        %v4174 = vmul.f32 %v4173, %v3783
        %v4175 = vand.u32 2147483647, %v3783
        %vm4176 = vcmp.lt.f32.partialorder %v4175, 0.0004427343
        %v4177 = vsel %vm4176, %v4174, %v4171
        %v4178 = vadd.f32 %v3785, 1.0
        %v4179 = vlog2.pop %v4178
        %v4180 = vmul.f32 %v4179, 0.6931472
        %v4181 = vmul.f32 -0.5, %v3785
        %v4182 = vadd.f32 %v4181, 1.0
        %v4183 = vmul.f32 %v4182, %v3785
        %v4184 = vand.u32 2147483647, %v3785
        %vm4185 = vcmp.lt.f32.partialorder %v4184, 0.0004427343
        %v4186 = vsel %vm4185, %v4183, %v4180
        %v4187 = vadd.f32 %v3787, 1.0
        %v4188 = vlog2.pop %v4187
        %v4189 = vmul.f32 %v4188, 0.6931472
        %v4190 = vmul.f32 -0.5, %v3787
        %v4191 = vadd.f32 %v4190, 1.0
        %v4192 = vmul.f32 %v4191, %v3787
        %v4193 = vand.u32 2147483647, %v3787
        %vm4194 = vcmp.lt.f32.partialorder %v4193, 0.0004427343
        %v4195 = vsel %vm4194, %v4192, %v4189
        %v4196 = vadd.f32 %v3789, 1.0
        %v4197 = vlog2.pop %v4196
        %v4198 = vmul.f32 %v4197, 0.6931472
        %v4199 = vmul.f32 -0.5, %v3789
        %v4200 = vadd.f32 %v4199, 1.0
        %v4201 = vmul.f32 %v4200, %v3789
        %v4202 = vand.u32 2147483647, %v3789
        %vm4203 = vcmp.lt.f32.partialorder %v4202, 0.0004427343
        %v4204 = vsel %vm4203, %v4201, %v4198
        %v4205 = vadd.f32 %v3791, 1.0
        %v4206 = vlog2.pop %v4205
        %v4207 = vmul.f32 %v4206, 0.6931472
        %v4208 = vmul.f32 -0.5, %v3791
        %v4209 = vadd.f32 %v4208, 1.0
        %v4210 = vmul.f32 %v4209, %v3791
        %v4211 = vand.u32 2147483647, %v3791
        %vm4212 = vcmp.lt.f32.partialorder %v4211, 0.0004427343
        %v4213 = vsel %vm4212, %v4210, %v4207
        %v4214 = vadd.f32 %v3793, 1.0
        %v4215 = vlog2.pop %v4214
        %v4216 = vmul.f32 %v4215, 0.6931472
        %v4217 = vmul.f32 -0.5, %v3793
        %v4218 = vadd.f32 %v4217, 1.0
        %v4219 = vmul.f32 %v4218, %v3793
        %v4220 = vand.u32 2147483647, %v3793
        %vm4221 = vcmp.lt.f32.partialorder %v4220, 0.0004427343
        %v4222 = vsel %vm4221, %v4219, %v4216
        %v4223 = vadd.f32 %v3795, 1.0
        %v4224 = vlog2.pop %v4223
        %v4225 = vmul.f32 %v4224, 0.6931472
        %v4226 = vmul.f32 -0.5, %v3795
        %v4227 = vadd.f32 %v4226, 1.0
        %v4228 = vmul.f32 %v4227, %v3795
        %v4229 = vand.u32 2147483647, %v3795
        %vm4230 = vcmp.lt.f32.partialorder %v4229, 0.0004427343
        %v4231 = vsel %vm4230, %v4228, %v4225
        %v4232 = vadd.f32 %v3797, 1.0
        %v4233 = vlog2.pop %v4232
        %v4234 = vmul.f32 %v4233, 0.6931472
        %v4235 = vmul.f32 -0.5, %v3797
        %v4236 = vadd.f32 %v4235, 1.0
        %v4237 = vmul.f32 %v4236, %v3797
        %v4238 = vand.u32 2147483647, %v3797
        %vm4239 = vcmp.lt.f32.partialorder %v4238, 0.0004427343
        %v4240 = vsel %vm4239, %v4237, %v4234
        %v4241 = vadd.f32 %v3799, 1.0
        %v4242 = vlog2.pop %v4241
        %v4243 = vmul.f32 %v4242, 0.6931472
        %v4244 = vmul.f32 -0.5, %v3799
        %v4245 = vadd.f32 %v4244, 1.0
        %v4246 = vmul.f32 %v4245, %v3799
        %v4247 = vand.u32 2147483647, %v3799
        %vm4248 = vcmp.lt.f32.partialorder %v4247, 0.0004427343
        %v4249 = vsel %vm4248, %v4246, %v4243
        %v4250 = vadd.f32 %v3801, 1.0
        %v4251 = vlog2.pop %v4250
        %v4252 = vmul.f32 %v4251, 0.6931472
        %v4253 = vmul.f32 -0.5, %v3801
        %v4254 = vadd.f32 %v4253, 1.0
        %v4255 = vmul.f32 %v4254, %v3801
        %v4256 = vand.u32 2147483647, %v3801
        %vm4257 = vcmp.lt.f32.partialorder %v4256, 0.0004427343
        %v4258 = vsel %vm4257, %v4255, %v4252
        %v4259 = vadd.f32 %v3803, 1.0
        %v4260 = vlog2.pop %v4259
        %v4261 = vmul.f32 %v4260, 0.6931472
        %v4262 = vmul.f32 -0.5, %v3803
        %v4263 = vadd.f32 %v4262, 1.0
        %v4264 = vmul.f32 %v4263, %v3803
        %v4265 = vand.u32 2147483647, %v3803
        %vm4266 = vcmp.lt.f32.partialorder %v4265, 0.0004427343
        %v4267 = vsel %vm4266, %v4264, %v4261
        %v4268 = vadd.f32 %v3805, 1.0
        %v4269 = vlog2.pop %v4268
        %v4270 = vmul.f32 %v4269, 0.6931472
        %v4271 = vmul.f32 -0.5, %v3805
        %v4272 = vadd.f32 %v4271, 1.0
        %v4273 = vmul.f32 %v4272, %v3805
        %v4274 = vand.u32 2147483647, %v3805
        %vm4275 = vcmp.lt.f32.partialorder %v4274, 0.0004427343
        %v4276 = vsel %vm4275, %v4273, %v4270
        %v4277 = vadd.f32 %v3807, 1.0
        %v4278 = vlog2.pop %v4277
        %v4279 = vmul.f32 %v4278, 0.6931472
        %v4280 = vmul.f32 -0.5, %v3807
        %v4281 = vadd.f32 %v4280, 1.0
        %v4282 = vmul.f32 %v4281, %v3807
        %v4283 = vand.u32 2147483647, %v3807
        %vm4284 = vcmp.lt.f32.partialorder %v4283, 0.0004427343
        %v4285 = vsel %vm4284, %v4282, %v4279
        %v4286 = vadd.f32 %v3809, 1.0
        %v4287 = vlog2.pop %v4286
        %v4288 = vmul.f32 %v4287, 0.6931472
        %v4289 = vmul.f32 -0.5, %v3809
        %v4290 = vadd.f32 %v4289, 1.0
        %v4291 = vmul.f32 %v4290, %v3809
        %v4292 = vand.u32 2147483647, %v3809
        %vm4293 = vcmp.lt.f32.partialorder %v4292, 0.0004427343
        %v4294 = vsel %vm4293, %v4291, %v4288
        %v4295 = vadd.f32 %v3811, 1.0
        %v4296 = vlog2.pop %v4295
        %v4297 = vmul.f32 %v4296, 0.6931472
        %v4298 = vmul.f32 -0.5, %v3811
        %v4299 = vadd.f32 %v4298, 1.0
        %v4300 = vmul.f32 %v4299, %v3811
        %v4301 = vand.u32 2147483647, %v3811
        %vm4302 = vcmp.lt.f32.partialorder %v4301, 0.0004427343
        %v4303 = vsel %vm4302, %v4300, %v4297
        %v4304 = vadd.f32 %v3813, 1.0
        %v4305 = vlog2.pop %v4304
        %v4306 = vmul.f32 %v4305, 0.6931472
        %v4307 = vmul.f32 -0.5, %v3813
        %v4308 = vadd.f32 %v4307, 1.0
        %v4309 = vmul.f32 %v4308, %v3813
        %v4310 = vand.u32 2147483647, %v3813
        %vm4311 = vcmp.lt.f32.partialorder %v4310, 0.0004427343
        %v4312 = vsel %vm4311, %v4309, %v4306
        %v4313 = vadd.f32 %v3815, 1.0
        %v4314 = vlog2.pop %v4313
        %v4315 = vmul.f32 %v4314, 0.6931472
        %v4316 = vmul.f32 -0.5, %v3815
        %v4317 = vadd.f32 %v4316, 1.0
        %v4318 = vmul.f32 %v4317, %v3815
        %v4319 = vand.u32 2147483647, %v3815
        %vm4320 = vcmp.lt.f32.partialorder %v4319, 0.0004427343
        %v4321 = vsel %vm4320, %v4318, %v4315
        %v4322 = vadd.f32 %v3817, 1.0
        %v4323 = vlog2.pop %v4322
        %v4324 = vmul.f32 %v4323, 0.6931472
        %v4325 = vmul.f32 -0.5, %v3817
        %v4326 = vadd.f32 %v4325, 1.0
        %v4327 = vmul.f32 %v4326, %v3817
        %v4328 = vand.u32 2147483647, %v3817
        %vm4329 = vcmp.lt.f32.partialorder %v4328, 0.0004427343
        %v4330 = vsel %vm4329, %v4327, %v4324
        %v4331 = vadd.f32 %v3819, 1.0
        %v4332 = vlog2.pop %v4331
        %v4333 = vmul.f32 %v4332, 0.6931472
        %v4334 = vmul.f32 -0.5, %v3819
        %v4335 = vadd.f32 %v4334, 1.0
        %v4336 = vmul.f32 %v4335, %v3819
        %v4337 = vand.u32 2147483647, %v3819
        %vm4338 = vcmp.lt.f32.partialorder %v4337, 0.0004427343
        %v4339 = vsel %vm4338, %v4336, %v4333
        %v4340 = vadd.f32 %v3821, 1.0
        %v4341 = vlog2.pop %v4340
        %v4342 = vmul.f32 %v4341, 0.6931472
        %v4343 = vmul.f32 -0.5, %v3821
        %v4344 = vadd.f32 %v4343, 1.0
        %v4345 = vmul.f32 %v4344, %v3821
        %v4346 = vand.u32 2147483647, %v3821
        %vm4347 = vcmp.lt.f32.partialorder %v4346, 0.0004427343
        %v4348 = vsel %vm4347, %v4345, %v4342
        %v4349 = vadd.f32 %v3823, 1.0
        %v4350 = vlog2.pop %v4349
        %v4351 = vmul.f32 %v4350, 0.6931472
        %v4352 = vmul.f32 -0.5, %v3823
        %v4353 = vadd.f32 %v4352, 1.0
        %v4354 = vmul.f32 %v4353, %v3823
        %v4355 = vand.u32 2147483647, %v3823
        %vm4356 = vcmp.lt.f32.partialorder %v4355, 0.0004427343
        %v4357 = vsel %vm4356, %v4354, %v4351
        %v4358 = vadd.f32 %v3825, 1.0
        %v4359 = vlog2.pop %v4358
        %v4360 = vmul.f32 %v4359, 0.6931472
        %v4361 = vmul.f32 -0.5, %v3825
        %v4362 = vadd.f32 %v4361, 1.0
        %v4363 = vmul.f32 %v4362, %v3825
        %v4364 = vand.u32 2147483647, %v3825
        %vm4365 = vcmp.lt.f32.partialorder %v4364, 0.0004427343
        %v4366 = vsel %vm4365, %v4363, %v4360
        %v4367 = vadd.f32 %v3827, 1.0
        %v4368 = vlog2.pop %v4367
        %v4369 = vmul.f32 %v4368, 0.6931472
        %v4370 = vmul.f32 -0.5, %v3827
        %v4371 = vadd.f32 %v4370, 1.0
        %v4372 = vmul.f32 %v4371, %v3827
        %v4373 = vand.u32 2147483647, %v3827
        %vm4374 = vcmp.lt.f32.partialorder %v4373, 0.0004427343
        %v4375 = vsel %vm4374, %v4372, %v4369
        %v4376 = vadd.f32 %v3829, 1.0
        %v4377 = vlog2.pop %v4376
        %v4378 = vmul.f32 %v4377, 0.6931472
        %v4379 = vmul.f32 -0.5, %v3829
        %v4380 = vadd.f32 %v4379, 1.0
        %v4381 = vmul.f32 %v4380, %v3829
        %v4382 = vand.u32 2147483647, %v3829
        %vm4383 = vcmp.lt.f32.partialorder %v4382, 0.0004427343
        %v4384 = vsel %vm4383, %v4381, %v4378
        %v4385 = vadd.f32 %v3831, 1.0
        %v4386 = vlog2.pop %v4385
        %v4387 = vmul.f32 %v4386, 0.6931472
        %v4388 = vmul.f32 -0.5, %v3831
        %v4389 = vadd.f32 %v4388, 1.0
        %v4390 = vmul.f32 %v4389, %v3831
        %v4391 = vand.u32 2147483647, %v3831
        %vm4392 = vcmp.lt.f32.partialorder %v4391, 0.0004427343
        %v4393 = vsel %vm4392, %v4390, %v4387
        %v4394 = vadd.f32 %v3833, 1.0
        %v4395 = vlog2.pop %v4394
        %v4396 = vmul.f32 %v4395, 0.6931472
        %v4397 = vmul.f32 -0.5, %v3833
        %v4398 = vadd.f32 %v4397, 1.0
        %v4399 = vmul.f32 %v4398, %v3833
        %v4400 = vand.u32 2147483647, %v3833
        %vm4401 = vcmp.lt.f32.partialorder %v4400, 0.0004427343
        %v4402 = vsel %vm4401, %v4399, %v4396
        %v4403 = vadd.f32 %v3835, 1.0
        %v4404 = vlog2.pop %v4403
        %v4405 = vmul.f32 %v4404, 0.6931472
        %v4406 = vmul.f32 -0.5, %v3835
        %v4407 = vadd.f32 %v4406, 1.0
        %v4408 = vmul.f32 %v4407, %v3835
        %v4409 = vand.u32 2147483647, %v3835
        %vm4410 = vcmp.lt.f32.partialorder %v4409, 0.0004427343
        %v4411 = vsel %vm4410, %v4408, %v4405
        %v4412 = vadd.f32 %v3516, %v3844
        %v4413 = vadd.f32 %v3517, %v3853
        %v4414 = vadd.f32 %v3518, %v3862
        %v4415 = vadd.f32 %v3519, %v3871
        %v4416 = vadd.f32 %v3520, %v3880
        %v4417 = vadd.f32 %v3521, %v3889
        %v4418 = vadd.f32 %v3522, %v3898
        %v4419 = vadd.f32 %v3523, %v3907
        %v4420 = vadd.f32 %v3524, %v3916
        %v4421 = vadd.f32 %v3525, %v3925
        %v4422 = vadd.f32 %v3526, %v3934
        %v4423 = vadd.f32 %v3527, %v3943
        %v4424 = vadd.f32 %v3528, %v3952
        %v4425 = vadd.f32 %v3529, %v3961
        %v4426 = vadd.f32 %v3530, %v3970
        %v4427 = vadd.f32 %v3531, %v3979
        %v4428 = vadd.f32 %v3532, %v3988
        %v4429 = vadd.f32 %v3533, %v3997
        %v4430 = vadd.f32 %v3534, %v4006
        %v4431 = vadd.f32 %v3535, %v4015
        %v4432 = vadd.f32 %v3536, %v4024
        %v4433 = vadd.f32 %v3537, %v4033
        %v4434 = vadd.f32 %v3538, %v4042
        %v4435 = vadd.f32 %v3539, %v4051
        %v4436 = vadd.f32 %v3540, %v4060
        %v4437 = vadd.f32 %v3541, %v4069
        %v4438 = vadd.f32 %v3542, %v4078
        %v4439 = vadd.f32 %v3543, %v4087
        %v4440 = vadd.f32 %v3544, %v4096
        %v4441 = vadd.f32 %v3545, %v4105
        %v4442 = vadd.f32 %v3546, %v4114
        %v4443 = vadd.f32 %v3547, %v4123
        %v4444 = vadd.f32 %v3548, %v4132
        %v4445 = vadd.f32 %v3549, %v4141
        %v4446 = vadd.f32 %v3550, %v4150
        %v4447 = vadd.f32 %v3551, %v4159
        %v4448 = vadd.f32 %v3552, %v4168
        %v4449 = vadd.f32 %v3553, %v4177
        %v4450 = vadd.f32 %v3554, %v4186
        %v4451 = vadd.f32 %v3555, %v4195
        %v4452 = vadd.f32 %v3556, %v4204
        %v4453 = vadd.f32 %v3557, %v4213
        %v4454 = vadd.f32 %v3558, %v4222
        %v4455 = vadd.f32 %v3559, %v4231
        %v4456 = vadd.f32 %v3560, %v4240
        %v4457 = vadd.f32 %v3561, %v4249
        %v4458 = vadd.f32 %v3562, %v4258
        %v4459 = vadd.f32 %v3563, %v4267
        %v4460 = vadd.f32 %v3564, %v4276
        %v4461 = vadd.f32 %v3565, %v4285
        %v4462 = vadd.f32 %v3566, %v4294
        %v4463 = vadd.f32 %v3567, %v4303
        %v4464 = vadd.f32 %v3568, %v4312
        %v4465 = vadd.f32 %v3569, %v4321
        %v4466 = vadd.f32 %v3570, %v4330
        %v4467 = vadd.f32 %v3571, %v4339
        %v4468 = vadd.f32 %v3572, %v4348
        %v4469 = vadd.f32 %v3573, %v4357
        %v4470 = vadd.f32 %v3574, %v4366
        %v4471 = vadd.f32 %v3575, %v4375
        %v4472 = vadd.f32 %v3576, %v4384
        %v4473 = vadd.f32 %v3577, %v4393
        %v4474 = vadd.f32 %v3578, %v4402
        %v4475 = vadd.f32 %v3579, %v4411
        %v4476 = vmul.f32 %v3006, -0.5
        %v4477 = vmul.f32 %v3011, -0.5
        %v4478 = vmul.f32 %v3016, -0.5
        %v4479 = vmul.f32 %v3021, -0.5
        %v4480 = vmul.f32 %v3026, -0.5
        %v4481 = vmul.f32 %v3031, -0.5
        %v4482 = vmul.f32 %v3036, -0.5
        %v4483 = vmul.f32 %v3041, -0.5
        %v4484 = vmul.f32 %v3046, -0.5
        %v4485 = vmul.f32 %v3051, -0.5
        %v4486 = vmul.f32 %v3056, -0.5
        %v4487 = vmul.f32 %v3061, -0.5
        %v4488 = vmul.f32 %v3066, -0.5
        %v4489 = vmul.f32 %v3071, -0.5
        %v4490 = vmul.f32 %v3076, -0.5
        %v4491 = vmul.f32 %v3081, -0.5
        %v4492 = vmul.f32 %v3086, -0.5
        %v4493 = vmul.f32 %v3091, -0.5
        %v4494 = vmul.f32 %v3096, -0.5
        %v4495 = vmul.f32 %v3101, -0.5
        %v4496 = vmul.f32 %v3106, -0.5
        %v4497 = vmul.f32 %v3111, -0.5
        %v4498 = vmul.f32 %v3116, -0.5
        %v4499 = vmul.f32 %v3121, -0.5
        %v4500 = vmul.f32 %v3126, -0.5
        %v4501 = vmul.f32 %v3131, -0.5
        %v4502 = vmul.f32 %v3136, -0.5
        %v4503 = vmul.f32 %v3141, -0.5
        %v4504 = vmul.f32 %v3146, -0.5
        %v4505 = vmul.f32 %v3151, -0.5
        %v4506 = vmul.f32 %v3156, -0.5
        %v4507 = vmul.f32 %v3161, -0.5
        %v4508 = vmul.f32 %v3166, -0.5
        %v4509 = vmul.f32 %v3171, -0.5
        %v4510 = vmul.f32 %v3176, -0.5
        %v4511 = vmul.f32 %v3181, -0.5
        %v4512 = vmul.f32 %v3186, -0.5
        %v4513 = vmul.f32 %v3191, -0.5
        %v4514 = vmul.f32 %v3196, -0.5
        %v4515 = vmul.f32 %v3201, -0.5
        %v4516 = vmul.f32 %v3206, -0.5
        %v4517 = vmul.f32 %v3211, -0.5
        %v4518 = vmul.f32 %v3216, -0.5
        %v4519 = vmul.f32 %v3221, -0.5
        %v4520 = vmul.f32 %v3226, -0.5
        %v4521 = vmul.f32 %v3231, -0.5
        %v4522 = vmul.f32 %v3236, -0.5
        %v4523 = vmul.f32 %v3241, -0.5
        %v4524 = vmul.f32 %v3246, -0.5
        %v4525 = vmul.f32 %v3251, -0.5
        %v4526 = vmul.f32 %v3256, -0.5
        %v4527 = vmul.f32 %v3261, -0.5
        %v4528 = vmul.f32 %v3266, -0.5
        %v4529 = vmul.f32 %v3271, -0.5
        %v4530 = vmul.f32 %v3276, -0.5
        %v4531 = vmul.f32 %v3281, -0.5
        %v4532 = vmul.f32 %v3286, -0.5
        %v4533 = vmul.f32 %v3291, -0.5
        %v4534 = vmul.f32 %v3296, -0.5
        %v4535 = vmul.f32 %v3301, -0.5
        %v4536 = vmul.f32 %v3306, -0.5
        %v4537 = vmul.f32 %v3311, -0.5
        %v4538 = vmul.f32 %v3316, -0.5
        %v4539 = vmul.f32 %v3321, -0.5
        %v4540 = vmul.f32 %v4476, %v3006
        %v4541 = vmul.f32 %v4477, %v3011
        %v4542 = vmul.f32 %v4478, %v3016
        %v4543 = vmul.f32 %v4479, %v3021
        %v4544 = vmul.f32 %v4480, %v3026
        %v4545 = vmul.f32 %v4481, %v3031
        %v4546 = vmul.f32 %v4482, %v3036
        %v4547 = vmul.f32 %v4483, %v3041
        %v4548 = vmul.f32 %v4484, %v3046
        %v4549 = vmul.f32 %v4485, %v3051
        %v4550 = vmul.f32 %v4486, %v3056
        %v4551 = vmul.f32 %v4487, %v3061
        %v4552 = vmul.f32 %v4488, %v3066
        %v4553 = vmul.f32 %v4489, %v3071
        %v4554 = vmul.f32 %v4490, %v3076
        %v4555 = vmul.f32 %v4491, %v3081
        %v4556 = vmul.f32 %v4492, %v3086
        %v4557 = vmul.f32 %v4493, %v3091
        %v4558 = vmul.f32 %v4494, %v3096
        %v4559 = vmul.f32 %v4495, %v3101
        %v4560 = vmul.f32 %v4496, %v3106
        %v4561 = vmul.f32 %v4497, %v3111
        %v4562 = vmul.f32 %v4498, %v3116
        %v4563 = vmul.f32 %v4499, %v3121
        %v4564 = vmul.f32 %v4500, %v3126
        %v4565 = vmul.f32 %v4501, %v3131
        %v4566 = vmul.f32 %v4502, %v3136
        %v4567 = vmul.f32 %v4503, %v3141
        %v4568 = vmul.f32 %v4504, %v3146
        %v4569 = vmul.f32 %v4505, %v3151
        %v4570 = vmul.f32 %v4506, %v3156
        %v4571 = vmul.f32 %v4507, %v3161
        %v4572 = vmul.f32 %v4508, %v3166
        %v4573 = vmul.f32 %v4509, %v3171
        %v4574 = vmul.f32 %v4510, %v3176
        %v4575 = vmul.f32 %v4511, %v3181
        %v4576 = vmul.f32 %v4512, %v3186
        %v4577 = vmul.f32 %v4513, %v3191
        %v4578 = vmul.f32 %v4514, %v3196
        %v4579 = vmul.f32 %v4515, %v3201
        %v4580 = vmul.f32 %v4516, %v3206
        %v4581 = vmul.f32 %v4517, %v3211
        %v4582 = vmul.f32 %v4518, %v3216
        %v4583 = vmul.f32 %v4519, %v3221
        %v4584 = vmul.f32 %v4520, %v3226
        %v4585 = vmul.f32 %v4521, %v3231
        %v4586 = vmul.f32 %v4522, %v3236
        %v4587 = vmul.f32 %v4523, %v3241
        %v4588 = vmul.f32 %v4524, %v3246
        %v4589 = vmul.f32 %v4525, %v3251
        %v4590 = vmul.f32 %v4526, %v3256
        %v4591 = vmul.f32 %v4527, %v3261
        %v4592 = vmul.f32 %v4528, %v3266
        %v4593 = vmul.f32 %v4529, %v3271
        %v4594 = vmul.f32 %v4530, %v3276
        %v4595 = vmul.f32 %v4531, %v3281
        %v4596 = vmul.f32 %v4532, %v3286
        %v4597 = vmul.f32 %v4533, %v3291
        %v4598 = vmul.f32 %v4534, %v3296
        %v4599 = vmul.f32 %v4535, %v3301
        %v4600 = vmul.f32 %v4536, %v3306
        %v4601 = vmul.f32 %v4537, %v3311
        %v4602 = vmul.f32 %v4538, %v3316
        %v4603 = vmul.f32 %v4539, %v3321
        %v4604 = vsub.f32 %v4540, %v2489
        %v4605 = vsub.f32 %v4541, %v2490
        %v4606 = vsub.f32 %v4542, %v2491
        %v4607 = vsub.f32 %v4543, %v2492
        %v4608 = vsub.f32 %v4544, %v2493
        %v4609 = vsub.f32 %v4545, %v2494
        %v4610 = vsub.f32 %v4546, %v2495
        %v4611 = vsub.f32 %v4547, %v2496
        %v4612 = vsub.f32 %v4548, %v2497
        %v4613 = vsub.f32 %v4549, %v2498
        %v4614 = vsub.f32 %v4550, %v2499
        %v4615 = vsub.f32 %v4551, %v2500
        %v4616 = vsub.f32 %v4552, %v2501
        %v4617 = vsub.f32 %v4553, %v2502
        %v4618 = vsub.f32 %v4554, %v2503
        %v4619 = vsub.f32 %v4555, %v2504
        %v4620 = vsub.f32 %v4556, %v2505
        %v4621 = vsub.f32 %v4557, %v2506
        %v4622 = vsub.f32 %v4558, %v2507
        %v4623 = vsub.f32 %v4559, %v2508
        %v4624 = vsub.f32 %v4560, %v2509
        %v4625 = vsub.f32 %v4561, %v2510
        %v4626 = vsub.f32 %v4562, %v2511
        %v4627 = vsub.f32 %v4563, %v2512
        %v4628 = vsub.f32 %v4564, %v2513
        %v4629 = vsub.f32 %v4565, %v2514
        %v4630 = vsub.f32 %v4566, %v2515
        %v4631 = vsub.f32 %v4567, %v2516
        %v4632 = vsub.f32 %v4568, %v2517
        %v4633 = vsub.f32 %v4569, %v2518
        %v4634 = vsub.f32 %v4570, %v2519
        %v4635 = vsub.f32 %v4571, %v2520
        %v4636 = vsub.f32 %v4572, %v2521
        %v4637 = vsub.f32 %v4573, %v2522
        %v4638 = vsub.f32 %v4574, %v2523
        %v4639 = vsub.f32 %v4575, %v2524
        %v4640 = vsub.f32 %v4576, %v2525
        %v4641 = vsub.f32 %v4577, %v2526
        %v4642 = vsub.f32 %v4578, %v2527
        %v4643 = vsub.f32 %v4579, %v2528
        %v4644 = vsub.f32 %v4580, %v2529
        %v4645 = vsub.f32 %v4581, %v2530
        %v4646 = vsub.f32 %v4582, %v2531
        %v4647 = vsub.f32 %v4583, %v2532
        %v4648 = vsub.f32 %v4584, %v2533
        %v4649 = vsub.f32 %v4585, %v2534
        %v4650 = vsub.f32 %v4586, %v2535
        %v4651 = vsub.f32 %v4587, %v2536
        %v4652 = vsub.f32 %v4588, %v2537
        %v4653 = vsub.f32 %v4589, %v2538
        %v4654 = vsub.f32 %v4590, %v2539
        %v4655 = vsub.f32 %v4591, %v2540
        %v4656 = vsub.f32 %v4592, %v2541
        %v4657 = vsub.f32 %v4593, %v2542
        %v4658 = vsub.f32 %v4594, %v2543
        %v4659 = vsub.f32 %v4595, %v2544
        %v4660 = vsub.f32 %v4596, %v2545
        %v4661 = vsub.f32 %v4597, %v2546
        %v4662 = vsub.f32 %v4598, %v2547
        %v4663 = vsub.f32 %v4599, %v2548
        %v4664 = vsub.f32 %v4600, %v2549
        %v4665 = vsub.f32 %v4601, %v2550
        %v4666 = vsub.f32 %v4602, %v2551
        %v4667 = vsub.f32 %v4603, %v2552
        %v4668 = vsub.f32 %v4604, 0.9189385
        %v4669 = vsub.f32 %v4605, 0.9189385
        %v4670 = vsub.f32 %v4606, 0.9189385
        %v4671 = vsub.f32 %v4607, 0.9189385
        %v4672 = vsub.f32 %v4608, 0.9189385
        %v4673 = vsub.f32 %v4609, 0.9189385
        %v4674 = vsub.f32 %v4610, 0.9189385
        %v4675 = vsub.f32 %v4611, 0.9189385
        %v4676 = vsub.f32 %v4612, 0.9189385
        %v4677 = vsub.f32 %v4613, 0.9189385
        %v4678 = vsub.f32 %v4614, 0.9189385
        %v4679 = vsub.f32 %v4615, 0.9189385
        %v4680 = vsub.f32 %v4616, 0.9189385
        %v4681 = vsub.f32 %v4617, 0.9189385
        %v4682 = vsub.f32 %v4618, 0.9189385
        %v4683 = vsub.f32 %v4619, 0.9189385
        %v4684 = vsub.f32 %v4620, 0.9189385
        %v4685 = vsub.f32 %v4621, 0.9189385
        %v4686 = vsub.f32 %v4622, 0.9189385
        %v4687 = vsub.f32 %v4623, 0.9189385
        %v4688 = vsub.f32 %v4624, 0.9189385
        %v4689 = vsub.f32 %v4625, 0.9189385
        %v4690 = vsub.f32 %v4626, 0.9189385
        %v4691 = vsub.f32 %v4627, 0.9189385
        %v4692 = vsub.f32 %v4628, 0.9189385
        %v4693 = vsub.f32 %v4629, 0.9189385
        %v4694 = vsub.f32 %v4630, 0.9189385
        %v4695 = vsub.f32 %v4631, 0.9189385
        %v4696 = vsub.f32 %v4632, 0.9189385
        %v4697 = vsub.f32 %v4633, 0.9189385
        %v4698 = vsub.f32 %v4634, 0.9189385
        %v4699 = vsub.f32 %v4635, 0.9189385
        %v4700 = vsub.f32 %v4636, 0.9189385
        %v4701 = vsub.f32 %v4637, 0.9189385
        %v4702 = vsub.f32 %v4638, 0.9189385
        %v4703 = vsub.f32 %v4639, 0.9189385
        %v4704 = vsub.f32 %v4640, 0.9189385
        %v4705 = vsub.f32 %v4641, 0.9189385
        %v4706 = vsub.f32 %v4642, 0.9189385
        %v4707 = vsub.f32 %v4643, 0.9189385
        %v4708 = vsub.f32 %v4644, 0.9189385
        %v4709 = vsub.f32 %v4645, 0.9189385
        %v4710 = vsub.f32 %v4646, 0.9189385
        %v4711 = vsub.f32 %v4647, 0.9189385
        %v4712 = vsub.f32 %v4648, 0.9189385
        %v4713 = vsub.f32 %v4649, 0.9189385
        %v4714 = vsub.f32 %v4650, 0.9189385
        %v4715 = vsub.f32 %v4651, 0.9189385
        %v4716 = vsub.f32 %v4652, 0.9189385
        %v4717 = vsub.f32 %v4653, 0.9189385
        %v4718 = vsub.f32 %v4654, 0.9189385
        %v4719 = vsub.f32 %v4655, 0.9189385
        %v4720 = vsub.f32 %v4656, 0.9189385
        %v4721 = vsub.f32 %v4657, 0.9189385
        %v4722 = vsub.f32 %v4658, 0.9189385
        %v4723 = vsub.f32 %v4659, 0.9189385
        %v4724 = vsub.f32 %v4660, 0.9189385
        %v4725 = vsub.f32 %v4661, 0.9189385
        %v4726 = vsub.f32 %v4662, 0.9189385
        %v4727 = vsub.f32 %v4663, 0.9189385
        %v4728 = vsub.f32 %v4664, 0.9189385
        %v4729 = vsub.f32 %v4665, 0.9189385
        %v4730 = vsub.f32 %v4666, 0.9189385
        %v4731 = vsub.f32 %v4667, 0.9189385
        %v4732 = vsub.f32 0.6931472, %v3388
        %v4733 = vsub.f32 0.6931472, %v3389
        %v4734 = vsub.f32 0.6931472, %v3390
        %v4735 = vsub.f32 0.6931472, %v3391
        %v4736 = vsub.f32 0.6931472, %v3392
        %v4737 = vsub.f32 0.6931472, %v3393
        %v4738 = vsub.f32 0.6931472, %v3394
        %v4739 = vsub.f32 0.6931472, %v3395
        %v4740 = vsub.f32 0.6931472, %v3396
        %v4741 = vsub.f32 0.6931472, %v3397
        %v4742 = vsub.f32 0.6931472, %v3398
        %v4743 = vsub.f32 0.6931472, %v3399
        %v4744 = vsub.f32 0.6931472, %v3400
        %v4745 = vsub.f32 0.6931472, %v3401
        %v4746 = vsub.f32 0.6931472, %v3402
        %v4747 = vsub.f32 0.6931472, %v3403
        %v4748 = vsub.f32 0.6931472, %v3404
        %v4749 = vsub.f32 0.6931472, %v3405
        %v4750 = vsub.f32 0.6931472, %v3406
        %v4751 = vsub.f32 0.6931472, %v3407
        %v4752 = vsub.f32 0.6931472, %v3408
        %v4753 = vsub.f32 0.6931472, %v3409
        %v4754 = vsub.f32 0.6931472, %v3410
        %v4755 = vsub.f32 0.6931472, %v3411
        %v4756 = vsub.f32 0.6931472, %v3412
        %v4757 = vsub.f32 0.6931472, %v3413
        %v4758 = vsub.f32 0.6931472, %v3414
        %v4759 = vsub.f32 0.6931472, %v3415
        %v4760 = vsub.f32 0.6931472, %v3416
        %v4761 = vsub.f32 0.6931472, %v3417
        %v4762 = vsub.f32 0.6931472, %v3418
        %v4763 = vsub.f32 0.6931472, %v3419
        %v4764 = vsub.f32 0.6931472, %v3420
        %v4765 = vsub.f32 0.6931472, %v3421
        %v4766 = vsub.f32 0.6931472, %v3422
        %v4767 = vsub.f32 0.6931472, %v3423
        %v4768 = vsub.f32 0.6931472, %v3424
        %v4769 = vsub.f32 0.6931472, %v3425
        %v4770 = vsub.f32 0.6931472, %v3426
        %v4771 = vsub.f32 0.6931472, %v3427
        %v4772 = vsub.f32 0.6931472, %v3428
        %v4773 = vsub.f32 0.6931472, %v3429
        %v4774 = vsub.f32 0.6931472, %v3430
        %v4775 = vsub.f32 0.6931472, %v3431
        %v4776 = vsub.f32 0.6931472, %v3432
        %v4777 = vsub.f32 0.6931472, %v3433
        %v4778 = vsub.f32 0.6931472, %v3434
        %v4779 = vsub.f32 0.6931472, %v3435
        %v4780 = vsub.f32 0.6931472, %v3436
        %v4781 = vsub.f32 0.6931472, %v3437
        %v4782 = vsub.f32 0.6931472, %v3438
        %v4783 = vsub.f32 0.6931472, %v3439
        %v4784 = vsub.f32 0.6931472, %v3440
        %v4785 = vsub.f32 0.6931472, %v3441
        %v4786 = vsub.f32 0.6931472, %v3442
        %v4787 = vsub.f32 0.6931472, %v3443
        %v4788 = vsub.f32 0.6931472, %v3444
        %v4789 = vsub.f32 0.6931472, %v3445
        %v4790 = vsub.f32 0.6931472, %v3446
        %v4791 = vsub.f32 0.6931472, %v3447
        %v4792 = vsub.f32 0.6931472, %v3448
        %v4793 = vsub.f32 0.6931472, %v3449
        %v4794 = vsub.f32 0.6931472, %v3450
        %v4795 = vsub.f32 0.6931472, %v3451
        %v4796 = vsub.f32 %v4732, %v4412
        %v4797 = vsub.f32 %v4733, %v4413
        %v4798 = vsub.f32 %v4734, %v4414
        %v4799 = vsub.f32 %v4735, %v4415
        %v4800 = vsub.f32 %v4736, %v4416
        %v4801 = vsub.f32 %v4737, %v4417
        %v4802 = vsub.f32 %v4738, %v4418
        %v4803 = vsub.f32 %v4739, %v4419
        %v4804 = vsub.f32 %v4740, %v4420
        %v4805 = vsub.f32 %v4741, %v4421
        %v4806 = vsub.f32 %v4742, %v4422
        %v4807 = vsub.f32 %v4743, %v4423
        %v4808 = vsub.f32 %v4744, %v4424
        %v4809 = vsub.f32 %v4745, %v4425
        %v4810 = vsub.f32 %v4746, %v4426
        %v4811 = vsub.f32 %v4747, %v4427
        %v4812 = vsub.f32 %v4748, %v4428
        %v4813 = vsub.f32 %v4749, %v4429
        %v4814 = vsub.f32 %v4750, %v4430
        %v4815 = vsub.f32 %v4751, %v4431
        %v4816 = vsub.f32 %v4752, %v4432
        %v4817 = vsub.f32 %v4753, %v4433
        %v4818 = vsub.f32 %v4754, %v4434
        %v4819 = vsub.f32 %v4755, %v4435
        %v4820 = vsub.f32 %v4756, %v4436
        %v4821 = vsub.f32 %v4757, %v4437
        %v4822 = vsub.f32 %v4758, %v4438
        %v4823 = vsub.f32 %v4759, %v4439
        %v4824 = vsub.f32 %v4760, %v4440
        %v4825 = vsub.f32 %v4761, %v4441
        %v4826 = vsub.f32 %v4762, %v4442
        %v4827 = vsub.f32 %v4763, %v4443
        %v4828 = vsub.f32 %v4764, %v4444
        %v4829 = vsub.f32 %v4765, %v4445
        %v4830 = vsub.f32 %v4766, %v4446
        %v4831 = vsub.f32 %v4767, %v4447
        %v4832 = vsub.f32 %v4768, %v4448
        %v4833 = vsub.f32 %v4769, %v4449
        %v4834 = vsub.f32 %v4770, %v4450
        %v4835 = vsub.f32 %v4771, %v4451
        %v4836 = vsub.f32 %v4772, %v4452
        %v4837 = vsub.f32 %v4773, %v4453
        %v4838 = vsub.f32 %v4774, %v4454
        %v4839 = vsub.f32 %v4775, %v4455
        %v4840 = vsub.f32 %v4776, %v4456
        %v4841 = vsub.f32 %v4777, %v4457
        %v4842 = vsub.f32 %v4778, %v4458
        %v4843 = vsub.f32 %v4779, %v4459
        %v4844 = vsub.f32 %v4780, %v4460
        %v4845 = vsub.f32 %v4781, %v4461
        %v4846 = vsub.f32 %v4782, %v4462
        %v4847 = vsub.f32 %v4783, %v4463
        %v4848 = vsub.f32 %v4784, %v4464
        %v4849 = vsub.f32 %v4785, %v4465
        %v4850 = vsub.f32 %v4786, %v4466
        %v4851 = vsub.f32 %v4787, %v4467
        %v4852 = vsub.f32 %v4788, %v4468
        %v4853 = vsub.f32 %v4789, %v4469
        %v4854 = vsub.f32 %v4790, %v4470
        %v4855 = vsub.f32 %v4791, %v4471
        %v4856 = vsub.f32 %v4792, %v4472
        %v4857 = vsub.f32 %v4793, %v4473
        %v4858 = vsub.f32 %v4794, %v4474
        %v4859 = vsub.f32 %v4795, %v4475
        %v4860 = vmul.f32 %v4796, 2.0
        %v4861 = vmul.f32 %v4797, 2.0
        %v4862 = vmul.f32 %v4798, 2.0
        %v4863 = vmul.f32 %v4799, 2.0
        %v4864 = vmul.f32 %v4800, 2.0
        %v4865 = vmul.f32 %v4801, 2.0
        %v4866 = vmul.f32 %v4802, 2.0
        %v4867 = vmul.f32 %v4803, 2.0
        %v4868 = vmul.f32 %v4804, 2.0
        %v4869 = vmul.f32 %v4805, 2.0
        %v4870 = vmul.f32 %v4806, 2.0
        %v4871 = vmul.f32 %v4807, 2.0
        %v4872 = vmul.f32 %v4808, 2.0
        %v4873 = vmul.f32 %v4809, 2.0
        %v4874 = vmul.f32 %v4810, 2.0
        %v4875 = vmul.f32 %v4811, 2.0
        %v4876 = vmul.f32 %v4812, 2.0
        %v4877 = vmul.f32 %v4813, 2.0
        %v4878 = vmul.f32 %v4814, 2.0
        %v4879 = vmul.f32 %v4815, 2.0
        %v4880 = vmul.f32 %v4816, 2.0
        %v4881 = vmul.f32 %v4817, 2.0
        %v4882 = vmul.f32 %v4818, 2.0
        %v4883 = vmul.f32 %v4819, 2.0
        %v4884 = vmul.f32 %v4820, 2.0
        %v4885 = vmul.f32 %v4821, 2.0
        %v4886 = vmul.f32 %v4822, 2.0
        %v4887 = vmul.f32 %v4823, 2.0
        %v4888 = vmul.f32 %v4824, 2.0
        %v4889 = vmul.f32 %v4825, 2.0
        %v4890 = vmul.f32 %v4826, 2.0
        %v4891 = vmul.f32 %v4827, 2.0
        %v4892 = vmul.f32 %v4828, 2.0
        %v4893 = vmul.f32 %v4829, 2.0
        %v4894 = vmul.f32 %v4830, 2.0
        %v4895 = vmul.f32 %v4831, 2.0
        %v4896 = vmul.f32 %v4832, 2.0
        %v4897 = vmul.f32 %v4833, 2.0
        %v4898 = vmul.f32 %v4834, 2.0
        %v4899 = vmul.f32 %v4835, 2.0
        %v4900 = vmul.f32 %v4836, 2.0
        %v4901 = vmul.f32 %v4837, 2.0
        %v4902 = vmul.f32 %v4838, 2.0
        %v4903 = vmul.f32 %v4839, 2.0
        %v4904 = vmul.f32 %v4840, 2.0
        %v4905 = vmul.f32 %v4841, 2.0
        %v4906 = vmul.f32 %v4842, 2.0
        %v4907 = vmul.f32 %v4843, 2.0
        %v4908 = vmul.f32 %v4844, 2.0
        %v4909 = vmul.f32 %v4845, 2.0
        %v4910 = vmul.f32 %v4846, 2.0
        %v4911 = vmul.f32 %v4847, 2.0
        %v4912 = vmul.f32 %v4848, 2.0
        %v4913 = vmul.f32 %v4849, 2.0
        %v4914 = vmul.f32 %v4850, 2.0
        %v4915 = vmul.f32 %v4851, 2.0
        %v4916 = vmul.f32 %v4852, 2.0
        %v4917 = vmul.f32 %v4853, 2.0
        %v4918 = vmul.f32 %v4854, 2.0
        %v4919 = vmul.f32 %v4855, 2.0
        %v4920 = vmul.f32 %v4856, 2.0
        %v4921 = vmul.f32 %v4857, 2.0
        %v4922 = vmul.f32 %v4858, 2.0
        %v4923 = vmul.f32 %v4859, 2.0
        %v4924 = vsub.f32 %v4668, %v4860
        %v4925 = vsub.f32 %v4669, %v4861
        %v4926 = vsub.f32 %v4670, %v4862
        %v4927 = vsub.f32 %v4671, %v4863
        %v4928 = vsub.f32 %v4672, %v4864
        %v4929 = vsub.f32 %v4673, %v4865
        %v4930 = vsub.f32 %v4674, %v4866
        %v4931 = vsub.f32 %v4675, %v4867
        %v4932 = vsub.f32 %v4676, %v4868
        %v4933 = vsub.f32 %v4677, %v4869
        %v4934 = vsub.f32 %v4678, %v4870
        %v4935 = vsub.f32 %v4679, %v4871
        %v4936 = vsub.f32 %v4680, %v4872
        %v4937 = vsub.f32 %v4681, %v4873
        %v4938 = vsub.f32 %v4682, %v4874
        %v4939 = vsub.f32 %v4683, %v4875
        %v4940 = vsub.f32 %v4684, %v4876
        %v4941 = vsub.f32 %v4685, %v4877
        %v4942 = vsub.f32 %v4686, %v4878
        %v4943 = vsub.f32 %v4687, %v4879
        %v4944 = vsub.f32 %v4688, %v4880
        %v4945 = vsub.f32 %v4689, %v4881
        %v4946 = vsub.f32 %v4690, %v4882
        %v4947 = vsub.f32 %v4691, %v4883
        %v4948 = vsub.f32 %v4692, %v4884
        %v4949 = vsub.f32 %v4693, %v4885
        %v4950 = vsub.f32 %v4694, %v4886
        %v4951 = vsub.f32 %v4695, %v4887
        %v4952 = vsub.f32 %v4696, %v4888
        %v4953 = vsub.f32 %v4697, %v4889
        %v4954 = vsub.f32 %v4698, %v4890
        %v4955 = vsub.f32 %v4699, %v4891
        %v4956 = vsub.f32 %v4700, %v4892
        %v4957 = vsub.f32 %v4701, %v4893
        %v4958 = vsub.f32 %v4702, %v4894
        %v4959 = vsub.f32 %v4703, %v4895
        %v4960 = vsub.f32 %v4704, %v4896
        %v4961 = vsub.f32 %v4705, %v4897
        %v4962 = vsub.f32 %v4706, %v4898
        %v4963 = vsub.f32 %v4707, %v4899
        %v4964 = vsub.f32 %v4708, %v4900
        %v4965 = vsub.f32 %v4709, %v4901
        %v4966 = vsub.f32 %v4710, %v4902
        %v4967 = vsub.f32 %v4711, %v4903
        %v4968 = vsub.f32 %v4712, %v4904
        %v4969 = vsub.f32 %v4713, %v4905
        %v4970 = vsub.f32 %v4714, %v4906
        %v4971 = vsub.f32 %v4715, %v4907
        %v4972 = vsub.f32 %v4716, %v4908
        %v4973 = vsub.f32 %v4717, %v4909
        %v4974 = vsub.f32 %v4718, %v4910
        %v4975 = vsub.f32 %v4719, %v4911
        %v4976 = vsub.f32 %v4720, %v4912
        %v4977 = vsub.f32 %v4721, %v4913
        %v4978 = vsub.f32 %v4722, %v4914
        %v4979 = vsub.f32 %v4723, %v4915
        %v4980 = vsub.f32 %v4724, %v4916
        %v4981 = vsub.f32 %v4725, %v4917
        %v4982 = vsub.f32 %v4726, %v4918
        %v4983 = vsub.f32 %v4727, %v4919
        %v4984 = vsub.f32 %v4728, %v4920
        %v4985 = vsub.f32 %v4729, %v4921
        %v4986 = vsub.f32 %v4730, %v4922
        %v4987 = vsub.f32 %v4731, %v4923
        %v4988 = vlaneseq
        %v4989 = vand.u32 %v4988, 127
        %vm4990 = vcmp.lt.s32.totalorder %v4989, 8
        %v4991 = vsel %vm4990, %v4924, 0.0
        %v4992 = vsel %vm4990, %v4925, 0.0
        %v4993 = vsel %vm4990, %v4926, 0.0
        %v4994 = vsel %vm4990, %v4927, 0.0
        %v4995 = vsel %vm4990, %v4928, 0.0
        %v4996 = vsel %vm4990, %v4929, 0.0
        %v4997 = vsel %vm4990, %v4930, 0.0
        %v4998 = vsel %vm4990, %v4931, 0.0
        %v4999 = vsel %vm4990, %v4932, 0.0
        %v5000 = vsel %vm4990, %v4933, 0.0
        %v5001 = vsel %vm4990, %v4934, 0.0
        %v5002 = vsel %vm4990, %v4935, 0.0
        %v5003 = vsel %vm4990, %v4936, 0.0
        %v5004 = vsel %vm4990, %v4937, 0.0
        %v5005 = vsel %vm4990, %v4938, 0.0
        %v5006 = vsel %vm4990, %v4939, 0.0
        %v5007 = vsel %vm4990, %v4940, 0.0
        %v5008 = vsel %vm4990, %v4941, 0.0
        %v5009 = vsel %vm4990, %v4942, 0.0
        %v5010 = vsel %vm4990, %v4943, 0.0
        %v5011 = vsel %vm4990, %v4944, 0.0
        %v5012 = vsel %vm4990, %v4945, 0.0
        %v5013 = vsel %vm4990, %v4946, 0.0
        %v5014 = vsel %vm4990, %v4947, 0.0
        %v5015 = vsel %vm4990, %v4948, 0.0
        %v5016 = vsel %vm4990, %v4949, 0.0
        %v5017 = vsel %vm4990, %v4950, 0.0
        %v5018 = vsel %vm4990, %v4951, 0.0
        %v5019 = vsel %vm4990, %v4952, 0.0
        %v5020 = vsel %vm4990, %v4953, 0.0
        %v5021 = vsel %vm4990, %v4954, 0.0
        %v5022 = vsel %vm4990, %v4955, 0.0
        %v5023 = vsel %vm4990, %v4956, 0.0
        %v5024 = vsel %vm4990, %v4957, 0.0
        %v5025 = vsel %vm4990, %v4958, 0.0
        %v5026 = vsel %vm4990, %v4959, 0.0
        %v5027 = vsel %vm4990, %v4960, 0.0
        %v5028 = vsel %vm4990, %v4961, 0.0
        %v5029 = vsel %vm4990, %v4962, 0.0
        %v5030 = vsel %vm4990, %v4963, 0.0
        %v5031 = vsel %vm4990, %v4964, 0.0
        %v5032 = vsel %vm4990, %v4965, 0.0
        %v5033 = vsel %vm4990, %v4966, 0.0
        %v5034 = vsel %vm4990, %v4967, 0.0
        %v5035 = vsel %vm4990, %v4968, 0.0
        %v5036 = vsel %vm4990, %v4969, 0.0
        %v5037 = vsel %vm4990, %v4970, 0.0
        %v5038 = vsel %vm4990, %v4971, 0.0
        %v5039 = vsel %vm4990, %v4972, 0.0
        %v5040 = vsel %vm4990, %v4973, 0.0
        %v5041 = vsel %vm4990, %v4974, 0.0
        %v5042 = vsel %vm4990, %v4975, 0.0
        %v5043 = vsel %vm4990, %v4976, 0.0
        %v5044 = vsel %vm4990, %v4977, 0.0
        %v5045 = vsel %vm4990, %v4978, 0.0
        %v5046 = vsel %vm4990, %v4979, 0.0
        %v5047 = vsel %vm4990, %v4980, 0.0
        %v5048 = vsel %vm4990, %v4981, 0.0
        %v5049 = vsel %vm4990, %v4982, 0.0
        %v5050 = vsel %vm4990, %v4983, 0.0
        %v5051 = vsel %vm4990, %v4984, 0.0
        %v5052 = vsel %vm4990, %v4985, 0.0
        %v5053 = vsel %vm4990, %v4986, 0.0
        %v5054 = vsel %vm4990, %v4987, 0.0
        %5055 = vadd.xlane.f32.xlu0 %v4991
        %v5056 = vpop.xlane.xlu0 %5055
        %5057 = vadd.xlane.f32.xlu0 %v4992
        %v5058 = vpop.xlane.xlu0 %5057
        %5059 = vadd.xlane.f32.xlu0 %v4993
        %v5060 = vpop.xlane.xlu0 %5059
        %5061 = vadd.xlane.f32.xlu0 %v4994
        %v5062 = vpop.xlane.xlu0 %5061
        %5063 = vadd.xlane.f32.xlu0 %v4995
        %v5064 = vpop.xlane.xlu0 %5063
        %5065 = vadd.xlane.f32.xlu0 %v4996
        %v5066 = vpop.xlane.xlu0 %5065
        %5067 = vadd.xlane.f32.xlu0 %v4997
        %v5068 = vpop.xlane.xlu0 %5067
        %5069 = vadd.xlane.f32.xlu0 %v4998
        %v5070 = vpop.xlane.xlu0 %5069
        %5071 = vadd.xlane.f32.xlu0 %v4999
        %v5072 = vpop.xlane.xlu0 %5071
        %5073 = vadd.xlane.f32.xlu0 %v5000
        %v5074 = vpop.xlane.xlu0 %5073
        %5075 = vadd.xlane.f32.xlu0 %v5001
        %v5076 = vpop.xlane.xlu0 %5075
        %5077 = vadd.xlane.f32.xlu0 %v5002
        %v5078 = vpop.xlane.xlu0 %5077
        %5079 = vadd.xlane.f32.xlu0 %v5003
        %v5080 = vpop.xlane.xlu0 %5079
        %5081 = vadd.xlane.f32.xlu0 %v5004
        %v5082 = vpop.xlane.xlu0 %5081
        %5083 = vadd.xlane.f32.xlu0 %v5005
        %v5084 = vpop.xlane.xlu0 %5083
        %5085 = vadd.xlane.f32.xlu0 %v5006
        %v5086 = vpop.xlane.xlu0 %5085
        %5087 = vadd.xlane.f32.xlu0 %v5007
        %v5088 = vpop.xlane.xlu0 %5087
        %5089 = vadd.xlane.f32.xlu0 %v5008
        %v5090 = vpop.xlane.xlu0 %5089
        %5091 = vadd.xlane.f32.xlu0 %v5009
        %v5092 = vpop.xlane.xlu0 %5091
        %5093 = vadd.xlane.f32.xlu0 %v5010
        %v5094 = vpop.xlane.xlu0 %5093
        %5095 = vadd.xlane.f32.xlu0 %v5011
        %v5096 = vpop.xlane.xlu0 %5095
        %5097 = vadd.xlane.f32.xlu0 %v5012
        %v5098 = vpop.xlane.xlu0 %5097
        %5099 = vadd.xlane.f32.xlu0 %v5013
        %v5100 = vpop.xlane.xlu0 %5099
        %5101 = vadd.xlane.f32.xlu0 %v5014
        %v5102 = vpop.xlane.xlu0 %5101
        %5103 = vadd.xlane.f32.xlu0 %v5015
        %v5104 = vpop.xlane.xlu0 %5103
        %5105 = vadd.xlane.f32.xlu0 %v5016
        %v5106 = vpop.xlane.xlu0 %5105
        %5107 = vadd.xlane.f32.xlu0 %v5017
        %v5108 = vpop.xlane.xlu0 %5107
        %5109 = vadd.xlane.f32.xlu0 %v5018
        %v5110 = vpop.xlane.xlu0 %5109
        %5111 = vadd.xlane.f32.xlu0 %v5019
        %v5112 = vpop.xlane.xlu0 %5111
        %5113 = vadd.xlane.f32.xlu0 %v5020
        %v5114 = vpop.xlane.xlu0 %5113
        %5115 = vadd.xlane.f32.xlu0 %v5021
        %v5116 = vpop.xlane.xlu0 %5115
        %5117 = vadd.xlane.f32.xlu0 %v5022
        %v5118 = vpop.xlane.xlu0 %5117
        %5119 = vadd.xlane.f32.xlu0 %v5023
        %v5120 = vpop.xlane.xlu0 %5119
        %5121 = vadd.xlane.f32.xlu0 %v5024
        %v5122 = vpop.xlane.xlu0 %5121
        %5123 = vadd.xlane.f32.xlu0 %v5025
        %v5124 = vpop.xlane.xlu0 %5123
        %5125 = vadd.xlane.f32.xlu0 %v5026
        %v5126 = vpop.xlane.xlu0 %5125
        %5127 = vadd.xlane.f32.xlu0 %v5027
        %v5128 = vpop.xlane.xlu0 %5127
        %5129 = vadd.xlane.f32.xlu0 %v5028
        %v5130 = vpop.xlane.xlu0 %5129
        %5131 = vadd.xlane.f32.xlu0 %v5029
        %v5132 = vpop.xlane.xlu0 %5131
        %5133 = vadd.xlane.f32.xlu0 %v5030
        %v5134 = vpop.xlane.xlu0 %5133
        %5135 = vadd.xlane.f32.xlu0 %v5031
        %v5136 = vpop.xlane.xlu0 %5135
        %5137 = vadd.xlane.f32.xlu0 %v5032
        %v5138 = vpop.xlane.xlu0 %5137
        %5139 = vadd.xlane.f32.xlu0 %v5033
        %v5140 = vpop.xlane.xlu0 %5139
        %5141 = vadd.xlane.f32.xlu0 %v5034
        %v5142 = vpop.xlane.xlu0 %5141
        %5143 = vadd.xlane.f32.xlu0 %v5035
        %v5144 = vpop.xlane.xlu0 %5143
        %5145 = vadd.xlane.f32.xlu0 %v5036
        %v5146 = vpop.xlane.xlu0 %5145
        %5147 = vadd.xlane.f32.xlu0 %v5037
        %v5148 = vpop.xlane.xlu0 %5147
        %5149 = vadd.xlane.f32.xlu0 %v5038
        %v5150 = vpop.xlane.xlu0 %5149
        %5151 = vadd.xlane.f32.xlu0 %v5039
        %v5152 = vpop.xlane.xlu0 %5151
        %5153 = vadd.xlane.f32.xlu0 %v5040
        %v5154 = vpop.xlane.xlu0 %5153
        %5155 = vadd.xlane.f32.xlu0 %v5041
        %v5156 = vpop.xlane.xlu0 %5155
        %5157 = vadd.xlane.f32.xlu0 %v5042
        %v5158 = vpop.xlane.xlu0 %5157
        %5159 = vadd.xlane.f32.xlu0 %v5043
        %v5160 = vpop.xlane.xlu0 %5159
        %5161 = vadd.xlane.f32.xlu0 %v5044
        %v5162 = vpop.xlane.xlu0 %5161
        %5163 = vadd.xlane.f32.xlu0 %v5045
        %v5164 = vpop.xlane.xlu0 %5163
        %5165 = vadd.xlane.f32.xlu0 %v5046
        %v5166 = vpop.xlane.xlu0 %5165
        %5167 = vadd.xlane.f32.xlu0 %v5047
        %v5168 = vpop.xlane.xlu0 %5167
        %5169 = vadd.xlane.f32.xlu0 %v5048
        %v5170 = vpop.xlane.xlu0 %5169
        %5171 = vadd.xlane.f32.xlu0 %v5049
        %v5172 = vpop.xlane.xlu0 %5171
        %5173 = vadd.xlane.f32.xlu0 %v5050
        %v5174 = vpop.xlane.xlu0 %5173
        %5175 = vadd.xlane.f32.xlu0 %v5051
        %v5176 = vpop.xlane.xlu0 %5175
        %5177 = vadd.xlane.f32.xlu0 %v5052
        %v5178 = vpop.xlane.xlu0 %5177
        %5179 = vadd.xlane.f32.xlu0 %v5053
        %v5180 = vpop.xlane.xlu0 %5179
        %5181 = vadd.xlane.f32.xlu0 %v5054
        %v5182 = vpop.xlane.xlu0 %5181
        %v5183 = vtanh.pop %v3388
        %v5184 = vtanh.pop %v3389
        %v5185 = vtanh.pop %v3390
        %v5186 = vtanh.pop %v3391
        %v5187 = vtanh.pop %v3392
        %v5188 = vtanh.pop %v3393
        %v5189 = vtanh.pop %v3394
        %v5190 = vtanh.pop %v3395
        %v5191 = vtanh.pop %v3396
        %v5192 = vtanh.pop %v3397
        %v5193 = vtanh.pop %v3398
        %v5194 = vtanh.pop %v3399
        %v5195 = vtanh.pop %v3400
        %v5196 = vtanh.pop %v3401
        %v5197 = vtanh.pop %v3402
        %v5198 = vtanh.pop %v3403
        %v5199 = vtanh.pop %v3404
        %v5200 = vtanh.pop %v3405
        %v5201 = vtanh.pop %v3406
        %v5202 = vtanh.pop %v3407
        %v5203 = vtanh.pop %v3408
        %v5204 = vtanh.pop %v3409
        %v5205 = vtanh.pop %v3410
        %v5206 = vtanh.pop %v3411
        %v5207 = vtanh.pop %v3412
        %v5208 = vtanh.pop %v3413
        %v5209 = vtanh.pop %v3414
        %v5210 = vtanh.pop %v3415
        %v5211 = vtanh.pop %v3416
        %v5212 = vtanh.pop %v3417
        %v5213 = vtanh.pop %v3418
        %v5214 = vtanh.pop %v3419
        %v5215 = vtanh.pop %v3420
        %v5216 = vtanh.pop %v3421
        %v5217 = vtanh.pop %v3422
        %v5218 = vtanh.pop %v3423
        %v5219 = vtanh.pop %v3424
        %v5220 = vtanh.pop %v3425
        %v5221 = vtanh.pop %v3426
        %v5222 = vtanh.pop %v3427
        %v5223 = vtanh.pop %v3428
        %v5224 = vtanh.pop %v3429
        %v5225 = vtanh.pop %v3430
        %v5226 = vtanh.pop %v3431
        %v5227 = vtanh.pop %v3432
        %v5228 = vtanh.pop %v3433
        %v5229 = vtanh.pop %v3434
        %v5230 = vtanh.pop %v3435
        %v5231 = vtanh.pop %v3436
        %v5232 = vtanh.pop %v3437
        %v5233 = vtanh.pop %v3438
        %v5234 = vtanh.pop %v3439
        %v5235 = vtanh.pop %v3440
        %v5236 = vtanh.pop %v3441
        %v5237 = vtanh.pop %v3442
        %v5238 = vtanh.pop %v3443
        %v5239 = vtanh.pop %v3444
        %v5240 = vtanh.pop %v3445
        %v5241 = vtanh.pop %v3446
        %v5242 = vtanh.pop %v3447
        %v5243 = vtanh.pop %v3448
        %v5244 = vtanh.pop %v3449
        %v5245 = vtanh.pop %v3450
        %v5246 = vtanh.pop %v3451
        %v5247 = vmul.f32 %v5183, 2.0
        %v5248 = vmul.f32 %v5184, 2.0
        %v5249 = vmul.f32 %v5185, 2.0
        %v5250 = vmul.f32 %v5186, 2.0
        %v5251 = vmul.f32 %v5187, 2.0
        %v5252 = vmul.f32 %v5188, 2.0
        %v5253 = vmul.f32 %v5189, 2.0
        %v5254 = vmul.f32 %v5190, 2.0
        %v5255 = vmul.f32 %v5191, 2.0
        %v5256 = vmul.f32 %v5192, 2.0
        %v5257 = vmul.f32 %v5193, 2.0
        %v5258 = vmul.f32 %v5194, 2.0
        %v5259 = vmul.f32 %v5195, 2.0
        %v5260 = vmul.f32 %v5196, 2.0
        %v5261 = vmul.f32 %v5197, 2.0
        %v5262 = vmul.f32 %v5198, 2.0
        %v5263 = vmul.f32 %v5199, 2.0
        %v5264 = vmul.f32 %v5200, 2.0
        %v5265 = vmul.f32 %v5201, 2.0
        %v5266 = vmul.f32 %v5202, 2.0
        %v5267 = vmul.f32 %v5203, 2.0
        %v5268 = vmul.f32 %v5204, 2.0
        %v5269 = vmul.f32 %v5205, 2.0
        %v5270 = vmul.f32 %v5206, 2.0
        %v5271 = vmul.f32 %v5207, 2.0
        %v5272 = vmul.f32 %v5208, 2.0
        %v5273 = vmul.f32 %v5209, 2.0
        %v5274 = vmul.f32 %v5210, 2.0
        %v5275 = vmul.f32 %v5211, 2.0
        %v5276 = vmul.f32 %v5212, 2.0
        %v5277 = vmul.f32 %v5213, 2.0
        %v5278 = vmul.f32 %v5214, 2.0
        %v5279 = vmul.f32 %v5215, 2.0
        %v5280 = vmul.f32 %v5216, 2.0
        %v5281 = vmul.f32 %v5217, 2.0
        %v5282 = vmul.f32 %v5218, 2.0
        %v5283 = vmul.f32 %v5219, 2.0
        %v5284 = vmul.f32 %v5220, 2.0
        %v5285 = vmul.f32 %v5221, 2.0
        %v5286 = vmul.f32 %v5222, 2.0
        %v5287 = vmul.f32 %v5223, 2.0
        %v5288 = vmul.f32 %v5224, 2.0
        %v5289 = vmul.f32 %v5225, 2.0
        %v5290 = vmul.f32 %v5226, 2.0
        %v5291 = vmul.f32 %v5227, 2.0
        %v5292 = vmul.f32 %v5228, 2.0
        %v5293 = vmul.f32 %v5229, 2.0
        %v5294 = vmul.f32 %v5230, 2.0
        %v5295 = vmul.f32 %v5231, 2.0
        %v5296 = vmul.f32 %v5232, 2.0
        %v5297 = vmul.f32 %v5233, 2.0
        %v5298 = vmul.f32 %v5234, 2.0
        %v5299 = vmul.f32 %v5235, 2.0
        %v5300 = vmul.f32 %v5236, 2.0
        %v5301 = vmul.f32 %v5237, 2.0
        %v5302 = vmul.f32 %v5238, 2.0
        %v5303 = vmul.f32 %v5239, 2.0
        %v5304 = vmul.f32 %v5240, 2.0
        %v5305 = vmul.f32 %v5241, 2.0
        %v5306 = vmul.f32 %v5242, 2.0
        %v5307 = vmul.f32 %v5243, 2.0
        %v5308 = vmul.f32 %v5244, 2.0
        %v5309 = vmul.f32 %v5245, 2.0
        %v5310 = vmul.f32 %v5246, 2.0
        %vm5311 = vcmp.eq.s32.totalorder %v4989, 8
        %v5312 = vsel %vm5311, %v5056, %v5247
        %v5313 = vsel %vm5311, %v5058, %v5248
        %v5314 = vsel %vm5311, %v5060, %v5249
        %v5315 = vsel %vm5311, %v5062, %v5250
        %v5316 = vsel %vm5311, %v5064, %v5251
        %v5317 = vsel %vm5311, %v5066, %v5252
        %v5318 = vsel %vm5311, %v5068, %v5253
        %v5319 = vsel %vm5311, %v5070, %v5254
        %v5320 = vsel %vm5311, %v5072, %v5255
        %v5321 = vsel %vm5311, %v5074, %v5256
        %v5322 = vsel %vm5311, %v5076, %v5257
        %v5323 = vsel %vm5311, %v5078, %v5258
        %v5324 = vsel %vm5311, %v5080, %v5259
        %v5325 = vsel %vm5311, %v5082, %v5260
        %v5326 = vsel %vm5311, %v5084, %v5261
        %v5327 = vsel %vm5311, %v5086, %v5262
        %v5328 = vsel %vm5311, %v5088, %v5263
        %v5329 = vsel %vm5311, %v5090, %v5264
        %v5330 = vsel %vm5311, %v5092, %v5265
        %v5331 = vsel %vm5311, %v5094, %v5266
        %v5332 = vsel %vm5311, %v5096, %v5267
        %v5333 = vsel %vm5311, %v5098, %v5268
        %v5334 = vsel %vm5311, %v5100, %v5269
        %v5335 = vsel %vm5311, %v5102, %v5270
        %v5336 = vsel %vm5311, %v5104, %v5271
        %v5337 = vsel %vm5311, %v5106, %v5272
        %v5338 = vsel %vm5311, %v5108, %v5273
        %v5339 = vsel %vm5311, %v5110, %v5274
        %v5340 = vsel %vm5311, %v5112, %v5275
        %v5341 = vsel %vm5311, %v5114, %v5276
        %v5342 = vsel %vm5311, %v5116, %v5277
        %v5343 = vsel %vm5311, %v5118, %v5278
        %v5344 = vsel %vm5311, %v5120, %v5279
        %v5345 = vsel %vm5311, %v5122, %v5280
        %v5346 = vsel %vm5311, %v5124, %v5281
        %v5347 = vsel %vm5311, %v5126, %v5282
        %v5348 = vsel %vm5311, %v5128, %v5283
        %v5349 = vsel %vm5311, %v5130, %v5284
        %v5350 = vsel %vm5311, %v5132, %v5285
        %v5351 = vsel %vm5311, %v5134, %v5286
        %v5352 = vsel %vm5311, %v5136, %v5287
        %v5353 = vsel %vm5311, %v5138, %v5288
        %v5354 = vsel %vm5311, %v5140, %v5289
        %v5355 = vsel %vm5311, %v5142, %v5290
        %v5356 = vsel %vm5311, %v5144, %v5291
        %v5357 = vsel %vm5311, %v5146, %v5292
        %v5358 = vsel %vm5311, %v5148, %v5293
        %v5359 = vsel %vm5311, %v5150, %v5294
        %v5360 = vsel %vm5311, %v5152, %v5295
        %v5361 = vsel %vm5311, %v5154, %v5296
        %v5362 = vsel %vm5311, %v5156, %v5297
        %v5363 = vsel %vm5311, %v5158, %v5298
        %v5364 = vsel %vm5311, %v5160, %v5299
        %v5365 = vsel %vm5311, %v5162, %v5300
        %v5366 = vsel %vm5311, %v5164, %v5301
        %v5367 = vsel %vm5311, %v5166, %v5302
        %v5368 = vsel %vm5311, %v5168, %v5303
        %v5369 = vsel %vm5311, %v5170, %v5304
        %v5370 = vsel %vm5311, %v5172, %v5305
        %v5371 = vsel %vm5311, %v5174, %v5306
        %v5372 = vsel %vm5311, %v5176, %v5307
        %v5373 = vsel %vm5311, %v5178, %v5308
        %v5374 = vsel %vm5311, %v5180, %v5309
        %v5375 = vsel %vm5311, %v5182, %v5310
        %5376 = vst [vmem:[%s342] sm:$0xff] %v5312
        %5377 = vst [vmem:[%s342 + $0x8] sm:$0xff] %v5313
        %5378 = vst [vmem:[%s342 + $0x10] sm:$0xff] %v5314
        %5379 = vst [vmem:[%s342 + $0x18] sm:$0xff] %v5315
        %5380 = vst [vmem:[%s342 + $0x20] sm:$0xff] %v5316
        %5381 = vst [vmem:[%s342 + $0x28] sm:$0xff] %v5317
        %5382 = vst [vmem:[%s342 + $0x30] sm:$0xff] %v5318
        %5383 = vst [vmem:[%s342 + $0x38] sm:$0xff] %v5319
        %5384 = vst [vmem:[%s342 + $0x40] sm:$0xff] %v5320
        %5385 = vst [vmem:[%s342 + $0x48] sm:$0xff] %v5321
        %5386 = vst [vmem:[%s342 + $0x50] sm:$0xff] %v5322
        %5387 = vst [vmem:[%s342 + $0x58] sm:$0xff] %v5323
        %5388 = vst [vmem:[%s342 + $0x60] sm:$0xff] %v5324
        %5389 = vst [vmem:[%s342 + $0x68] sm:$0xff] %v5325
        %5390 = vst [vmem:[%s342 + $0x70] sm:$0xff] %v5326
        %5391 = vst [vmem:[%s342 + $0x78] sm:$0xff] %v5327
        %5392 = vst [vmem:[%s342 + $0x80] sm:$0xff] %v5328
        %5393 = vst [vmem:[%s342 + $0x88] sm:$0xff] %v5329
        %5394 = vst [vmem:[%s342 + $0x90] sm:$0xff] %v5330
        %5395 = vst [vmem:[%s342 + $0x98] sm:$0xff] %v5331
        %5396 = vst [vmem:[%s342 + $0xa0] sm:$0xff] %v5332
        %5397 = vst [vmem:[%s342 + $0xa8] sm:$0xff] %v5333
        %5398 = vst [vmem:[%s342 + $0xb0] sm:$0xff] %v5334
        %5399 = vst [vmem:[%s342 + $0xb8] sm:$0xff] %v5335
        %5400 = vst [vmem:[%s342 + $0xc0] sm:$0xff] %v5336
        %5401 = vst [vmem:[%s342 + $0xc8] sm:$0xff] %v5337
        %5402 = vst [vmem:[%s342 + $0xd0] sm:$0xff] %v5338
        %5403 = vst [vmem:[%s342 + $0xd8] sm:$0xff] %v5339
        %5404 = vst [vmem:[%s342 + $0xe0] sm:$0xff] %v5340
        %5405 = vst [vmem:[%s342 + $0xe8] sm:$0xff] %v5341
        %5406 = vst [vmem:[%s342 + $0xf0] sm:$0xff] %v5342
        %5407 = vst [vmem:[%s342 + $0xf8] sm:$0xff] %v5343
        %5408 = vst [vmem:[%s342 + $0x100] sm:$0xff] %v5344
        %5409 = vst [vmem:[%s342 + $0x108] sm:$0xff] %v5345
        %5410 = vst [vmem:[%s342 + $0x110] sm:$0xff] %v5346
        %5411 = vst [vmem:[%s342 + $0x118] sm:$0xff] %v5347
        %5412 = vst [vmem:[%s342 + $0x120] sm:$0xff] %v5348
        %5413 = vst [vmem:[%s342 + $0x128] sm:$0xff] %v5349
        %5414 = vst [vmem:[%s342 + $0x130] sm:$0xff] %v5350
        %5415 = vst [vmem:[%s342 + $0x138] sm:$0xff] %v5351
        %5416 = vst [vmem:[%s342 + $0x140] sm:$0xff] %v5352
        %5417 = vst [vmem:[%s342 + $0x148] sm:$0xff] %v5353
        %5418 = vst [vmem:[%s342 + $0x150] sm:$0xff] %v5354
        %5419 = vst [vmem:[%s342 + $0x158] sm:$0xff] %v5355
        %5420 = vst [vmem:[%s342 + $0x160] sm:$0xff] %v5356
        %5421 = vst [vmem:[%s342 + $0x168] sm:$0xff] %v5357
        %5422 = vst [vmem:[%s342 + $0x170] sm:$0xff] %v5358
        %5423 = vst [vmem:[%s342 + $0x178] sm:$0xff] %v5359
        %5424 = vst [vmem:[%s342 + $0x180] sm:$0xff] %v5360
        %5425 = vst [vmem:[%s342 + $0x188] sm:$0xff] %v5361
        %5426 = vst [vmem:[%s342 + $0x190] sm:$0xff] %v5362
        %5427 = vst [vmem:[%s342 + $0x198] sm:$0xff] %v5363
        %5428 = vst [vmem:[%s342 + $0x1a0] sm:$0xff] %v5364
        %5429 = vst [vmem:[%s342 + $0x1a8] sm:$0xff] %v5365
        %5430 = vst [vmem:[%s342 + $0x1b0] sm:$0xff] %v5366
        %5431 = vst [vmem:[%s342 + $0x1b8] sm:$0xff] %v5367
        %5432 = vst [vmem:[%s342 + $0x1c0] sm:$0xff] %v5368
        %5433 = vst [vmem:[%s342 + $0x1c8] sm:$0xff] %v5369
        %5434 = vst [vmem:[%s342 + $0x1d0] sm:$0xff] %v5370
        %5435 = vst [vmem:[%s342 + $0x1d8] sm:$0xff] %v5371
        %5436 = vst [vmem:[%s342 + $0x1e0] sm:$0xff] %v5372
        %5437 = vst [vmem:[%s342 + $0x1e8] sm:$0xff] %v5373
        %5438 = vst [vmem:[%s342 + $0x1f0] sm:$0xff] %v5374
        %5439 = vst [vmem:[%s342 + $0x1f8] sm:$0xff] %v5375
        %s5440 = sand.u32 %s230, 1
        %s5441 = scalar_lea.sflag [#allocation3], %s5440
        %s5442 = sand.u32 %s230, 1
        %s5443 = smul.addr %s5442, 512
        %s5444 = scalar_lea.vmem [#allocation2], %s5443
        // Predicated region
        $region57: #{tpu_custom_call.1} parent=55 // pred_check
          %p5445 = pneg %p240
        $region58: #{tpu_custom_call.1} parent=55 // pred_check_branch
          %5447 = sbr.rel (%p5445) target = $region60
        $region59: #{tpu_custom_call.1} parent=55 // pred_region
          %s5448 = smul.u32 64, %s23
          %s5450 = ssub.s32 8192, 8192
          %5451 = vsyncadd %s5441, %s5450
          %s5452 = smul.addr %s5448, 128
          %s5453 = scalar_lea.hbm %s9, %s5452
          %s5454 = sshll.u32 %s5444, 4
          %s5455 = int_to_ptr.vmem [resolvable:$true] %s5454
          %5460 = dma.vmem_to_hbm [thread:$0]  %s5455, 8192, %s5453, %s5441, 128, 128, 8
        $region60: #{tpu_custom_call.1} parent=55 // pred_fallthru
          _
      $region56: #{tpu_custom_call.1} parent=5 // pred_fallthru
        _
      %p5461 = scmp.le.s32.totalorder 2, %s18
      // Predicated region
      $region61: #{tpu_custom_call.1} parent=5 // pred_check
        %p5462 = pneg %p5461
      $region62: #{tpu_custom_call.1} parent=5 // pred_check_branch
        %5464 = sbr.rel (%p5462) target = $region64
      $region63: #{tpu_custom_call.1} parent=5 // pred_region
        %s5465 = ssub.s32 %s18, 2
        // Predicated region
        $region65: #{tpu_custom_call.1} parent=63 // pred_check
          %p5466 = pneg %p246
        $region66: #{tpu_custom_call.1} parent=63 // pred_check_branch
          %5468 = sbr.rel (%p5466) target = $region68
        $region67: #{tpu_custom_call.1} parent=63 // pred_region
          %s5469 = sand.u32 %s231, 1
          %s5470 = scalar_lea.sflag [#allocation3], %s5469
          %s5471 = sand.u32 %s231, 1
          %s5472 = smul.addr %s5471, 512
          %s5473 = scalar_lea.vmem [#allocation2], %s5472
          %5474 = dma.done %s5470, 8192
        $region68: #{tpu_custom_call.1} parent=63 // pred_fallthru
          _
      $region64: #{tpu_custom_call.1} parent=5 // pred_fallthru
        _
    $region6: #{tpu_custom_call.1} parent=1 // loop_footer
      %s22 = sadd.s32 1, %s18
    $region7: #{tpu_custom_call.1} parent=1 // loop_footer_branch
      %17 = sbr.rel target = $region3
    $region8: #{tpu_custom_call.1} parent=1 // loop_exit
      _
    %5475 = vsyncpa [#allocation3], 1
    %s5476 = scalar_lea.sflag [#allocation3], 1
    %5477 = vsyncpa %s5476, 1

</llo_original>
